<compile_context>
chip_gen: v7x
topology: tpu7x:2x2x1
jax: 0.10.0
libtpu: 0.0.40
codegen_flags: <defaults>
</compile_context>

<pallas_src>
import math
import functools

import jax
import jax.numpy as jnp
from jax.experimental import pallas as pl
from jax.experimental.pallas import tpu as pltpu


MXU_DTYPE = jnp.bfloat16   # matmul operand dtype (accumulation stays f32)
LN_EPS = 1e-5


# ---------------------------------------------------------------------------
# In-kernel helpers
# ---------------------------------------------------------------------------

def _dot(a, b):
    """a @ b on the MXU: bf16 operands, f32 accumulation."""
    return jax.lax.dot_general(
        a.astype(MXU_DTYPE), b.astype(MXU_DTYPE),
        (((1,), (0,)), ((), ())), preferred_element_type=jnp.float32)


def _dot_t(a, b):
    """a @ b.T (contract last dims of both) without an explicit transpose op."""
    return jax.lax.dot_general(
        a.astype(MXU_DTYPE), b.astype(MXU_DTYPE),
        (((1,), (1,)), ((), ())), preferred_element_type=jnp.float32)


def _layernorm(y, g, b, eps):
    mu = jnp.mean(y, axis=-1, keepdims=True)
    var = jnp.mean(jnp.square(y - mu), axis=-1, keepdims=True)
    return (y - mu) * jax.lax.rsqrt(var + eps) * g + b


def _softmax_rows(s):
    """Row softmax in f32; EUP reciprocal instead of a VALU divide."""
    s = s - jnp.max(s, axis=-1, keepdims=True)
    p = jnp.exp(s)
    return p * pl.reciprocal(jnp.sum(p, axis=-1, keepdims=True), approx=True)


# ---------------------------------------------------------------------------
# Fused sub-layer kernels (one grid step == one batch element, all heads)
# ---------------------------------------------------------------------------

def _self_attn_block_kernel(x_ref, mask_ref, wqkv_ref, bqkv_ref, wo_ref, bo_ref,
                            g_ref, beta_ref, o_ref, *, num_heads, scale, eps):
    x = x_ref[0]                                       # (S, D) f32
    S, D = x.shape
    dh = D // num_heads

    # fused Q|K|V projection: one (D, 3D) matmul, bias added once.
    qkv = _dot(x, wqkv_ref[...]) + bqkv_ref[...]       # (S, 3D) f32
    mask = mask_ref[0]                                 # (S, S) additive f32
    wo = wo_ref[...]                                   # loaded once, reused per head

    proj = jnp.zeros((S, D), jnp.float32)
    for h in range(num_heads):                         # static unroll over heads
        q = qkv[:, h * dh:(h + 1) * dh]
        k = qkv[:, D + h * dh:D + (h + 1) * dh]
        v = qkv[:, 2 * D + h * dh:2 * D + (h + 1) * dh]
        p = _softmax_rows(_dot_t(q, k) * scale + mask)           # (S, S) f32
        # fold this head's slice of the output projection -> avoids a concat
        proj = proj + _dot(_dot(p, v), wo[h * dh:(h + 1) * dh, :])

    y = x + proj + bo_ref[...]                         # residual + out-proj bias
    o_ref[0] = _layernorm(y, g_ref[...], beta_ref[...], eps).astype(o_ref.dtype)


def _cross_attn_block_kernel(x_ref, kv_ref, mask_ref, wq_ref, bq_ref,
                             wkv_ref, bkv_ref, wo_ref, bo_ref,
                             g_ref, beta_ref, o_ref, *, num_heads, scale, eps):
    x = x_ref[0]                                       # (Sq, D) f32
    xkv = kv_ref[0]                                    # (Sk, D) f32
    Sq, D = x.shape
    dh = D // num_heads

    q_all = _dot(x, wq_ref[...]) + bq_ref[...]         # (Sq, D)
    kv_all = _dot(xkv, wkv_ref[...]) + bkv_ref[...]    # (Sk, 2D) fused K|V
    mask = mask_ref[0]                                 # (Sq, Sk) additive f32
    wo = wo_ref[...]

    proj = jnp.zeros((Sq, D), jnp.float32)
    for h in range(num_heads):
        q = q_all[:, h * dh:(h + 1) * dh]
        k = kv_all[:, h * dh:(h + 1) * dh]
        v = kv_all[:, D + h * dh:D + (h + 1) * dh]
        p = _softmax_rows(_dot_t(q, k) * scale + mask)
        proj = proj + _dot(_dot(p, v), wo[h * dh:(h + 1) * dh, :])

    y = x + proj + bo_ref[...]
    o_ref[0] = _layernorm(y, g_ref[...], beta_ref[...], eps).astype(o_ref.dtype)


def _ffn_block_kernel(x_ref, w1_ref, b1_ref, w2_ref, b2_ref,
                      g_ref, beta_ref, o_ref, *, eps):
    x = x_ref[0]                                       # (S, D) f32
    h = jnp.maximum(_dot(x, w1_ref[...]) + b1_ref[...], 0.0)     # (S, F) fused ReLU
    y = x + _dot(h, w2_ref[...]) + b2_ref[...]
    o_ref[0] = _layernorm(y, g_ref[...], beta_ref[...], eps).astype(o_ref.dtype)


# ---------------------------------------------------------------------------
# Sub-layer wrappers (one pallas_call per sub-layer, grid over batch)
# ---------------------------------------------------------------------------

def _row(v):
    return v.reshape(1, -1)


def self_attn_sublayer(x, add_mask, p, num_heads):
    """x: (B, S, D); add_mask: (B, S, S) additive f32 (shared across heads)."""
    B, S, D = x.shape
    scale = 1.0 / math.sqrt(D // num_heads)
    kernel = functools.partial(_self_attn_block_kernel, num_heads=num_heads,
                               scale=scale, eps=LN_EPS)
    return pl.pallas_call(
        kernel,
        out_shape=jax.ShapeDtypeStruct((B, S, D), x.dtype),
        grid=(B,),
        in_specs=[
            pl.BlockSpec((1, S, D), lambda b: (b, 0, 0)),
            pl.BlockSpec((1, S, S), lambda b: (b, 0, 0)),
            pl.BlockSpec((D, 3 * D), lambda b: (0, 0)),   # resident across grid
            pl.BlockSpec((1, 3 * D), lambda b: (0, 0)),
            pl.BlockSpec((D, D), lambda b: (0, 0)),
            pl.BlockSpec((1, D), lambda b: (0, 0)),
            pl.BlockSpec((1, D), lambda b: (0, 0)),
            pl.BlockSpec((1, D), lambda b: (0, 0)),
        ],
        out_specs=pl.BlockSpec((1, S, D), lambda b: (b, 0, 0)),
        compiler_params=pltpu.CompilerParams(dimension_semantics=("parallel",)),
    )(x, add_mask, p["wqkv"], _row(p["bqkv"]), p["wo"], _row(p["bo"]),
      _row(p["ln_g"]), _row(p["ln_b"]))


def cross_attn_sublayer(x, kv, add_mask, p, num_heads):
    """x: (B, Sq, D); kv: (B, Sk, D); add_mask: (B, Sq, Sk) additive f32."""
    B, Sq, D = x.shape
    Sk = kv.shape[1]
    scale = 1.0 / math.sqrt(D // num_heads)
    kernel = functools.partial(_cross_attn_block_kernel, num_heads=num_heads,
                               scale=scale, eps=LN_EPS)
    return pl.pallas_call(
        kernel,
        out_shape=jax.ShapeDtypeStruct((B, Sq, D), x.dtype),
        grid=(B,),
        in_specs=[
            pl.BlockSpec((1, Sq, D), lambda b: (b, 0, 0)),
            pl.BlockSpec((1, Sk, D), lambda b: (b, 0, 0)),
            pl.BlockSpec((1, Sq, Sk), lambda b: (b, 0, 0)),
            pl.BlockSpec((D, D), lambda b: (0, 0)),
            pl.BlockSpec((1, D), lambda b: (0, 0)),
            pl.BlockSpec((D, 2 * D), lambda b: (0, 0)),
            pl.BlockSpec((1, 2 * D), lambda b: (0, 0)),
            pl.BlockSpec((D, D), lambda b: (0, 0)),
            pl.BlockSpec((1, D), lambda b: (0, 0)),
            pl.BlockSpec((1, D), lambda b: (0, 0)),
            pl.BlockSpec((1, D), lambda b: (0, 0)),
        ],
        out_specs=pl.BlockSpec((1, Sq, D), lambda b: (b, 0, 0)),
        compiler_params=pltpu.CompilerParams(dimension_semantics=("parallel",)),
    )(x, kv, add_mask, p["wq"], _row(p["bq"]), p["wkv"], _row(p["bkv"]),
      p["wo"], _row(p["bo"]), _row(p["ln_g"]), _row(p["ln_b"]))


def ffn_sublayer(x, p):
    B, S, D = x.shape
    F = p["w1"].shape[1]
    kernel = functools.partial(_ffn_block_kernel, eps=LN_EPS)
    return pl.pallas_call(
        kernel,
        out_shape=jax.ShapeDtypeStruct((B, S, D), x.dtype),
        grid=(B,),
        in_specs=[
            pl.BlockSpec((1, S, D), lambda b: (b, 0, 0)),
            pl.BlockSpec((D, F), lambda b: (0, 0)),
            pl.BlockSpec((1, F), lambda b: (0, 0)),
            pl.BlockSpec((F, D), lambda b: (0, 0)),
            pl.BlockSpec((1, D), lambda b: (0, 0)),
            pl.BlockSpec((1, D), lambda b: (0, 0)),
            pl.BlockSpec((1, D), lambda b: (0, 0)),
        ],
        out_specs=pl.BlockSpec((1, S, D), lambda b: (b, 0, 0)),
        compiler_params=pltpu.CompilerParams(dimension_semantics=("parallel",)),
    )(x, p["w1"], _row(p["b1"]), p["w2"], _row(p["b2"]),
      _row(p["ln_g"]), _row(p["ln_b"]))


# ---------------------------------------------------------------------------
# Tiled output projection (vocab logits): M/N/K-tiled matmul + bias
# ---------------------------------------------------------------------------

def _matmul_bias_kernel(x_ref, w_ref, b_ref, o_ref, acc_ref):
    @pl.when(pl.program_id(2) == 0)
    def _():
        acc_ref[...] = jnp.zeros_like(acc_ref)
    acc_ref[...] += _dot(x_ref[...], w_ref[...])
    @pl.when(pl.program_id(2) == pl.num_programs(2) - 1)
    def _():
        o_ref[...] = (acc_ref[...] + b_ref[...]).astype(o_ref.dtype)


def _pick_tile(dim, candidates):
    """Largest candidate tile that evenly divides dim; otherwise the full dim."""
    for t in candidates:
        if t <= dim and dim % t == 0:
            return t
    return dim


def pallas_linear(x, w, b):
    """x: (M, K) @ w: (K, N) + b: (N,) -> (M, N), tiled for large M/N/K."""
    M, K = x.shape
    N = w.shape[1]
    tm = _pick_tile(M, (256, 128, 64, 32, 16, 8))   # sublane-aligned row tiles
    tn = _pick_tile(N, (512, 256, 128))             # lane-dense output tiles
    tk = _pick_tile(K, (512, 256, 128))
    grid = (M // tm, N // tn, K // tk)
    return pl.pallas_call(
        _matmul_bias_kernel,
        out_shape=jax.ShapeDtypeStruct((M, N), x.dtype),
        grid=grid,
        in_specs=[
            pl.BlockSpec((tm, tk), lambda i, j, k: (i, k)),
            pl.BlockSpec((tk, tn), lambda i, j, k: (k, j)),
            pl.BlockSpec((1, tn), lambda i, j, k: (0, j)),
        ],
        out_specs=pl.BlockSpec((tm, tn), lambda i, j, k: (i, j)),
        scratch_shapes=[pltpu.VMEM((tm, tn), jnp.float32)],
        compiler_params=pltpu.CompilerParams(
            dimension_semantics=("parallel", "parallel", "arbitrary")),
    )(x, w, _row(b))


# ---------------------------------------------------------------------------
# Model glue (plain JAX: embeddings, positional encoding, mask construction)
# ---------------------------------------------------------------------------

def create_positional_encoding(max_seq_length, context_dim):
    position = jnp.arange(max_seq_length, dtype=jnp.float32)[:, None]
    div_term = jnp.exp(jnp.arange(0, context_dim, 2, dtype=jnp.float32)
                       * (-math.log(10000.0) / context_dim))
    pe = jnp.zeros((max_seq_length, context_dim), jnp.float32)
    pe = pe.at[:, 0::2].set(jnp.sin(position * div_term))
    pe = pe.at[:, 1::2].set(jnp.cos(position * div_term))
    return pe


def transformer_forward(params, source, target, *, num_heads, num_layers, pad_id=0):
    B, S_src = source.shape
    _, S_tgt = target.shape
    neg = jnp.float32(-1e9)

    # Additive masks (built once, shared across heads and layers).
    src_keep = (source != pad_id)                                        # (B, S_src)
    tgt_keep = (target != pad_id)                                        # (B, S_tgt)
    enc_mask = jnp.broadcast_to(jnp.where(src_keep[:, None, :], 0.0, neg),
                                (B, S_src, S_src)).astype(jnp.float32)
    cross_mask = jnp.broadcast_to(jnp.where(src_keep[:, None, :], 0.0, neg),
                                  (B, S_tgt, S_src)).astype(jnp.float32)
    causal = jnp.tril(jnp.ones((S_tgt, S_tgt), dtype=bool))
    dec_mask = jnp.where(tgt_keep[:, None, :] & causal[None],
                         0.0, neg).astype(jnp.float32)

    # Embedding gather + positional encoding (dropout is identity in eval).
    # TODO(synk): embedding gather stays in XLA (no clean small-Pallas gather).
    pe = params["pe"]
    enc = jnp.take(params["enc_emb"], source, axis=0) + pe[:S_src][None]
    dec = jnp.take(params["dec_emb"], target, axis=0) + pe[:S_tgt][None]

    for li in range(num_layers):
        p = params["encoders"][li]
        enc = self_attn_sublayer(enc, enc_mask, p["self_attn"], num_heads)
        enc = ffn_sublayer(enc, p["ff"])

    for li in range(num_layers):
        p = params["decoders"][li]
        dec = self_attn_sublayer(dec, dec_mask, p["self_attn"], num_heads)
        dec = cross_attn_sublayer(dec, enc, cross_mask, p["cross_attn"], num_heads)
        dec = ffn_sublayer(dec, p["ff"])

    D = dec.shape[-1]
    logits = pallas_linear(dec.reshape(B * S_tgt, D),
                           params["fc_out_w"], params["fc_out_b"])
    return logits.reshape(B, S_tgt, -1)


# ---------------------------------------------------------------------------
# Deterministic parameter initialization (matches nn.Linear default bounds)
# ---------------------------------------------------------------------------

def _init_linear(key, fan_in, fan_out):
    kw, kb = jax.random.split(key)
    bound = 1.0 / math.sqrt(fan_in)
    w = jax.random.uniform(kw, (fan_in, fan_out), jnp.float32, -bound, bound)
    b = jax.random.uniform(kb, (fan_out,), jnp.float32, -bound, bound)
    return w, b


def _ln_params(D):
    return jnp.ones((D,), jnp.float32), jnp.zeros((D,), jnp.float32)


def _init_self_attn(key, D):
    ks = jax.random.split(key, 4)
    wq, bq = _init_linear(ks[0], D, D)
    wk, bk = _init_linear(ks[1], D, D)
    wv, bv = _init_linear(ks[2], D, D)
    wo, bo = _init_linear(ks[3], D, D)
    g, b = _ln_params(D)
    return {"wqkv": jnp.concatenate([wq, wk, wv], axis=1),
            "bqkv": jnp.concatenate([bq, bk, bv]),
            "wo": wo, "bo": bo, "ln_g": g, "ln_b": b}


def _init_cross_attn(key, D):
    ks = jax.random.split(key, 4)
    wq, bq = _init_linear(ks[0], D, D)
    wk, bk = _init_linear(ks[1], D, D)
    wv, bv = _init_linear(ks[2], D, D)
    wo, bo = _init_linear(ks[3], D, D)
    g, b = _ln_params(D)
    return {"wq": wq, "bq": bq,
            "wkv": jnp.concatenate([wk, wv], axis=1),
            "bkv": jnp.concatenate([bk, bv]),
            "wo": wo, "bo": bo, "ln_g": g, "ln_b": b}


def _init_ff(key, D, ff_dim):
    k1, k2 = jax.random.split(key)
    w1, b1 = _init_linear(k1, D, ff_dim)
    w2, b2 = _init_linear(k2, ff_dim, D)
    g, b = _ln_params(D)
    return {"w1": w1, "b1": b1, "w2": w2, "b2": b2, "ln_g": g, "ln_b": b}


def init_transformer_params(key, src_vocab, tgt_vocab, D, num_layers,
                            compression_factor, max_seq_length):
    ff_dim = D * compression_factor
    keys = jax.random.split(key, 3 + 2 * num_layers)
    params = {
        "enc_emb": jax.random.normal(keys[0], (src_vocab, D), jnp.float32),
        "dec_emb": jax.random.normal(keys[1], (tgt_vocab, D), jnp.float32),
        "pe": create_positional_encoding(max_seq_length, D),
        "encoders": [],
        "decoders": [],
    }
    for li in range(num_layers):
        k = jax.random.split(keys[2 + li], 2)
        params["encoders"].append({"self_attn": _init_self_attn(k[0], D),
                                   "ff": _init_ff(k[1], D, ff_dim)})
    for li in range(num_layers):
        k = jax.random.split(keys[2 + num_layers + li], 3)
        params["decoders"].append({"self_attn": _init_self_attn(k[0], D),
                                   "cross_attn": _init_cross_attn(k[1], D),
                                   "ff": _init_ff(k[2], D, ff_dim)})
    w, b = _init_linear(keys[2 + 2 * num_layers], D, tgt_vocab)
    params["fc_out_w"] = w
    params["fc_out_b"] = b
    return params


# ---------------------------------------------------------------------------
# Main
# ---------------------------------------------------------------------------

if __name__ == "__main__":
    source_vocab_size = 40
    target_vocab_size = 48
    context_dim = 32
    num_heads = 4
    num_layers = 2
    compression_factor = 4
    max_seq_length = 16
    batch = 2
    src_len = 8
    tgt_len = 8
    pad_id = 0   # assumed en_vocab['<pad>'] == fr_vocab['<pad>'] == 0

    key = jax.random.PRNGKey(0)
    kp, ks, kt = jax.random.split(key, 3)

    params = init_transformer_params(kp, source_vocab_size, target_vocab_size,
                                     context_dim, num_layers,
                                     compression_factor, max_seq_length)

    source = jax.random.randint(ks, (batch, src_len), 1, source_vocab_size, jnp.int32)
    target = jax.random.randint(kt, (batch, tgt_len), 1, target_vocab_size, jnp.int32)
    # add some padding tokens to exercise the masks
    source = source.at[0, -2:].set(pad_id)
    target = target.at[1, -3:].set(pad_id)

    fwd = jax.jit(functools.partial(transformer_forward, num_heads=num_heads,
                                    num_layers=num_layers, pad_id=pad_id))
    logits = jax.block_until_ready(fwd(params, source, target))

    assert logits.shape == (batch, tgt_len, target_vocab_size)
    assert bool(jnp.all(jnp.isfinite(logits)))
    print("KERNEL_OK")
</pallas_src>

<mosaic_0001>
module attributes {stable_mosaic.version = 11 : i64} {
  func.func @_ffn_block_kernel(%arg0: i32, %arg1: memref<1x8x32xf32, #tpu.memory_space<vmem>>, %arg2: memref<32x128xf32, #tpu.memory_space<vmem>>, %arg3: memref<1x128xf32, #tpu.memory_space<vmem>>, %arg4: memref<128x32xf32, #tpu.memory_space<vmem>>, %arg5: memref<1x32xf32, #tpu.memory_space<vmem>>, %arg6: memref<1x32xf32, #tpu.memory_space<vmem>>, %arg7: memref<1x32xf32, #tpu.memory_space<vmem>>, %arg8: memref<1x8x32xf32, #tpu.memory_space<vmem>>) attributes {dimension_semantics = [#tpu.dimension_semantics<parallel>], iteration_bounds = array<i64: 2>, scalar_prefetch = 0 : i64, scratch_operands = 0 : i64, tpu.core_type = #tpu.core_type<tc>, window_params = [{transform_indices = @transform_0, window_bounds = array<i64: 1, 8, 32>}, {pipeline_mode = #tpu.pipeline_mode<synchronous>, transform_indices = @transform_1, window_bounds = array<i64: 32, 128>}, {pipeline_mode = #tpu.pipeline_mode<synchronous>, transform_indices = @transform_2, window_bounds = array<i64: 1, 128>}, {pipeline_mode = #tpu.pipeline_mode<synchronous>, transform_indices = @transform_3, window_bounds = array<i64: 128, 32>}, {pipeline_mode = #tpu.pipeline_mode<synchronous>, transform_indices = @transform_4, window_bounds = array<i64: 1, 32>}, {pipeline_mode = #tpu.pipeline_mode<synchronous>, transform_indices = @transform_5, window_bounds = array<i64: 1, 32>}, {pipeline_mode = #tpu.pipeline_mode<synchronous>, transform_indices = @transform_6, window_bounds = array<i64: 1, 32>}, {transform_indices = @transform_7, window_bounds = array<i64: 1, 8, 32>}]} {
    %c0 = arith.constant 0 : index
    %c0_0 = arith.constant 0 : index
    %c0_1 = arith.constant 0 : index
    %0 = vector.load %arg1[%c0, %c0_0, %c0_1] : memref<1x8x32xf32, #tpu.memory_space<vmem>>, vector<1x8x32xf32>
    %1 = vector.shape_cast %0 : vector<1x8x32xf32> to vector<8x32xf32>
    %c0_2 = arith.constant 0 : index
    %c0_3 = arith.constant 0 : index
    %2 = vector.load %arg2[%c0_2, %c0_3] : memref<32x128xf32, #tpu.memory_space<vmem>>, vector<32x128xf32>
    %3 = arith.truncf %1 : vector<8x32xf32> to vector<8x32xbf16>
    %4 = arith.truncf %2 : vector<32x128xf32> to vector<32x128xbf16>
    %cst = arith.constant dense<0.000000e+00> : vector<8x128xf32>
    %5 = tpu.matmul %3, %4, %cst {dimension_numbers = #tpu.dot_dimension_numbers<[1], [0], [0], [1], [0, 0, 1, 1], [], []>} : vector<8x32xbf16>, vector<32x128xbf16>, vector<8x128xf32> -> vector<8x128xf32>
    %c0_4 = arith.constant 0 : index
    %c0_5 = arith.constant 0 : index
    %6 = vector.load %arg3[%c0_4, %c0_5] : memref<1x128xf32, #tpu.memory_space<vmem>>, vector<1x128xf32>
    %7 = vector.broadcast %6 : vector<1x128xf32> to vector<8x128xf32>
    %8 = arith.addf %5, %7 : vector<8x128xf32>
    %cst_6 = arith.constant 0.000000e+00 : f32
    %9 = vector.broadcast %cst_6 : f32 to vector<8x128xf32>
    %10 = arith.maximumf %8, %9 : vector<8x128xf32>
    %c0_7 = arith.constant 0 : index
    %c0_8 = arith.constant 0 : index
    %11 = vector.load %arg4[%c0_7, %c0_8] : memref<128x32xf32, #tpu.memory_space<vmem>>, vector<128x32xf32>
    %12 = arith.truncf %10 : vector<8x128xf32> to vector<8x128xbf16>
    %13 = arith.truncf %11 : vector<128x32xf32> to vector<128x32xbf16>
    %cst_9 = arith.constant dense<0.000000e+00> : vector<8x32xf32>
    %14 = tpu.matmul %12, %13, %cst_9 {dimension_numbers = #tpu.dot_dimension_numbers<[1], [0], [0], [1], [0, 0, 1, 1], [], []>} : vector<8x128xbf16>, vector<128x32xbf16>, vector<8x32xf32> -> vector<8x32xf32>
    %15 = arith.addf %1, %14 : vector<8x32xf32>
    %c0_10 = arith.constant 0 : index
    %c0_11 = arith.constant 0 : index
    %16 = vector.load %arg5[%c0_10, %c0_11] : memref<1x32xf32, #tpu.memory_space<vmem>>, vector<1x32xf32>
    %17 = vector.broadcast %16 : vector<1x32xf32> to vector<8x32xf32>
    %18 = arith.addf %15, %17 : vector<8x32xf32>
    %c0_12 = arith.constant 0 : index
    %c0_13 = arith.constant 0 : index
    %19 = vector.load %arg6[%c0_12, %c0_13] : memref<1x32xf32, #tpu.memory_space<vmem>>, vector<1x32xf32>
    %c0_14 = arith.constant 0 : index
    %c0_15 = arith.constant 0 : index
    %20 = vector.load %arg7[%c0_14, %c0_15] : memref<1x32xf32, #tpu.memory_space<vmem>>, vector<1x32xf32>
    %cst_16 = arith.constant dense<0.000000e+00> : vector<8xf32>
    %21 = vector.multi_reduction <add>, %18, %cst_16 [1] : vector<8x32xf32> to vector<8xf32>
    %22 = vector.shape_cast %21 : vector<8xf32> to vector<8x1xf32>
    %cst_17 = arith.constant 3.200000e+01 : f32
    %23 = vector.broadcast %cst_17 : f32 to vector<8x1xf32>
    %24 = arith.divf %22, %23 : vector<8x1xf32>
    %25 = vector.broadcast %24 : vector<8x1xf32> to vector<8x32xf32>
    %26 = arith.subf %18, %25 : vector<8x32xf32>
    %27 = arith.mulf %26, %26 : vector<8x32xf32>
    %cst_18 = arith.constant dense<0.000000e+00> : vector<8xf32>
    %28 = vector.multi_reduction <add>, %27, %cst_18 [1] : vector<8x32xf32> to vector<8xf32>
    %29 = vector.shape_cast %28 : vector<8xf32> to vector<8x1xf32>
    %cst_19 = arith.constant 3.200000e+01 : f32
    %30 = vector.broadcast %cst_19 : f32 to vector<8x1xf32>
    %31 = arith.divf %29, %30 : vector<8x1xf32>
    %32 = vector.broadcast %24 : vector<8x1xf32> to vector<8x32xf32>
    %33 = arith.subf %18, %32 : vector<8x32xf32>
    %cst_20 = arith.constant 9.99999974E-6 : f32
    %34 = vector.broadcast %cst_20 : f32 to vector<8x1xf32>
    %35 = arith.addf %31, %34 : vector<8x1xf32>
    %36 = math.rsqrt %35 : vector<8x1xf32>
    %37 = vector.broadcast %36 : vector<8x1xf32> to vector<8x32xf32>
    %38 = arith.mulf %33, %37 : vector<8x32xf32>
    %39 = vector.broadcast %19 : vector<1x32xf32> to vector<8x32xf32>
    %40 = arith.mulf %38, %39 : vector<8x32xf32>
    %41 = vector.broadcast %20 : vector<1x32xf32> to vector<8x32xf32>
    %42 = arith.addf %40, %41 : vector<8x32xf32>
    %c0_21 = arith.constant 0 : index
    %c0_22 = arith.constant 0 : index
    %c0_23 = arith.constant 0 : index
    %43 = vector.load %arg8[%c0_21, %c0_22, %c0_23] : memref<1x8x32xf32, #tpu.memory_space<vmem>>, vector<1x8x32xf32>
    %44 = vector.shape_cast %43 : vector<1x8x32xf32> to vector<8x32xf32>
    %45 = vector.shape_cast %42 : vector<8x32xf32> to vector<1x8x32xf32>
    tpu.vector_store %arg8[%c0_21, %c0_22, %c0_23], %45 {strides = array<i32>} : memref<1x8x32xf32, #tpu.memory_space<vmem>>, vector<1x8x32xf32>,
    return
  }
  func.func @transform_0(%arg0: i32) -> (i32, i32, i32) {
    %c0_i32 = arith.constant 0 : i32
    %c0_i32_0 = arith.constant 0 : i32
    %c0_i32_1 = arith.constant 0 : i32
    return %arg0, %c0_i32, %c0_i32_0 : i32, i32, i32
  }
  func.func @transform_1(%arg0: i32) -> (i32, i32) {
    %c0_i32 = arith.constant 0 : i32
    %c0_i32_0 = arith.constant 0 : i32
    %c0_i32_1 = arith.constant 0 : i32
    return %c0_i32, %c0_i32_0 : i32, i32
  }
  func.func @transform_2(%arg0: i32) -> (i32, i32) {
    %c0_i32 = arith.constant 0 : i32
    %c0_i32_0 = arith.constant 0 : i32
    %c0_i32_1 = arith.constant 0 : i32
    return %c0_i32, %c0_i32_0 : i32, i32
  }
  func.func @transform_3(%arg0: i32) -> (i32, i32) {
    %c0_i32 = arith.constant 0 : i32
    %c0_i32_0 = arith.constant 0 : i32
    %c0_i32_1 = arith.constant 0 : i32
    return %c0_i32, %c0_i32_0 : i32, i32
  }
  func.func @transform_4(%arg0: i32) -> (i32, i32) {
    %c0_i32 = arith.constant 0 : i32
    %c0_i32_0 = arith.constant 0 : i32
    %c0_i32_1 = arith.constant 0 : i32
    return %c0_i32, %c0_i32_0 : i32, i32
  }
  func.func @transform_5(%arg0: i32) -> (i32, i32) {
    %c0_i32 = arith.constant 0 : i32
    %c0_i32_0 = arith.constant 0 : i32
    %c0_i32_1 = arith.constant 0 : i32
    return %c0_i32, %c0_i32_0 : i32, i32
  }
  func.func @transform_6(%arg0: i32) -> (i32, i32) {
    %c0_i32 = arith.constant 0 : i32
    %c0_i32_0 = arith.constant 0 : i32
    %c0_i32_1 = arith.constant 0 : i32
    return %c0_i32, %c0_i32_0 : i32, i32
  }
  func.func @transform_7(%arg0: i32) -> (i32, i32, i32) {
    %c0_i32 = arith.constant 0 : i32
    %c0_i32_0 = arith.constant 0 : i32
    %c0_i32_1 = arith.constant 0 : i32
    return %arg0, %c0_i32, %c0_i32_0 : i32, i32, i32
  }
}

module attributes {stable_mosaic.version = 11 : i64} {
  func.func @_cross_attn_block_kernel(%arg0: i32, %arg1: memref<1x8x32xf32, #tpu.memory_space<vmem>>, %arg2: memref<1x8x32xf32, #tpu.memory_space<vmem>>, %arg3: memref<1x8x8xf32, #tpu.memory_space<vmem>>, %arg4: memref<32x32xf32, #tpu.memory_space<vmem>>, %arg5: memref<1x32xf32, #tpu.memory_space<vmem>>, %arg6: memref<32x64xf32, #tpu.memory_space<vmem>>, %arg7: memref<1x64xf32, #tpu.memory_space<vmem>>, %arg8: memref<32x32xf32, #tpu.memory_space<vmem>>, %arg9: memref<1x32xf32, #tpu.memory_space<vmem>>, %arg10: memref<1x32xf32, #tpu.memory_space<vmem>>, %arg11: memref<1x32xf32, #tpu.memory_space<vmem>>, %arg12: memref<1x8x32xf32, #tpu.memory_space<vmem>>) attributes {dimension_semantics = [#tpu.dimension_semantics<parallel>], iteration_bounds = array<i64: 2>, scalar_prefetch = 0 : i64, scratch_operands = 0 : i64, tpu.core_type = #tpu.core_type<tc>, window_params = [{transform_indices = @transform_0, window_bounds = array<i64: 1, 8, 32>}, {transform_indices = @transform_1, window_bounds = array<i64: 1, 8, 32>}, {transform_indices = @transform_2, window_bounds = array<i64: 1, 8, 8>}, {pipeline_mode = #tpu.pipeline_mode<synchronous>, transform_indices = @transform_3, window_bounds = array<i64: 32, 32>}, {pipeline_mode = #tpu.pipeline_mode<synchronous>, transform_indices = @transform_4, window_bounds = array<i64: 1, 32>}, {pipeline_mode = #tpu.pipeline_mode<synchronous>, transform_indices = @transform_5, window_bounds = array<i64: 32, 64>}, {pipeline_mode = #tpu.pipeline_mode<synchronous>, transform_indices = @transform_6, window_bounds = array<i64: 1, 64>}, {pipeline_mode = #tpu.pipeline_mode<synchronous>, transform_indices = @transform_7, window_bounds = array<i64: 32, 32>}, {pipeline_mode = #tpu.pipeline_mode<synchronous>, transform_indices = @transform_8, window_bounds = array<i64: 1, 32>}, {pipeline_mode = #tpu.pipeline_mode<synchronous>, transform_indices = @transform_9, window_bounds = array<i64: 1, 32>}, {pipeline_mode = #tpu.pipeline_mode<synchronous>, transform_indices = @transform_10, window_bounds = array<i64: 1, 32>}, {transform_indices = @transform_11, window_bounds = array<i64: 1, 8, 32>}]} {
    %c0 = arith.constant 0 : index
    %c0_0 = arith.constant 0 : index
    %c0_1 = arith.constant 0 : index
    %0 = vector.load %arg1[%c0, %c0_0, %c0_1] : memref<1x8x32xf32, #tpu.memory_space<vmem>>, vector<1x8x32xf32>
    %1 = vector.shape_cast %0 : vector<1x8x32xf32> to vector<8x32xf32>
    %c0_2 = arith.constant 0 : index
    %c0_3 = arith.constant 0 : index
    %c0_4 = arith.constant 0 : index
    %2 = vector.load %arg2[%c0_2, %c0_3, %c0_4] : memref<1x8x32xf32, #tpu.memory_space<vmem>>, vector<1x8x32xf32>
    %3 = vector.shape_cast %2 : vector<1x8x32xf32> to vector<8x32xf32>
    %c0_5 = arith.constant 0 : index
    %c0_6 = arith.constant 0 : index
    %4 = vector.load %arg4[%c0_5, %c0_6] : memref<32x32xf32, #tpu.memory_space<vmem>>, vector<32x32xf32>
    %5 = arith.truncf %1 : vector<8x32xf32> to vector<8x32xbf16>
    %6 = arith.truncf %4 : vector<32x32xf32> to vector<32x32xbf16>
    %cst = arith.constant dense<0.000000e+00> : vector<8x32xf32>
    %7 = tpu.matmul %5, %6, %cst {dimension_numbers = #tpu.dot_dimension_numbers<[1], [0], [0], [1], [0, 0, 1, 1], [], []>} : vector<8x32xbf16>, vector<32x32xbf16>, vector<8x32xf32> -> vector<8x32xf32>
    %c0_7 = arith.constant 0 : index
    %c0_8 = arith.constant 0 : index
    %8 = vector.load %arg5[%c0_7, %c0_8] : memref<1x32xf32, #tpu.memory_space<vmem>>, vector<1x32xf32>
    %9 = vector.broadcast %8 : vector<1x32xf32> to vector<8x32xf32>
    %10 = arith.addf %7, %9 : vector<8x32xf32>
    %c0_9 = arith.constant 0 : index
    %c0_10 = arith.constant 0 : index
    %11 = vector.load %arg6[%c0_9, %c0_10] : memref<32x64xf32, #tpu.memory_space<vmem>>, vector<32x64xf32>
    %12 = arith.truncf %3 : vector<8x32xf32> to vector<8x32xbf16>
    %13 = arith.truncf %11 : vector<32x64xf32> to vector<32x64xbf16>
    %cst_11 = arith.constant dense<0.000000e+00> : vector<8x64xf32>
    %14 = tpu.matmul %12, %13, %cst_11 {dimension_numbers = #tpu.dot_dimension_numbers<[1], [0], [0], [1], [0, 0, 1, 1], [], []>} : vector<8x32xbf16>, vector<32x64xbf16>, vector<8x64xf32> -> vector<8x64xf32>
    %c0_12 = arith.constant 0 : index
    %c0_13 = arith.constant 0 : index
    %15 = vector.load %arg7[%c0_12, %c0_13] : memref<1x64xf32, #tpu.memory_space<vmem>>, vector<1x64xf32>
    %16 = vector.broadcast %15 : vector<1x64xf32> to vector<8x64xf32>
    %17 = arith.addf %14, %16 : vector<8x64xf32>
    %c0_14 = arith.constant 0 : index
    %c0_15 = arith.constant 0 : index
    %c0_16 = arith.constant 0 : index
    %18 = vector.load %arg3[%c0_14, %c0_15, %c0_16] : memref<1x8x8xf32, #tpu.memory_space<vmem>>, vector<1x8x8xf32>
    %19 = vector.shape_cast %18 : vector<1x8x8xf32> to vector<8x8xf32>
    %c0_17 = arith.constant 0 : index
    %c0_18 = arith.constant 0 : index
    %20 = vector.load %arg8[%c0_17, %c0_18] : memref<32x32xf32, #tpu.memory_space<vmem>>, vector<32x32xf32>
    %cst_19 = arith.constant 0.000000e+00 : f32
    %21 = vector.broadcast %cst_19 : f32 to vector<8x32xf32>
    %22 = vector.extract_strided_slice %10 {offsets = [0, 0], sizes = [8, 8], strides = [1, 1]} : vector<8x32xf32> to vector<8x8xf32>
    %23 = vector.extract_strided_slice %17 {offsets = [0, 0], sizes = [8, 8], strides = [1, 1]} : vector<8x64xf32> to vector<8x8xf32>
    %24 = vector.extract_strided_slice %17 {offsets = [0, 32], sizes = [8, 8], strides = [1, 1]} : vector<8x64xf32> to vector<8x8xf32>
    %25 = arith.truncf %22 : vector<8x8xf32> to vector<8x8xbf16>
    %26 = arith.truncf %23 : vector<8x8xf32> to vector<8x8xbf16>
    %cst_20 = arith.constant dense<0.000000e+00> : vector<8x8xf32>
    %27 = tpu.matmul %25, %26, %cst_20 {dimension_numbers = #tpu.dot_dimension_numbers<[1], [1], [0], [0], [0, 0, 1, 0], [], []>} : vector<8x8xbf16>, vector<8x8xbf16>, vector<8x8xf32> -> vector<8x8xf32>
    %cst_21 = arith.constant 0.353553385 : f32
    %28 = vector.broadcast %cst_21 : f32 to vector<8x8xf32>
    %29 = arith.mulf %27, %28 : vector<8x8xf32>
    %30 = arith.addf %29, %19 : vector<8x8xf32>
    %cst_22 = arith.constant dense<0xFF800000> : vector<8xf32>
    %31 = vector.multi_reduction <maximumf>, %30, %cst_22 [1] : vector<8x8xf32> to vector<8xf32>
    %32 = vector.shape_cast %31 : vector<8xf32> to vector<8x1xf32>
    %33 = vector.broadcast %32 : vector<8x1xf32> to vector<8x8xf32>
    %34 = arith.subf %30, %33 : vector<8x8xf32>
    %35 = math.exp %34 : vector<8x8xf32>
    %cst_23 = arith.constant dense<0.000000e+00> : vector<8xf32>
    %36 = vector.multi_reduction <add>, %35, %cst_23 [1] : vector<8x8xf32> to vector<8xf32>
    %37 = vector.shape_cast %36 : vector<8xf32> to vector<8x1xf32>
    %38 = tpu.reciprocal %37 {approx = true} : vector<8x1xf32> -> vector<8x1xf32>
    %39 = vector.broadcast %38 : vector<8x1xf32> to vector<8x8xf32>
    %40 = arith.mulf %35, %39 : vector<8x8xf32>
    %41 = arith.truncf %40 : vector<8x8xf32> to vector<8x8xbf16>
    %42 = arith.truncf %24 : vector<8x8xf32> to vector<8x8xbf16>
    %cst_24 = arith.constant dense<0.000000e+00> : vector<8x8xf32>
    %43 = tpu.matmul %41, %42, %cst_24 {dimension_numbers = #tpu.dot_dimension_numbers<[1], [0], [0], [1], [0, 0, 1, 1], [], []>} : vector<8x8xbf16>, vector<8x8xbf16>, vector<8x8xf32> -> vector<8x8xf32>
    %44 = vector.extract_strided_slice %20 {offsets = [0, 0], sizes = [8, 32], strides = [1, 1]} : vector<32x32xf32> to vector<8x32xf32>
    %45 = arith.truncf %43 : vector<8x8xf32> to vector<8x8xbf16>
    %46 = arith.truncf %44 : vector<8x32xf32> to vector<8x32xbf16>
    %cst_25 = arith.constant dense<0.000000e+00> : vector<8x32xf32>
    %47 = tpu.matmul %45, %46, %cst_25 {dimension_numbers = #tpu.dot_dimension_numbers<[1], [0], [0], [1], [0, 0, 1, 1], [], []>} : vector<8x8xbf16>, vector<8x32xbf16>, vector<8x32xf32> -> vector<8x32xf32>
    %48 = arith.addf %21, %47 : vector<8x32xf32>
    %49 = vector.extract_strided_slice %10 {offsets = [0, 8], sizes = [8, 8], strides = [1, 1]} : vector<8x32xf32> to vector<8x8xf32>
    %50 = vector.extract_strided_slice %17 {offsets = [0, 8], sizes = [8, 8], strides = [1, 1]} : vector<8x64xf32> to vector<8x8xf32>
    %51 = vector.extract_strided_slice %17 {offsets = [0, 40], sizes = [8, 8], strides = [1, 1]} : vector<8x64xf32> to vector<8x8xf32>
    %52 = arith.truncf %49 : vector<8x8xf32> to vector<8x8xbf16>
    %53 = arith.truncf %50 : vector<8x8xf32> to vector<8x8xbf16>
    %cst_26 = arith.constant dense<0.000000e+00> : vector<8x8xf32>
    %54 = tpu.matmul %52, %53, %cst_26 {dimension_numbers = #tpu.dot_dimension_numbers<[1], [1], [0], [0], [0, 0, 1, 0], [], []>} : vector<8x8xbf16>, vector<8x8xbf16>, vector<8x8xf32> -> vector<8x8xf32>
    %cst_27 = arith.constant 0.353553385 : f32
    %55 = vector.broadcast %cst_27 : f32 to vector<8x8xf32>
    %56 = arith.mulf %54, %55 : vector<8x8xf32>
    %57 = arith.addf %56, %19 : vector<8x8xf32>
    %cst_28 = arith.constant dense<0xFF800000> : vector<8xf32>
    %58 = vector.multi_reduction <maximumf>, %57, %cst_28 [1] : vector<8x8xf32> to vector<8xf32>
    %59 = vector.shape_cast %58 : vector<8xf32> to vector<8x1xf32>
    %60 = vector.broadcast %59 : vector<8x1xf32> to vector<8x8xf32>
    %61 = arith.subf %57, %60 : vector<8x8xf32>
    %62 = math.exp %61 : vector<8x8xf32>
    %cst_29 = arith.constant dense<0.000000e+00> : vector<8xf32>
    %63 = vector.multi_reduction <add>, %62, %cst_29 [1] : vector<8x8xf32> to vector<8xf32>
    %64 = vector.shape_cast %63 : vector<8xf32> to vector<8x1xf32>
    %65 = tpu.reciprocal %64 {approx = true} : vector<8x1xf32> -> vector<8x1xf32>
    %66 = vector.broadcast %65 : vector<8x1xf32> to vector<8x8xf32>
    %67 = arith.mulf %62, %66 : vector<8x8xf32>
    %68 = arith.truncf %67 : vector<8x8xf32> to vector<8x8xbf16>
    %69 = arith.truncf %51 : vector<8x8xf32> to vector<8x8xbf16>
    %cst_30 = arith.constant dense<0.000000e+00> : vector<8x8xf32>
    %70 = tpu.matmul %68, %69, %cst_30 {dimension_numbers = #tpu.dot_dimension_numbers<[1], [0], [0], [1], [0, 0, 1, 1], [], []>} : vector<8x8xbf16>, vector<8x8xbf16>, vector<8x8xf32> -> vector<8x8xf32>
    %71 = vector.extract_strided_slice %20 {offsets = [8, 0], sizes = [8, 32], strides = [1, 1]} : vector<32x32xf32> to vector<8x32xf32>
    %72 = arith.truncf %70 : vector<8x8xf32> to vector<8x8xbf16>
    %73 = arith.truncf %71 : vector<8x32xf32> to vector<8x32xbf16>
    %cst_31 = arith.constant dense<0.000000e+00> : vector<8x32xf32>
    %74 = tpu.matmul %72, %73, %cst_31 {dimension_numbers = #tpu.dot_dimension_numbers<[1], [0], [0], [1], [0, 0, 1, 1], [], []>} : vector<8x8xbf16>, vector<8x32xbf16>, vector<8x32xf32> -> vector<8x32xf32>
    %75 = arith.addf %48, %74 : vector<8x32xf32>
    %76 = vector.extract_strided_slice %10 {offsets = [0, 16], sizes = [8, 8], strides = [1, 1]} : vector<8x32xf32> to vector<8x8xf32>
    %77 = vector.extract_strided_slice %17 {offsets = [0, 16], sizes = [8, 8], strides = [1, 1]} : vector<8x64xf32> to vector<8x8xf32>
    %78 = vector.extract_strided_slice %17 {offsets = [0, 48], sizes = [8, 8], strides = [1, 1]} : vector<8x64xf32> to vector<8x8xf32>
    %79 = arith.truncf %76 : vector<8x8xf32> to vector<8x8xbf16>
    %80 = arith.truncf %77 : vector<8x8xf32> to vector<8x8xbf16>
    %cst_32 = arith.constant dense<0.000000e+00> : vector<8x8xf32>
    %81 = tpu.matmul %79, %80, %cst_32 {dimension_numbers = #tpu.dot_dimension_numbers<[1], [1], [0], [0], [0, 0, 1, 0], [], []>} : vector<8x8xbf16>, vector<8x8xbf16>, vector<8x8xf32> -> vector<8x8xf32>
    %cst_33 = arith.constant 0.353553385 : f32
    %82 = vector.broadcast %cst_33 : f32 to vector<8x8xf32>
    %83 = arith.mulf %81, %82 : vector<8x8xf32>
    %84 = arith.addf %83, %19 : vector<8x8xf32>
    %cst_34 = arith.constant dense<0xFF800000> : vector<8xf32>
    %85 = vector.multi_reduction <maximumf>, %84, %cst_34 [1] : vector<8x8xf32> to vector<8xf32>
    %86 = vector.shape_cast %85 : vector<8xf32> to vector<8x1xf32>
    %87 = vector.broadcast %86 : vector<8x1xf32> to vector<8x8xf32>
    %88 = arith.subf %84, %87 : vector<8x8xf32>
    %89 = math.exp %88 : vector<8x8xf32>
    %cst_35 = arith.constant dense<0.000000e+00> : vector<8xf32>
    %90 = vector.multi_reduction <add>, %89, %cst_35 [1] : vector<8x8xf32> to vector<8xf32>
    %91 = vector.shape_cast %90 : vector<8xf32> to vector<8x1xf32>
    %92 = tpu.reciprocal %91 {approx = true} : vector<8x1xf32> -> vector<8x1xf32>
    %93 = vector.broadcast %92 : vector<8x1xf32> to vector<8x8xf32>
    %94 = arith.mulf %89, %93 : vector<8x8xf32>
    %95 = arith.truncf %94 : vector<8x8xf32> to vector<8x8xbf16>
    %96 = arith.truncf %78 : vector<8x8xf32> to vector<8x8xbf16>
    %cst_36 = arith.constant dense<0.000000e+00> : vector<8x8xf32>
    %97 = tpu.matmul %95, %96, %cst_36 {dimension_numbers = #tpu.dot_dimension_numbers<[1], [0], [0], [1], [0, 0, 1, 1], [], []>} : vector<8x8xbf16>, vector<8x8xbf16>, vector<8x8xf32> -> vector<8x8xf32>
    %98 = vector.extract_strided_slice %20 {offsets = [16, 0], sizes = [8, 32], strides = [1, 1]} : vector<32x32xf32> to vector<8x32xf32>
    %99 = arith.truncf %97 : vector<8x8xf32> to vector<8x8xbf16>
    %100 = arith.truncf %98 : vector<8x32xf32> to vector<8x32xbf16>
    %cst_37 = arith.constant dense<0.000000e+00> : vector<8x32xf32>
    %101 = tpu.matmul %99, %100, %cst_37 {dimension_numbers = #tpu.dot_dimension_numbers<[1], [0], [0], [1], [0, 0, 1, 1], [], []>} : vector<8x8xbf16>, vector<8x32xbf16>, vector<8x32xf32> -> vector<8x32xf32>
    %102 = arith.addf %75, %101 : vector<8x32xf32>
    %103 = vector.extract_strided_slice %10 {offsets = [0, 24], sizes = [8, 8], strides = [1, 1]} : vector<8x32xf32> to vector<8x8xf32>
    %104 = vector.extract_strided_slice %17 {offsets = [0, 24], sizes = [8, 8], strides = [1, 1]} : vector<8x64xf32> to vector<8x8xf32>
    %105 = vector.extract_strided_slice %17 {offsets = [0, 56], sizes = [8, 8], strides = [1, 1]} : vector<8x64xf32> to vector<8x8xf32>
    %106 = arith.truncf %103 : vector<8x8xf32> to vector<8x8xbf16>
    %107 = arith.truncf %104 : vector<8x8xf32> to vector<8x8xbf16>
    %cst_38 = arith.constant dense<0.000000e+00> : vector<8x8xf32>
    %108 = tpu.matmul %106, %107, %cst_38 {dimension_numbers = #tpu.dot_dimension_numbers<[1], [1], [0], [0], [0, 0, 1, 0], [], []>} : vector<8x8xbf16>, vector<8x8xbf16>, vector<8x8xf32> -> vector<8x8xf32>
    %cst_39 = arith.constant 0.353553385 : f32
    %109 = vector.broadcast %cst_39 : f32 to vector<8x8xf32>
    %110 = arith.mulf %108, %109 : vector<8x8xf32>
    %111 = arith.addf %110, %19 : vector<8x8xf32>
    %cst_40 = arith.constant dense<0xFF800000> : vector<8xf32>
    %112 = vector.multi_reduction <maximumf>, %111, %cst_40 [1] : vector<8x8xf32> to vector<8xf32>
    %113 = vector.shape_cast %112 : vector<8xf32> to vector<8x1xf32>
    %114 = vector.broadcast %113 : vector<8x1xf32> to vector<8x8xf32>
    %115 = arith.subf %111, %114 : vector<8x8xf32>
    %116 = math.exp %115 : vector<8x8xf32>
    %cst_41 = arith.constant dense<0.000000e+00> : vector<8xf32>
    %117 = vector.multi_reduction <add>, %116, %cst_41 [1] : vector<8x8xf32> to vector<8xf32>
    %118 = vector.shape_cast %117 : vector<8xf32> to vector<8x1xf32>
    %119 = tpu.reciprocal %118 {approx = true} : vector<8x1xf32> -> vector<8x1xf32>
    %120 = vector.broadcast %119 : vector<8x1xf32> to vector<8x8xf32>
    %121 = arith.mulf %116, %120 : vector<8x8xf32>
    %122 = arith.truncf %121 : vector<8x8xf32> to vector<8x8xbf16>
    %123 = arith.truncf %105 : vector<8x8xf32> to vector<8x8xbf16>
    %cst_42 = arith.constant dense<0.000000e+00> : vector<8x8xf32>
    %124 = tpu.matmul %122, %123, %cst_42 {dimension_numbers = #tpu.dot_dimension_numbers<[1], [0], [0], [1], [0, 0, 1, 1], [], []>} : vector<8x8xbf16>, vector<8x8xbf16>, vector<8x8xf32> -> vector<8x8xf32>
    %125 = vector.extract_strided_slice %20 {offsets = [24, 0], sizes = [8, 32], strides = [1, 1]} : vector<32x32xf32> to vector<8x32xf32>
    %126 = arith.truncf %124 : vector<8x8xf32> to vector<8x8xbf16>
    %127 = arith.truncf %125 : vector<8x32xf32> to vector<8x32xbf16>
    %cst_43 = arith.constant dense<0.000000e+00> : vector<8x32xf32>
    %128 = tpu.matmul %126, %127, %cst_43 {dimension_numbers = #tpu.dot_dimension_numbers<[1], [0], [0], [1], [0, 0, 1, 1], [], []>} : vector<8x8xbf16>, vector<8x32xbf16>, vector<8x32xf32> -> vector<8x32xf32>
    %129 = arith.addf %102, %128 : vector<8x32xf32>
    %130 = arith.addf %1, %129 : vector<8x32xf32>
    %c0_44 = arith.constant 0 : index
    %c0_45 = arith.constant 0 : index
    %131 = vector.load %arg9[%c0_44, %c0_45] : memref<1x32xf32, #tpu.memory_space<vmem>>, vector<1x32xf32>
    %132 = vector.broadcast %131 : vector<1x32xf32> to vector<8x32xf32>
    %133 = arith.addf %130, %132 : vector<8x32xf32>
    %c0_46 = arith.constant 0 : index
    %c0_47 = arith.constant 0 : index
    %134 = vector.load %arg10[%c0_46, %c0_47] : memref<1x32xf32, #tpu.memory_space<vmem>>, vector<1x32xf32>
    %c0_48 = arith.constant 0 : index
    %c0_49 = arith.constant 0 : index
    %135 = vector.load %arg11[%c0_48, %c0_49] : memref<1x32xf32, #tpu.memory_space<vmem>>, vector<1x32xf32>
    %cst_50 = arith.constant dense<0.000000e+00> : vector<8xf32>
    %136 = vector.multi_reduction <add>, %133, %cst_50 [1] : vector<8x32xf32> to vector<8xf32>
    %137 = vector.shape_cast %136 : vector<8xf32> to vector<8x1xf32>
    %cst_51 = arith.constant 3.200000e+01 : f32
    %138 = vector.broadcast %cst_51 : f32 to vector<8x1xf32>
    %139 = arith.divf %137, %138 : vector<8x1xf32>
    %140 = vector.broadcast %139 : vector<8x1xf32> to vector<8x32xf32>
    %141 = arith.subf %133, %140 : vector<8x32xf32>
    %142 = arith.mulf %141, %141 : vector<8x32xf32>
    %cst_52 = arith.constant dense<0.000000e+00> : vector<8xf32>
    %143 = vector.multi_reduction <add>, %142, %cst_52 [1] : vector<8x32xf32> to vector<8xf32>
    %144 = vector.shape_cast %143 : vector<8xf32> to vector<8x1xf32>
    %cst_53 = arith.constant 3.200000e+01 : f32
    %145 = vector.broadcast %cst_53 : f32 to vector<8x1xf32>
    %146 = arith.divf %144, %145 : vector<8x1xf32>
    %147 = vector.broadcast %139 : vector<8x1xf32> to vector<8x32xf32>
    %148 = arith.subf %133, %147 : vector<8x32xf32>
    %cst_54 = arith.constant 9.99999974E-6 : f32
    %149 = vector.broadcast %cst_54 : f32 to vector<8x1xf32>
    %150 = arith.addf %146, %149 : vector<8x1xf32>
    %151 = math.rsqrt %150 : vector<8x1xf32>
    %152 = vector.broadcast %151 : vector<8x1xf32> to vector<8x32xf32>
    %153 = arith.mulf %148, %152 : vector<8x32xf32>
    %154 = vector.broadcast %134 : vector<1x32xf32> to vector<8x32xf32>
    %155 = arith.mulf %153, %154 : vector<8x32xf32>
    %156 = vector.broadcast %135 : vector<1x32xf32> to vector<8x32xf32>
    %157 = arith.addf %155, %156 : vector<8x32xf32>
    %c0_55 = arith.constant 0 : index
    %c0_56 = arith.constant 0 : index
    %c0_57 = arith.constant 0 : index
    %158 = vector.load %arg12[%c0_55, %c0_56, %c0_57] : memref<1x8x32xf32, #tpu.memory_space<vmem>>, vector<1x8x32xf32>
    %159 = vector.shape_cast %158 : vector<1x8x32xf32> to vector<8x32xf32>
    %160 = vector.shape_cast %157 : vector<8x32xf32> to vector<1x8x32xf32>
    tpu.vector_store %arg12[%c0_55, %c0_56, %c0_57], %160 {strides = array<i32>} : memref<1x8x32xf32, #tpu.memory_space<vmem>>, vector<1x8x32xf32>,
    return
  }
  func.func @transform_0(%arg0: i32) -> (i32, i32, i32) {
    %c0_i32 = arith.constant 0 : i32
    %c0_i32_0 = arith.constant 0 : i32
    %c0_i32_1 = arith.constant 0 : i32
    return %arg0, %c0_i32, %c0_i32_0 : i32, i32, i32
  }
  func.func @transform_1(%arg0: i32) -> (i32, i32, i32) {
    %c0_i32 = arith.constant 0 : i32
    %c0_i32_0 = arith.constant 0 : i32
    %c0_i32_1 = arith.constant 0 : i32
    return %arg0, %c0_i32, %c0_i32_0 : i32, i32, i32
  }
  func.func @transform_2(%arg0: i32) -> (i32, i32, i32) {
    %c0_i32 = arith.constant 0 : i32
    %c0_i32_0 = arith.constant 0 : i32
    %c0_i32_1 = arith.constant 0 : i32
    return %arg0, %c0_i32, %c0_i32_0 : i32, i32, i32
  }
  func.func @transform_3(%arg0: i32) -> (i32, i32) {
    %c0_i32 = arith.constant 0 : i32
    %c0_i32_0 = arith.constant 0 : i32
    %c0_i32_1 = arith.constant 0 : i32
    return %c0_i32, %c0_i32_0 : i32, i32
  }
  func.func @transform_4(%arg0: i32) -> (i32, i32) {
    %c0_i32 = arith.constant 0 : i32
    %c0_i32_0 = arith.constant 0 : i32
    %c0_i32_1 = arith.constant 0 : i32
    return %c0_i32, %c0_i32_0 : i32, i32
  }
  func.func @transform_5(%arg0: i32) -> (i32, i32) {
    %c0_i32 = arith.constant 0 : i32
    %c0_i32_0 = arith.constant 0 : i32
    %c0_i32_1 = arith.constant 0 : i32
    return %c0_i32, %c0_i32_0 : i32, i32
  }
  func.func @transform_6(%arg0: i32) -> (i32, i32) {
    %c0_i32 = arith.constant 0 : i32
    %c0_i32_0 = arith.constant 0 : i32
    %c0_i32_1 = arith.constant 0 : i32
    return %c0_i32, %c0_i32_0 : i32, i32
  }
  func.func @transform_7(%arg0: i32) -> (i32, i32) {
    %c0_i32 = arith.constant 0 : i32
    %c0_i32_0 = arith.constant 0 : i32
    %c0_i32_1 = arith.constant 0 : i32
    return %c0_i32, %c0_i32_0 : i32, i32
  }
  func.func @transform_8(%arg0: i32) -> (i32, i32) {
    %c0_i32 = arith.constant 0 : i32
    %c0_i32_0 = arith.constant 0 : i32
    %c0_i32_1 = arith.constant 0 : i32
    return %c0_i32, %c0_i32_0 : i32, i32
  }
  func.func @transform_9(%arg0: i32) -> (i32, i32) {
    %c0_i32 = arith.constant 0 : i32
    %c0_i32_0 = arith.constant 0 : i32
    %c0_i32_1 = arith.constant 0 : i32
    return %c0_i32, %c0_i32_0 : i32, i32
  }
  func.func @transform_10(%arg0: i32) -> (i32, i32) {
    %c0_i32 = arith.constant 0 : i32
    %c0_i32_0 = arith.constant 0 : i32
    %c0_i32_1 = arith.constant 0 : i32
    return %c0_i32, %c0_i32_0 : i32, i32
  }
  func.func @transform_11(%arg0: i32) -> (i32, i32, i32) {
    %c0_i32 = arith.constant 0 : i32
    %c0_i32_0 = arith.constant 0 : i32
    %c0_i32_1 = arith.constant 0 : i32
    return %arg0, %c0_i32, %c0_i32_0 : i32, i32, i32
  }
}

module attributes {stable_mosaic.version = 11 : i64} {
  func.func @_self_attn_block_kernel(%arg0: i32, %arg1: memref<1x8x32xf32, #tpu.memory_space<vmem>>, %arg2: memref<1x8x8xf32, #tpu.memory_space<vmem>>, %arg3: memref<32x96xf32, #tpu.memory_space<vmem>>, %arg4: memref<1x96xf32, #tpu.memory_space<vmem>>, %arg5: memref<32x32xf32, #tpu.memory_space<vmem>>, %arg6: memref<1x32xf32, #tpu.memory_space<vmem>>, %arg7: memref<1x32xf32, #tpu.memory_space<vmem>>, %arg8: memref<1x32xf32, #tpu.memory_space<vmem>>, %arg9: memref<1x8x32xf32, #tpu.memory_space<vmem>>) attributes {dimension_semantics = [#tpu.dimension_semantics<parallel>], iteration_bounds = array<i64: 2>, scalar_prefetch = 0 : i64, scratch_operands = 0 : i64, tpu.core_type = #tpu.core_type<tc>, window_params = [{transform_indices = @transform_0, window_bounds = array<i64: 1, 8, 32>}, {transform_indices = @transform_1, window_bounds = array<i64: 1, 8, 8>}, {pipeline_mode = #tpu.pipeline_mode<synchronous>, transform_indices = @transform_2, window_bounds = array<i64: 32, 96>}, {pipeline_mode = #tpu.pipeline_mode<synchronous>, transform_indices = @transform_3, window_bounds = array<i64: 1, 96>}, {pipeline_mode = #tpu.pipeline_mode<synchronous>, transform_indices = @transform_4, window_bounds = array<i64: 32, 32>}, {pipeline_mode = #tpu.pipeline_mode<synchronous>, transform_indices = @transform_5, window_bounds = array<i64: 1, 32>}, {pipeline_mode = #tpu.pipeline_mode<synchronous>, transform_indices = @transform_6, window_bounds = array<i64: 1, 32>}, {pipeline_mode = #tpu.pipeline_mode<synchronous>, transform_indices = @transform_7, window_bounds = array<i64: 1, 32>}, {transform_indices = @transform_8, window_bounds = array<i64: 1, 8, 32>}]} {
    %c0 = arith.constant 0 : index
    %c0_0 = arith.constant 0 : index
    %c0_1 = arith.constant 0 : index
    %0 = vector.load %arg1[%c0, %c0_0, %c0_1] : memref<1x8x32xf32, #tpu.memory_space<vmem>>, vector<1x8x32xf32>
    %1 = vector.shape_cast %0 : vector<1x8x32xf32> to vector<8x32xf32>
    %c0_2 = arith.constant 0 : index
    %c0_3 = arith.constant 0 : index
    %2 = vector.load %arg3[%c0_2, %c0_3] : memref<32x96xf32, #tpu.memory_space<vmem>>, vector<32x96xf32>
    %3 = arith.truncf %1 : vector<8x32xf32> to vector<8x32xbf16>
    %4 = arith.truncf %2 : vector<32x96xf32> to vector<32x96xbf16>
    %cst = arith.constant dense<0.000000e+00> : vector<8x96xf32>
    %5 = tpu.matmul %3, %4, %cst {dimension_numbers = #tpu.dot_dimension_numbers<[1], [0], [0], [1], [0, 0, 1, 1], [], []>} : vector<8x32xbf16>, vector<32x96xbf16>, vector<8x96xf32> -> vector<8x96xf32>
    %c0_4 = arith.constant 0 : index
    %c0_5 = arith.constant 0 : index
    %6 = vector.load %arg4[%c0_4, %c0_5] : memref<1x96xf32, #tpu.memory_space<vmem>>, vector<1x96xf32>
    %7 = vector.broadcast %6 : vector<1x96xf32> to vector<8x96xf32>
    %8 = arith.addf %5, %7 : vector<8x96xf32>
    %c0_6 = arith.constant 0 : index
    %c0_7 = arith.constant 0 : index
    %c0_8 = arith.constant 0 : index
    %9 = vector.load %arg2[%c0_6, %c0_7, %c0_8] : memref<1x8x8xf32, #tpu.memory_space<vmem>>, vector<1x8x8xf32>
    %10 = vector.shape_cast %9 : vector<1x8x8xf32> to vector<8x8xf32>
    %c0_9 = arith.constant 0 : index
    %c0_10 = arith.constant 0 : index
    %11 = vector.load %arg5[%c0_9, %c0_10] : memref<32x32xf32, #tpu.memory_space<vmem>>, vector<32x32xf32>
    %cst_11 = arith.constant 0.000000e+00 : f32
    %12 = vector.broadcast %cst_11 : f32 to vector<8x32xf32>
    %13 = vector.extract_strided_slice %8 {offsets = [0, 0], sizes = [8, 8], strides = [1, 1]} : vector<8x96xf32> to vector<8x8xf32>
    %14 = vector.extract_strided_slice %8 {offsets = [0, 32], sizes = [8, 8], strides = [1, 1]} : vector<8x96xf32> to vector<8x8xf32>
    %15 = vector.extract_strided_slice %8 {offsets = [0, 64], sizes = [8, 8], strides = [1, 1]} : vector<8x96xf32> to vector<8x8xf32>
    %16 = arith.truncf %13 : vector<8x8xf32> to vector<8x8xbf16>
    %17 = arith.truncf %14 : vector<8x8xf32> to vector<8x8xbf16>
    %cst_12 = arith.constant dense<0.000000e+00> : vector<8x8xf32>
    %18 = tpu.matmul %16, %17, %cst_12 {dimension_numbers = #tpu.dot_dimension_numbers<[1], [1], [0], [0], [0, 0, 1, 0], [], []>} : vector<8x8xbf16>, vector<8x8xbf16>, vector<8x8xf32> -> vector<8x8xf32>
    %cst_13 = arith.constant 0.353553385 : f32
    %19 = vector.broadcast %cst_13 : f32 to vector<8x8xf32>
    %20 = arith.mulf %18, %19 : vector<8x8xf32>
    %21 = arith.addf %20, %10 : vector<8x8xf32>
    %cst_14 = arith.constant dense<0xFF800000> : vector<8xf32>
    %22 = vector.multi_reduction <maximumf>, %21, %cst_14 [1] : vector<8x8xf32> to vector<8xf32>
    %23 = vector.shape_cast %22 : vector<8xf32> to vector<8x1xf32>
    %24 = vector.broadcast %23 : vector<8x1xf32> to vector<8x8xf32>
    %25 = arith.subf %21, %24 : vector<8x8xf32>
    %26 = math.exp %25 : vector<8x8xf32>
    %cst_15 = arith.constant dense<0.000000e+00> : vector<8xf32>
    %27 = vector.multi_reduction <add>, %26, %cst_15 [1] : vector<8x8xf32> to vector<8xf32>
    %28 = vector.shape_cast %27 : vector<8xf32> to vector<8x1xf32>
    %29 = tpu.reciprocal %28 {approx = true} : vector<8x1xf32> -> vector<8x1xf32>
    %30 = vector.broadcast %29 : vector<8x1xf32> to vector<8x8xf32>
    %31 = arith.mulf %26, %30 : vector<8x8xf32>
    %32 = arith.truncf %31 : vector<8x8xf32> to vector<8x8xbf16>
    %33 = arith.truncf %15 : vector<8x8xf32> to vector<8x8xbf16>
    %cst_16 = arith.constant dense<0.000000e+00> : vector<8x8xf32>
    %34 = tpu.matmul %32, %33, %cst_16 {dimension_numbers = #tpu.dot_dimension_numbers<[1], [0], [0], [1], [0, 0, 1, 1], [], []>} : vector<8x8xbf16>, vector<8x8xbf16>, vector<8x8xf32> -> vector<8x8xf32>
    %35 = vector.extract_strided_slice %11 {offsets = [0, 0], sizes = [8, 32], strides = [1, 1]} : vector<32x32xf32> to vector<8x32xf32>
    %36 = arith.truncf %34 : vector<8x8xf32> to vector<8x8xbf16>
    %37 = arith.truncf %35 : vector<8x32xf32> to vector<8x32xbf16>
    %cst_17 = arith.constant dense<0.000000e+00> : vector<8x32xf32>
    %38 = tpu.matmul %36, %37, %cst_17 {dimension_numbers = #tpu.dot_dimension_numbers<[1], [0], [0], [1], [0, 0, 1, 1], [], []>} : vector<8x8xbf16>, vector<8x32xbf16>, vector<8x32xf32> -> vector<8x32xf32>
    %39 = arith.addf %12, %38 : vector<8x32xf32>
    %40 = vector.extract_strided_slice %8 {offsets = [0, 8], sizes = [8, 8], strides = [1, 1]} : vector<8x96xf32> to vector<8x8xf32>
    %41 = vector.extract_strided_slice %8 {offsets = [0, 40], sizes = [8, 8], strides = [1, 1]} : vector<8x96xf32> to vector<8x8xf32>
    %42 = vector.extract_strided_slice %8 {offsets = [0, 72], sizes = [8, 8], strides = [1, 1]} : vector<8x96xf32> to vector<8x8xf32>
    %43 = arith.truncf %40 : vector<8x8xf32> to vector<8x8xbf16>
    %44 = arith.truncf %41 : vector<8x8xf32> to vector<8x8xbf16>
    %cst_18 = arith.constant dense<0.000000e+00> : vector<8x8xf32>
    %45 = tpu.matmul %43, %44, %cst_18 {dimension_numbers = #tpu.dot_dimension_numbers<[1], [1], [0], [0], [0, 0, 1, 0], [], []>} : vector<8x8xbf16>, vector<8x8xbf16>, vector<8x8xf32> -> vector<8x8xf32>
    %cst_19 = arith.constant 0.353553385 : f32
    %46 = vector.broadcast %cst_19 : f32 to vector<8x8xf32>
    %47 = arith.mulf %45, %46 : vector<8x8xf32>
    %48 = arith.addf %47, %10 : vector<8x8xf32>
    %cst_20 = arith.constant dense<0xFF800000> : vector<8xf32>
    %49 = vector.multi_reduction <maximumf>, %48, %cst_20 [1] : vector<8x8xf32> to vector<8xf32>
    %50 = vector.shape_cast %49 : vector<8xf32> to vector<8x1xf32>
    %51 = vector.broadcast %50 : vector<8x1xf32> to vector<8x8xf32>
    %52 = arith.subf %48, %51 : vector<8x8xf32>
    %53 = math.exp %52 : vector<8x8xf32>
    %cst_21 = arith.constant dense<0.000000e+00> : vector<8xf32>
    %54 = vector.multi_reduction <add>, %53, %cst_21 [1] : vector<8x8xf32> to vector<8xf32>
    %55 = vector.shape_cast %54 : vector<8xf32> to vector<8x1xf32>
    %56 = tpu.reciprocal %55 {approx = true} : vector<8x1xf32> -> vector<8x1xf32>
    %57 = vector.broadcast %56 : vector<8x1xf32> to vector<8x8xf32>
    %58 = arith.mulf %53, %57 : vector<8x8xf32>
    %59 = arith.truncf %58 : vector<8x8xf32> to vector<8x8xbf16>
    %60 = arith.truncf %42 : vector<8x8xf32> to vector<8x8xbf16>
    %cst_22 = arith.constant dense<0.000000e+00> : vector<8x8xf32>
    %61 = tpu.matmul %59, %60, %cst_22 {dimension_numbers = #tpu.dot_dimension_numbers<[1], [0], [0], [1], [0, 0, 1, 1], [], []>} : vector<8x8xbf16>, vector<8x8xbf16>, vector<8x8xf32> -> vector<8x8xf32>
    %62 = vector.extract_strided_slice %11 {offsets = [8, 0], sizes = [8, 32], strides = [1, 1]} : vector<32x32xf32> to vector<8x32xf32>
    %63 = arith.truncf %61 : vector<8x8xf32> to vector<8x8xbf16>
    %64 = arith.truncf %62 : vector<8x32xf32> to vector<8x32xbf16>
    %cst_23 = arith.constant dense<0.000000e+00> : vector<8x32xf32>
    %65 = tpu.matmul %63, %64, %cst_23 {dimension_numbers = #tpu.dot_dimension_numbers<[1], [0], [0], [1], [0, 0, 1, 1], [], []>} : vector<8x8xbf16>, vector<8x32xbf16>, vector<8x32xf32> -> vector<8x32xf32>
    %66 = arith.addf %39, %65 : vector<8x32xf32>
    %67 = vector.extract_strided_slice %8 {offsets = [0, 16], sizes = [8, 8], strides = [1, 1]} : vector<8x96xf32> to vector<8x8xf32>
    %68 = vector.extract_strided_slice %8 {offsets = [0, 48], sizes = [8, 8], strides = [1, 1]} : vector<8x96xf32> to vector<8x8xf32>
    %69 = vector.extract_strided_slice %8 {offsets = [0, 80], sizes = [8, 8], strides = [1, 1]} : vector<8x96xf32> to vector<8x8xf32>
    %70 = arith.truncf %67 : vector<8x8xf32> to vector<8x8xbf16>
    %71 = arith.truncf %68 : vector<8x8xf32> to vector<8x8xbf16>
    %cst_24 = arith.constant dense<0.000000e+00> : vector<8x8xf32>
    %72 = tpu.matmul %70, %71, %cst_24 {dimension_numbers = #tpu.dot_dimension_numbers<[1], [1], [0], [0], [0, 0, 1, 0], [], []>} : vector<8x8xbf16>, vector<8x8xbf16>, vector<8x8xf32> -> vector<8x8xf32>
    %cst_25 = arith.constant 0.353553385 : f32
    %73 = vector.broadcast %cst_25 : f32 to vector<8x8xf32>
    %74 = arith.mulf %72, %73 : vector<8x8xf32>
    %75 = arith.addf %74, %10 : vector<8x8xf32>
    %cst_26 = arith.constant dense<0xFF800000> : vector<8xf32>
    %76 = vector.multi_reduction <maximumf>, %75, %cst_26 [1] : vector<8x8xf32> to vector<8xf32>
    %77 = vector.shape_cast %76 : vector<8xf32> to vector<8x1xf32>
    %78 = vector.broadcast %77 : vector<8x1xf32> to vector<8x8xf32>
    %79 = arith.subf %75, %78 : vector<8x8xf32>
    %80 = math.exp %79 : vector<8x8xf32>
    %cst_27 = arith.constant dense<0.000000e+00> : vector<8xf32>
    %81 = vector.multi_reduction <add>, %80, %cst_27 [1] : vector<8x8xf32> to vector<8xf32>
    %82 = vector.shape_cast %81 : vector<8xf32> to vector<8x1xf32>
    %83 = tpu.reciprocal %82 {approx = true} : vector<8x1xf32> -> vector<8x1xf32>
    %84 = vector.broadcast %83 : vector<8x1xf32> to vector<8x8xf32>
    %85 = arith.mulf %80, %84 : vector<8x8xf32>
    %86 = arith.truncf %85 : vector<8x8xf32> to vector<8x8xbf16>
    %87 = arith.truncf %69 : vector<8x8xf32> to vector<8x8xbf16>
    %cst_28 = arith.constant dense<0.000000e+00> : vector<8x8xf32>
    %88 = tpu.matmul %86, %87, %cst_28 {dimension_numbers = #tpu.dot_dimension_numbers<[1], [0], [0], [1], [0, 0, 1, 1], [], []>} : vector<8x8xbf16>, vector<8x8xbf16>, vector<8x8xf32> -> vector<8x8xf32>
    %89 = vector.extract_strided_slice %11 {offsets = [16, 0], sizes = [8, 32], strides = [1, 1]} : vector<32x32xf32> to vector<8x32xf32>
    %90 = arith.truncf %88 : vector<8x8xf32> to vector<8x8xbf16>
    %91 = arith.truncf %89 : vector<8x32xf32> to vector<8x32xbf16>
    %cst_29 = arith.constant dense<0.000000e+00> : vector<8x32xf32>
    %92 = tpu.matmul %90, %91, %cst_29 {dimension_numbers = #tpu.dot_dimension_numbers<[1], [0], [0], [1], [0, 0, 1, 1], [], []>} : vector<8x8xbf16>, vector<8x32xbf16>, vector<8x32xf32> -> vector<8x32xf32>
    %93 = arith.addf %66, %92 : vector<8x32xf32>
    %94 = vector.extract_strided_slice %8 {offsets = [0, 24], sizes = [8, 8], strides = [1, 1]} : vector<8x96xf32> to vector<8x8xf32>
    %95 = vector.extract_strided_slice %8 {offsets = [0, 56], sizes = [8, 8], strides = [1, 1]} : vector<8x96xf32> to vector<8x8xf32>
    %96 = vector.extract_strided_slice %8 {offsets = [0, 88], sizes = [8, 8], strides = [1, 1]} : vector<8x96xf32> to vector<8x8xf32>
    %97 = arith.truncf %94 : vector<8x8xf32> to vector<8x8xbf16>
    %98 = arith.truncf %95 : vector<8x8xf32> to vector<8x8xbf16>
    %cst_30 = arith.constant dense<0.000000e+00> : vector<8x8xf32>
    %99 = tpu.matmul %97, %98, %cst_30 {dimension_numbers = #tpu.dot_dimension_numbers<[1], [1], [0], [0], [0, 0, 1, 0], [], []>} : vector<8x8xbf16>, vector<8x8xbf16>, vector<8x8xf32> -> vector<8x8xf32>
    %cst_31 = arith.constant 0.353553385 : f32
    %100 = vector.broadcast %cst_31 : f32 to vector<8x8xf32>
    %101 = arith.mulf %99, %100 : vector<8x8xf32>
    %102 = arith.addf %101, %10 : vector<8x8xf32>
    %cst_32 = arith.constant dense<0xFF800000> : vector<8xf32>
    %103 = vector.multi_reduction <maximumf>, %102, %cst_32 [1] : vector<8x8xf32> to vector<8xf32>
    %104 = vector.shape_cast %103 : vector<8xf32> to vector<8x1xf32>
    %105 = vector.broadcast %104 : vector<8x1xf32> to vector<8x8xf32>
    %106 = arith.subf %102, %105 : vector<8x8xf32>
    %107 = math.exp %106 : vector<8x8xf32>
    %cst_33 = arith.constant dense<0.000000e+00> : vector<8xf32>
    %108 = vector.multi_reduction <add>, %107, %cst_33 [1] : vector<8x8xf32> to vector<8xf32>
    %109 = vector.shape_cast %108 : vector<8xf32> to vector<8x1xf32>
    %110 = tpu.reciprocal %109 {approx = true} : vector<8x1xf32> -> vector<8x1xf32>
    %111 = vector.broadcast %110 : vector<8x1xf32> to vector<8x8xf32>
    %112 = arith.mulf %107, %111 : vector<8x8xf32>
    %113 = arith.truncf %112 : vector<8x8xf32> to vector<8x8xbf16>
    %114 = arith.truncf %96 : vector<8x8xf32> to vector<8x8xbf16>
    %cst_34 = arith.constant dense<0.000000e+00> : vector<8x8xf32>
    %115 = tpu.matmul %113, %114, %cst_34 {dimension_numbers = #tpu.dot_dimension_numbers<[1], [0], [0], [1], [0, 0, 1, 1], [], []>} : vector<8x8xbf16>, vector<8x8xbf16>, vector<8x8xf32> -> vector<8x8xf32>
    %116 = vector.extract_strided_slice %11 {offsets = [24, 0], sizes = [8, 32], strides = [1, 1]} : vector<32x32xf32> to vector<8x32xf32>
    %117 = arith.truncf %115 : vector<8x8xf32> to vector<8x8xbf16>
    %118 = arith.truncf %116 : vector<8x32xf32> to vector<8x32xbf16>
    %cst_35 = arith.constant dense<0.000000e+00> : vector<8x32xf32>
    %119 = tpu.matmul %117, %118, %cst_35 {dimension_numbers = #tpu.dot_dimension_numbers<[1], [0], [0], [1], [0, 0, 1, 1], [], []>} : vector<8x8xbf16>, vector<8x32xbf16>, vector<8x32xf32> -> vector<8x32xf32>
    %120 = arith.addf %93, %119 : vector<8x32xf32>
    %121 = arith.addf %1, %120 : vector<8x32xf32>
    %c0_36 = arith.constant 0 : index
    %c0_37 = arith.constant 0 : index
    %122 = vector.load %arg6[%c0_36, %c0_37] : memref<1x32xf32, #tpu.memory_space<vmem>>, vector<1x32xf32>
    %123 = vector.broadcast %122 : vector<1x32xf32> to vector<8x32xf32>
    %124 = arith.addf %121, %123 : vector<8x32xf32>
    %c0_38 = arith.constant 0 : index
    %c0_39 = arith.constant 0 : index
    %125 = vector.load %arg7[%c0_38, %c0_39] : memref<1x32xf32, #tpu.memory_space<vmem>>, vector<1x32xf32>
    %c0_40 = arith.constant 0 : index
    %c0_41 = arith.constant 0 : index
    %126 = vector.load %arg8[%c0_40, %c0_41] : memref<1x32xf32, #tpu.memory_space<vmem>>, vector<1x32xf32>
    %cst_42 = arith.constant dense<0.000000e+00> : vector<8xf32>
    %127 = vector.multi_reduction <add>, %124, %cst_42 [1] : vector<8x32xf32> to vector<8xf32>
    %128 = vector.shape_cast %127 : vector<8xf32> to vector<8x1xf32>
    %cst_43 = arith.constant 3.200000e+01 : f32
    %129 = vector.broadcast %cst_43 : f32 to vector<8x1xf32>
    %130 = arith.divf %128, %129 : vector<8x1xf32>
    %131 = vector.broadcast %130 : vector<8x1xf32> to vector<8x32xf32>
    %132 = arith.subf %124, %131 : vector<8x32xf32>
    %133 = arith.mulf %132, %132 : vector<8x32xf32>
    %cst_44 = arith.constant dense<0.000000e+00> : vector<8xf32>
    %134 = vector.multi_reduction <add>, %133, %cst_44 [1] : vector<8x32xf32> to vector<8xf32>
    %135 = vector.shape_cast %134 : vector<8xf32> to vector<8x1xf32>
    %cst_45 = arith.constant 3.200000e+01 : f32
    %136 = vector.broadcast %cst_45 : f32 to vector<8x1xf32>
    %137 = arith.divf %135, %136 : vector<8x1xf32>
    %138 = vector.broadcast %130 : vector<8x1xf32> to vector<8x32xf32>
    %139 = arith.subf %124, %138 : vector<8x32xf32>
    %cst_46 = arith.constant 9.99999974E-6 : f32
    %140 = vector.broadcast %cst_46 : f32 to vector<8x1xf32>
    %141 = arith.addf %137, %140 : vector<8x1xf32>
    %142 = math.rsqrt %141 : vector<8x1xf32>
    %143 = vector.broadcast %142 : vector<8x1xf32> to vector<8x32xf32>
    %144 = arith.mulf %139, %143 : vector<8x32xf32>
    %145 = vector.broadcast %125 : vector<1x32xf32> to vector<8x32xf32>
    %146 = arith.mulf %144, %145 : vector<8x32xf32>
    %147 = vector.broadcast %126 : vector<1x32xf32> to vector<8x32xf32>
    %148 = arith.addf %146, %147 : vector<8x32xf32>
    %c0_47 = arith.constant 0 : index
    %c0_48 = arith.constant 0 : index
    %c0_49 = arith.constant 0 : index
    %149 = vector.load %arg9[%c0_47, %c0_48, %c0_49] : memref<1x8x32xf32, #tpu.memory_space<vmem>>, vector<1x8x32xf32>
    %150 = vector.shape_cast %149 : vector<1x8x32xf32> to vector<8x32xf32>
    %151 = vector.shape_cast %148 : vector<8x32xf32> to vector<1x8x32xf32>
    tpu.vector_store %arg9[%c0_47, %c0_48, %c0_49], %151 {strides = array<i32>} : memref<1x8x32xf32, #tpu.memory_space<vmem>>, vector<1x8x32xf32>,
    return
  }
  func.func @transform_0(%arg0: i32) -> (i32, i32, i32) {
    %c0_i32 = arith.constant 0 : i32
    %c0_i32_0 = arith.constant 0 : i32
    %c0_i32_1 = arith.constant 0 : i32
    return %arg0, %c0_i32, %c0_i32_0 : i32, i32, i32
  }
  func.func @transform_1(%arg0: i32) -> (i32, i32, i32) {
    %c0_i32 = arith.constant 0 : i32
    %c0_i32_0 = arith.constant 0 : i32
    %c0_i32_1 = arith.constant 0 : i32
    return %arg0, %c0_i32, %c0_i32_0 : i32, i32, i32
  }
  func.func @transform_2(%arg0: i32) -> (i32, i32) {
    %c0_i32 = arith.constant 0 : i32
    %c0_i32_0 = arith.constant 0 : i32
    %c0_i32_1 = arith.constant 0 : i32
    return %c0_i32, %c0_i32_0 : i32, i32
  }
  func.func @transform_3(%arg0: i32) -> (i32, i32) {
    %c0_i32 = arith.constant 0 : i32
    %c0_i32_0 = arith.constant 0 : i32
    %c0_i32_1 = arith.constant 0 : i32
    return %c0_i32, %c0_i32_0 : i32, i32
  }
  func.func @transform_4(%arg0: i32) -> (i32, i32) {
    %c0_i32 = arith.constant 0 : i32
    %c0_i32_0 = arith.constant 0 : i32
    %c0_i32_1 = arith.constant 0 : i32
    return %c0_i32, %c0_i32_0 : i32, i32
  }
  func.func @transform_5(%arg0: i32) -> (i32, i32) {
    %c0_i32 = arith.constant 0 : i32
    %c0_i32_0 = arith.constant 0 : i32
    %c0_i32_1 = arith.constant 0 : i32
    return %c0_i32, %c0_i32_0 : i32, i32
  }
  func.func @transform_6(%arg0: i32) -> (i32, i32) {
    %c0_i32 = arith.constant 0 : i32
    %c0_i32_0 = arith.constant 0 : i32
    %c0_i32_1 = arith.constant 0 : i32
    return %c0_i32, %c0_i32_0 : i32, i32
  }
  func.func @transform_7(%arg0: i32) -> (i32, i32) {
    %c0_i32 = arith.constant 0 : i32
    %c0_i32_0 = arith.constant 0 : i32
    %c0_i32_1 = arith.constant 0 : i32
    return %c0_i32, %c0_i32_0 : i32, i32
  }
  func.func @transform_8(%arg0: i32) -> (i32, i32, i32) {
    %c0_i32 = arith.constant 0 : i32
    %c0_i32_0 = arith.constant 0 : i32
    %c0_i32_1 = arith.constant 0 : i32
    return %arg0, %c0_i32, %c0_i32_0 : i32, i32, i32
  }
}

module attributes {stable_mosaic.version = 11 : i64} {
  func.func @_matmul_bias_kernel(%arg0: i32, %arg1: i32, %arg2: i32, %arg3: memref<16x32xf32, #tpu.memory_space<vmem>>, %arg4: memref<32x48xf32, #tpu.memory_space<vmem>>, %arg5: memref<1x48xf32, #tpu.memory_space<vmem>>, %arg6: memref<16x48xf32, #tpu.memory_space<vmem>>, %arg7: memref<16x48xf32, #tpu.memory_space<vmem>>) attributes {dimension_semantics = [#tpu.dimension_semantics<parallel>, #tpu.dimension_semantics<parallel>, #tpu.dimension_semantics<arbitrary>], iteration_bounds = array<i64: 1, 1, 1>, scalar_prefetch = 0 : i64, scratch_operands = 1 : i64, tpu.core_type = #tpu.core_type<tc>, window_params = [{transform_indices = @transform_0, window_bounds = array<i64: 16, 32>}, {transform_indices = @transform_1, window_bounds = array<i64: 32, 48>}, {transform_indices = @transform_2, window_bounds = array<i64: 1, 48>}, {transform_indices = @transform_3, window_bounds = array<i64: 16, 48>}]} {
    %c0_i32 = arith.constant 0 : i32
    %0 = arith.cmpi eq, %arg2, %c0_i32 : i32
    %1 = arith.extui %0 : i1 to i32
    %c0_i32_0 = arith.constant 0 : i32
    %2 = arith.cmpi ne, %1, %c0_i32_0 : i32
    scf.if %2 {
      %cst_10 = arith.constant 0.000000e+00 : f32
      %14 = vector.broadcast %cst_10 : f32 to vector<16x48xf32>
      %c0_11 = arith.constant 0 : index
      %c0_12 = arith.constant 0 : index
      %15 = vector.load %arg7[%c0_11, %c0_12] : memref<16x48xf32, #tpu.memory_space<vmem>>, vector<16x48xf32>
      tpu.vector_store %arg7[%c0_11, %c0_12], %14 {strides = array<i32>} : memref<16x48xf32, #tpu.memory_space<vmem>>, vector<16x48xf32>,
    } else {
    }
    %c0 = arith.constant 0 : index
    %c0_1 = arith.constant 0 : index
    %3 = vector.load %arg7[%c0, %c0_1] : memref<16x48xf32, #tpu.memory_space<vmem>>, vector<16x48xf32>
    %c0_2 = arith.constant 0 : index
    %c0_3 = arith.constant 0 : index
    %4 = vector.load %arg3[%c0_2, %c0_3] : memref<16x32xf32, #tpu.memory_space<vmem>>, vector<16x32xf32>
    %c0_4 = arith.constant 0 : index
    %c0_5 = arith.constant 0 : index
    %5 = vector.load %arg4[%c0_4, %c0_5] : memref<32x48xf32, #tpu.memory_space<vmem>>, vector<32x48xf32>
    %6 = arith.truncf %4 : vector<16x32xf32> to vector<16x32xbf16>
    %7 = arith.truncf %5 : vector<32x48xf32> to vector<32x48xbf16>
    %cst = arith.constant dense<0.000000e+00> : vector<16x48xf32>
    %8 = tpu.matmul %6, %7, %cst {dimension_numbers = #tpu.dot_dimension_numbers<[1], [0], [0], [1], [0, 0, 1, 1], [], []>} : vector<16x32xbf16>, vector<32x48xbf16>, vector<16x48xf32> -> vector<16x48xf32>
    %9 = arith.addf %3, %8 : vector<16x48xf32>
    %c0_6 = arith.constant 0 : index
    %c0_7 = arith.constant 0 : index
    %10 = vector.load %arg7[%c0_6, %c0_7] : memref<16x48xf32, #tpu.memory_space<vmem>>, vector<16x48xf32>
    tpu.vector_store %arg7[%c0_6, %c0_7], %9 {strides = array<i32>} : memref<16x48xf32, #tpu.memory_space<vmem>>, vector<16x48xf32>,
    %c0_i32_8 = arith.constant 0 : i32
    %11 = arith.cmpi eq, %arg2, %c0_i32_8 : i32
    %12 = arith.extui %11 : i1 to i32
    %c0_i32_9 = arith.constant 0 : i32
    %13 = arith.cmpi ne, %12, %c0_i32_9 : i32
    scf.if %13 {
      %c0_10 = arith.constant 0 : index
      %c0_11 = arith.constant 0 : index
      %14 = vector.load %arg7[%c0_10, %c0_11] : memref<16x48xf32, #tpu.memory_space<vmem>>, vector<16x48xf32>
      %c0_12 = arith.constant 0 : index
      %c0_13 = arith.constant 0 : index
      %15 = vector.load %arg5[%c0_12, %c0_13] : memref<1x48xf32, #tpu.memory_space<vmem>>, vector<1x48xf32>
      %16 = vector.broadcast %15 : vector<1x48xf32> to vector<16x48xf32>
      %17 = arith.addf %14, %16 : vector<16x48xf32>
      %c0_14 = arith.constant 0 : index
      %c0_15 = arith.constant 0 : index
      %18 = vector.load %arg6[%c0_14, %c0_15] : memref<16x48xf32, #tpu.memory_space<vmem>>, vector<16x48xf32>
      tpu.vector_store %arg6[%c0_14, %c0_15], %17 {strides = array<i32>} : memref<16x48xf32, #tpu.memory_space<vmem>>, vector<16x48xf32>,
    } else {
    }
    return
  }
  func.func @transform_0(%arg0: i32, %arg1: i32, %arg2: i32) -> (i32, i32) {
    %c0_i32 = arith.constant 0 : i32
    return %arg0, %arg2 : i32, i32
  }
  func.func @transform_1(%arg0: i32, %arg1: i32, %arg2: i32) -> (i32, i32) {
    %c0_i32 = arith.constant 0 : i32
    return %arg2, %arg1 : i32, i32
  }
  func.func @transform_2(%arg0: i32, %arg1: i32, %arg2: i32) -> (i32, i32) {
    %c0_i32 = arith.constant 0 : i32
    %c0_i32_0 = arith.constant 0 : i32
    return %c0_i32, %arg1 : i32, i32
  }
  func.func @transform_3(%arg0: i32, %arg1: i32, %arg2: i32) -> (i32, i32) {
    %c0_i32 = arith.constant 0 : i32
    return %arg0, %arg1 : i32, i32
  }
}

</mosaic_0001>

<llo_original>
// kernel: transformer_forward.12
$region0: #{transformer_forward.12}
  #allocation0 [shape = 'u32[]', space=smem, size = 0x4, offset = 0x4, fixed_abs, tag = 'smem constant byte address 0x4 - core index']
  #allocation1 [shape = 'u32[144,128]{1,0:T(1,128)}', space=vmem, size = 0x12000, scoped, tag = 'internal scratch']
  %s0 = inlined_call_operand.vmem [shape: f32[2,8,32], index: 0, kind: input, shape index: {}]
  %s1 = inlined_call_operand.vmem [shape: f32[32,128], index: 1, kind: input, shape index: {}]
  %s2 = inlined_call_operand.vmem [shape: f32[1,128], index: 2, kind: input, shape index: {}]
  %s3 = inlined_call_operand.vmem [shape: f32[128,32], index: 3, kind: input, shape index: {}]
  %s4 = inlined_call_operand.vmem [shape: f32[1,32], index: 4, kind: input, shape index: {}]
  %s5 = inlined_call_operand.vmem [shape: f32[1,32], index: 5, kind: input, shape index: {}]
  %s6 = inlined_call_operand.vmem [shape: f32[1,32], index: 6, kind: input, shape index: {}]
  %s7 = inlined_call_operand.vmem [shape: f32[2,8,32], index: 7, kind: output, shape index: {}]
  %s8 = sld [smem:[#allocation0]]
  $region61: #{transformer_forward.12} parent=0
    _
  %s10 = ssub.s32 1, %s8
  %s11 = scalar_select 0, %s10, %s8
  loop: start=0, step=1, limit=4
  $region2: #{transformer_forward.12} parent=0 // loop_pre_header
    _
  $region3: #{transformer_forward.12} parent=0 // loop_header
    %s13 = sphi 0, %s17
    %p14 = scmp.ge.s32.totalorder %s13, 4
    %s23 = sphi 0, %s25
    %s26 = sphi 0, %s23
    %s27 = sphi 0, %s26
    %s43 = sphi 0, %s27
    %s47 = sphi 0, %s47
    %s49 = sphi 0, %s47
    %s50 = sphi 0, %s49
    %s64 = sphi 0, %s50
    %s68 = sphi 0, %s68
    %s70 = sphi 0, %s68
    %s71 = sphi 0, %s70
    %s85 = sphi 0, %s71
    %s89 = sphi 0, %s89
    %s91 = sphi 0, %s89
    %s92 = sphi 0, %s91
    %s106 = sphi 0, %s92
    %s110 = sphi 0, %s110
    %s112 = sphi 0, %s110
    %s113 = sphi 0, %s112
    %s127 = sphi 0, %s113
    %s131 = sphi 0, %s131
    %s133 = sphi 0, %s131
    %s134 = sphi 0, %s133
    %s148 = sphi 0, %s134
    %s152 = sphi 0, %s152
    %s154 = sphi 0, %s152
    %s155 = sphi 0, %s154
    %s169 = sphi 0, %s155
    %s175 = sphi 0, %s177
    %s178 = sphi 0, %s175
    %s179 = sphi 0, %s178
    %s195 = sphi 0, %s179
  $region4: #{transformer_forward.12} parent=0 // loop_header_branch
    %16 = sbr.rel (%p14) target = $region8
  $region5: #{transformer_forward.12} parent=0 // loop_body
    %s18 = ssub.s32 %s13, 1
    %s19 = ssub.s32 %s13, 2
    %s20 = sadd.s32 %s13, 1
    %s21 = ssub.s32 %s13, %s20
    %p22 = scmp.eq.s32.totalorder %s21, 0
    %s24 = sadd.s32 %s23, 1
    %s25 = scalar_select %p22, %s23, %s24
    %p28 = pneg %p22
    %p29 = scmp.eq.s32.totalorder %s13, 1
    %p30 = por %p28, %p29
    %p31 = scmp.ne.s32.totalorder %s23, %s26
    %p32 = scmp.eq.s32.totalorder %s13, 0
    %p33 = por %p31, %p32
    %p34 = scmp.ne.s32.totalorder %s23, %s26
    %p35 = scmp.eq.s32.totalorder %s18, 1
    %p36 = por %p34, %p35
    %p37 = scmp.ne.s32.totalorder %s26, %s27
    %p38 = scmp.eq.s32.totalorder %s18, 0
    %p39 = por %p37, %p38
    %p40 = scmp.ne.s32.totalorder %s26, %s27
    %p41 = scmp.eq.s32.totalorder %s19, 1
    %p42 = por %p40, %p41
    %p44 = scmp.ne.s32.totalorder %s27, %s43
    %p45 = scmp.eq.s32.totalorder %s19, 0
    %p46 = por %p44, %p45
    %s48 = sadd.s32 %s47, 1
    %p51 = scmp.eq.s32.totalorder %s13, 1
    %p52 = scmp.ne.s32.totalorder %s47, %s49
    %p53 = scmp.eq.s32.totalorder %s13, 0
    %p54 = por %p52, %p53
    %p55 = scmp.ne.s32.totalorder %s47, %s49
    %p56 = scmp.eq.s32.totalorder %s18, 1
    %p57 = por %p55, %p56
    %p58 = scmp.ne.s32.totalorder %s49, %s50
    %p59 = scmp.eq.s32.totalorder %s18, 0
    %p60 = por %p58, %p59
    %p61 = scmp.ne.s32.totalorder %s49, %s50
    %p62 = scmp.eq.s32.totalorder %s19, 1
    %p63 = por %p61, %p62
    %p65 = scmp.ne.s32.totalorder %s50, %s64
    %p66 = scmp.eq.s32.totalorder %s19, 0
    %p67 = por %p65, %p66
    %s69 = sadd.s32 %s68, 1
    %p72 = scmp.eq.s32.totalorder %s13, 1
    %p73 = scmp.ne.s32.totalorder %s68, %s70
    %p74 = scmp.eq.s32.totalorder %s13, 0
    %p75 = por %p73, %p74
    %p76 = scmp.ne.s32.totalorder %s68, %s70
    %p77 = scmp.eq.s32.totalorder %s18, 1
    %p78 = por %p76, %p77
    %p79 = scmp.ne.s32.totalorder %s70, %s71
    %p80 = scmp.eq.s32.totalorder %s18, 0
    %p81 = por %p79, %p80
    %p82 = scmp.ne.s32.totalorder %s70, %s71
    %p83 = scmp.eq.s32.totalorder %s19, 1
    %p84 = por %p82, %p83
    %p86 = scmp.ne.s32.totalorder %s71, %s85
    %p87 = scmp.eq.s32.totalorder %s19, 0
    %p88 = por %p86, %p87
    %s90 = sadd.s32 %s89, 1
    %p93 = scmp.eq.s32.totalorder %s13, 1
    %p94 = scmp.ne.s32.totalorder %s89, %s91
    %p95 = scmp.eq.s32.totalorder %s13, 0
    %p96 = por %p94, %p95
    %p97 = scmp.ne.s32.totalorder %s89, %s91
    %p98 = scmp.eq.s32.totalorder %s18, 1
    %p99 = por %p97, %p98
    %p100 = scmp.ne.s32.totalorder %s91, %s92
    %p101 = scmp.eq.s32.totalorder %s18, 0
    %p102 = por %p100, %p101
    %p103 = scmp.ne.s32.totalorder %s91, %s92
    %p104 = scmp.eq.s32.totalorder %s19, 1
    %p105 = por %p103, %p104
    %p107 = scmp.ne.s32.totalorder %s92, %s106
    %p108 = scmp.eq.s32.totalorder %s19, 0
    %p109 = por %p107, %p108
    %s111 = sadd.s32 %s110, 1
    %p114 = scmp.eq.s32.totalorder %s13, 1
    %p115 = scmp.ne.s32.totalorder %s110, %s112
    %p116 = scmp.eq.s32.totalorder %s13, 0
    %p117 = por %p115, %p116
    %p118 = scmp.ne.s32.totalorder %s110, %s112
    %p119 = scmp.eq.s32.totalorder %s18, 1
    %p120 = por %p118, %p119
    %p121 = scmp.ne.s32.totalorder %s112, %s113
    %p122 = scmp.eq.s32.totalorder %s18, 0
    %p123 = por %p121, %p122
    %p124 = scmp.ne.s32.totalorder %s112, %s113
    %p125 = scmp.eq.s32.totalorder %s19, 1
    %p126 = por %p124, %p125
    %p128 = scmp.ne.s32.totalorder %s113, %s127
    %p129 = scmp.eq.s32.totalorder %s19, 0
    %p130 = por %p128, %p129
    %s132 = sadd.s32 %s131, 1
    %p135 = scmp.eq.s32.totalorder %s13, 1
    %p136 = scmp.ne.s32.totalorder %s131, %s133
    %p137 = scmp.eq.s32.totalorder %s13, 0
    %p138 = por %p136, %p137
    %p139 = scmp.ne.s32.totalorder %s131, %s133
    %p140 = scmp.eq.s32.totalorder %s18, 1
    %p141 = por %p139, %p140
    %p142 = scmp.ne.s32.totalorder %s133, %s134
    %p143 = scmp.eq.s32.totalorder %s18, 0
    %p144 = por %p142, %p143
    %p145 = scmp.ne.s32.totalorder %s133, %s134
    %p146 = scmp.eq.s32.totalorder %s19, 1
    %p147 = por %p145, %p146
    %p149 = scmp.ne.s32.totalorder %s134, %s148
    %p150 = scmp.eq.s32.totalorder %s19, 0
    %p151 = por %p149, %p150
    %s153 = sadd.s32 %s152, 1
    %p156 = scmp.eq.s32.totalorder %s13, 1
    %p157 = scmp.ne.s32.totalorder %s152, %s154
    %p158 = scmp.eq.s32.totalorder %s13, 0
    %p159 = por %p157, %p158
    %p160 = scmp.ne.s32.totalorder %s152, %s154
    %p161 = scmp.eq.s32.totalorder %s18, 1
    %p162 = por %p160, %p161
    %p163 = scmp.ne.s32.totalorder %s154, %s155
    %p164 = scmp.eq.s32.totalorder %s18, 0
    %p165 = por %p163, %p164
    %p166 = scmp.ne.s32.totalorder %s154, %s155
    %p167 = scmp.eq.s32.totalorder %s19, 1
    %p168 = por %p166, %p167
    %p170 = scmp.ne.s32.totalorder %s155, %s169
    %p171 = scmp.eq.s32.totalorder %s19, 0
    %p172 = por %p170, %p171
    %s173 = ssub.s32 %s13, %s20
    %p174 = scmp.eq.s32.totalorder %s173, 0
    %s176 = sadd.s32 %s175, 1
    %s177 = scalar_select %p174, %s175, %s176
    %p180 = pneg %p174
    %p181 = scmp.eq.s32.totalorder %s13, 1
    %p182 = por %p180, %p181
    %p183 = scmp.ne.s32.totalorder %s175, %s178
    %p184 = scmp.eq.s32.totalorder %s13, 0
    %p185 = por %p183, %p184
    %p186 = scmp.ne.s32.totalorder %s175, %s178
    %p187 = scmp.eq.s32.totalorder %s18, 1
    %p188 = por %p186, %p187
    %p189 = scmp.ne.s32.totalorder %s178, %s179
    %p190 = scmp.eq.s32.totalorder %s18, 0
    %p191 = por %p189, %p190
    %p192 = scmp.ne.s32.totalorder %s178, %s179
    %p193 = scmp.eq.s32.totalorder %s19, 1
    %p194 = por %p192, %p193
    %p196 = scmp.ne.s32.totalorder %s179, %s195
    %p197 = scmp.eq.s32.totalorder %s19, 0
    %p198 = por %p196, %p197
    %p199 = scmp.le.s32.totalorder 1, %s13
    %p200 = scmp.lt.s32.totalorder %s13, 3
    %p201 = pnand %p199, %p200
    %p202 = pneg %p201
    // Predicated region
    $region9: #{transformer_forward.12} parent=5 // pred_check
      _
    $region10: #{transformer_forward.12} parent=5 // pred_check_branch
      %204 = sbr.rel (%p201) target = $region12
    $region11: #{transformer_forward.12} parent=5 // pred_region
      %s205 = ssub.s32 %s13, 1
      // Predicated region
      $region13: #{transformer_forward.12} parent=11 // pred_check
        %p206 = pneg %p60
      $region14: #{transformer_forward.12} parent=11 // pred_check_branch
        %208 = sbr.rel (%p206) target = $region16
      $region15: #{transformer_forward.12} parent=11 // pred_region
        _
      $region16: #{transformer_forward.12} parent=11 // pred_fallthru
        _
      // Predicated region
      $region17: #{transformer_forward.12} parent=11 // pred_check
        %p209 = pneg %p81
      $region18: #{transformer_forward.12} parent=11 // pred_check_branch
        %211 = sbr.rel (%p209) target = $region20
      $region19: #{transformer_forward.12} parent=11 // pred_region
        _
      $region20: #{transformer_forward.12} parent=11 // pred_fallthru
        _
      // Predicated region
      $region21: #{transformer_forward.12} parent=11 // pred_check
        %p212 = pneg %p102
      $region22: #{transformer_forward.12} parent=11 // pred_check_branch
        %214 = sbr.rel (%p212) target = $region24
      $region23: #{transformer_forward.12} parent=11 // pred_region
        _
      $region24: #{transformer_forward.12} parent=11 // pred_fallthru
        _
      // Predicated region
      $region25: #{transformer_forward.12} parent=11 // pred_check
        %p215 = pneg %p123
      $region26: #{transformer_forward.12} parent=11 // pred_check_branch
        %217 = sbr.rel (%p215) target = $region28
      $region27: #{transformer_forward.12} parent=11 // pred_region
        _
      $region28: #{transformer_forward.12} parent=11 // pred_fallthru
        _
      // Predicated region
      $region29: #{transformer_forward.12} parent=11 // pred_check
        %p218 = pneg %p144
      $region30: #{transformer_forward.12} parent=11 // pred_check_branch
        %220 = sbr.rel (%p218) target = $region32
      $region31: #{transformer_forward.12} parent=11 // pred_region
        _
      $region32: #{transformer_forward.12} parent=11 // pred_fallthru
        _
      // Predicated region
      $region33: #{transformer_forward.12} parent=11 // pred_check
        %p221 = pneg %p165
      $region34: #{transformer_forward.12} parent=11 // pred_check_branch
        %223 = sbr.rel (%p221) target = $region36
      $region35: #{transformer_forward.12} parent=11 // pred_region
        _
      $region36: #{transformer_forward.12} parent=11 // pred_fallthru
        _
    $region12: #{transformer_forward.12} parent=5 // pred_fallthru
      _
    %p224 = scmp.lt.s32.totalorder %s13, 2
    // Predicated region
    $region37: #{transformer_forward.12} parent=5 // pred_check
      %p225 = pneg %p224
    $region38: #{transformer_forward.12} parent=5 // pred_check_branch
      %227 = sbr.rel (%p225) target = $region40
    $region39: #{transformer_forward.12} parent=5 // pred_region
      // Predicated region
      $region41: #{transformer_forward.12} parent=39 // pred_check
        %p228 = pneg %p33
      $region42: #{transformer_forward.12} parent=39 // pred_check_branch
        %230 = sbr.rel (%p228) target = $region44
      $region43: #{transformer_forward.12} parent=39 // pred_region
        %p231 = scmp.lt.s32.totalorder %s13, 1
        %s232 = scalar_select %p231, %s13, 1
        %s233 = smul.addr %s232, 8
        %s234 = scalar_lea.vmem %s0, %s233
      $region44: #{transformer_forward.12} parent=39 // pred_fallthru
        _
    $region40: #{transformer_forward.12} parent=5 // pred_fallthru
      _
    %p235 = scmp.le.s32.totalorder 1, %s13
    %p236 = scmp.lt.s32.totalorder %s13, 3
    %p237 = pnand %p235, %p236
    %p238 = pneg %p237
    // Predicated region
    $region45: #{transformer_forward.12} parent=5 // pred_check
      _
    $region46: #{transformer_forward.12} parent=5 // pred_check_branch
      %240 = sbr.rel (%p237) target = $region48
    $region47: #{transformer_forward.12} parent=5 // pred_region
      %s241 = ssub.s32 %s13, 1
      %p242 = scmp.lt.s32.totalorder %s18, 1
      %s243 = scalar_select %p242, %s18, 1
      %s244 = smul.addr %s243, 8
      %s245 = scalar_lea.vmem %s0, %s244
      %p246 = pneg %p39
      %p247 = pneg %p36
      %p248 = pneg %p60
      %p249 = pneg %p57
      %p250 = pneg %p81
      %p251 = pneg %p78
      %p252 = pneg %p102
      %p253 = pneg %p99
      %p254 = pneg %p123
      %p255 = pneg %p120
      %p256 = pneg %p144
      %p257 = pneg %p141
      %p258 = pneg %p165
      %p259 = pneg %p162
      %p260 = pneg %p191
      %p261 = pneg %p188
      %p262 = scmp.lt.s32.totalorder %s18, 1
      %s263 = scalar_select %p262, %s18, 1
      %s264 = smul.addr %s263, 8
      %s265 = scalar_lea.vmem %s7, %s264
      %p266 = scmp.lt.s32.totalorder %s18, 1
      %s267 = scalar_select %p266, %s18, 1
      %s268 = smul.addr %s267, 8
      %s269 = scalar_lea.vmem %s0, %s268
      %p270 = scmp.lt.s32.totalorder %s18, 1
      %s271 = scalar_select %p270, %s18, 1
      %s272 = smul.addr %s271, 8
      %s273 = scalar_lea.vmem %s7, %s272
      %v275 = vld [vmem:[%s269] sm:$0xff]
      %v276 = vld [vmem:[%s1] sm:$0xff]
      %v277 = vld [vmem:[%s1 + $0x8] sm:$0xff]
      %v278 = vld [vmem:[%s1 + $0x10] sm:$0xff]
      %v279 = vld [vmem:[%s1 + $0x18] sm:$0xff]
      %v280 = vpack.c.bf16 %v275, %v275
      %v281 = vpack.c.bf16 %v277, %v276
      %v282 = vpack.c.bf16 %v279, %v278
      %v283 = vld [vmem:[%s2] sm:$0x1]
      %v285 = vlaneseq
      %v286 = vshrl.u32 %v285, 7
      %v287 = vsub.s32 0, %v286
      %v288 = vrot.slane %v283, %v287
      %vm290 = vcmask 261120
      %v292 = vsel %vm290, %v280, 0
      %294 = vmatprep.subr.bf16.mxu0 0
      %295 = vmatpush1.bf16.msra.mxu0 %v281
      %296 = vmatprep.subr.bf16.mxu0 0
      %297 = vmatpush1.bf16.msra.mxu0 %v282
      %298 = vmatprep.subr.bf16.mxu0 0
      %299 = vmatpush1.bf16.msra.mxu0 0
      %300 = vmatprep.subr.bf16.mxu0 0
      %301 = vmatpush1.bf16.msra.mxu0 0
      %302 = vmatprep.subr.bf16.mxu0 0
      %303 = vmatpush1.bf16.msra.mxu0 0
      %304 = vmatprep.subr.bf16.mxu0 0
      %305 = vmatpush1.bf16.msra.mxu0 0
      %306 = vmatprep.subr.bf16.mxu0 0
      %307 = vmatpush1.bf16.msra.mxu0 0
      %308 = vmatprep.subr.bf16.mxu0 0
      %309 = vmatpush1.bf16.msra.mxu0 0
      %310 = vmatprep.subr.bf16.mxu0 0
      %311 = vmatpush1.bf16.msra.mxu0 0
      %312 = vmatprep.subr.bf16.mxu0 0
      %313 = vmatpush1.bf16.msra.mxu0 0
      %314 = vmatprep.subr.bf16.mxu0 0
      %315 = vmatpush1.bf16.msra.mxu0 0
      %316 = vmatprep.subr.bf16.mxu0 0
      %317 = vmatpush1.bf16.msra.mxu0 0
      %318 = vmatprep.subr.bf16.mxu0 0
      %319 = vmatpush1.bf16.msra.mxu0 0
      %320 = vmatprep.subr.bf16.mxu0 0
      %321 = vmatpush1.bf16.msra.mxu0 0
      %322 = vmatprep.subr.bf16.mxu0 0
      %323 = vmatpush1.bf16.msra.mxu0 0
      %324 = vmatprep.subr.bf16.mxu0 0
      %325 = vmatpush1.bf16.msra.mxu0 0
      %326 = vmatprep.mubr.bf16.mxu0 0
      %327 = vmatmul.mubr.bf16.gmra.mrb[0].mxu0 %v292
      %v328 = vpop.f32.mrb[0].mxu0
      %v329 = vadd.f32 %v288, %v328
      %v330 = vpop.f32.mrb[0].mxu0
      %v331 = vpop.f32.mrb[0].mxu0
      %v332 = vpop.f32.mrb[0].mxu0
      %333 = vdwg.mxu0
      %v334 = vmax.f32 %v329, 0.0
      %v335 = vld [vmem:[%s3] sm:$0xff]
      %v336 = vld [vmem:[%s3 + $0x8] sm:$0xff]
      %v337 = vld [vmem:[%s3 + $0x10] sm:$0xff]
      %v338 = vld [vmem:[%s3 + $0x18] sm:$0xff]
      %v339 = vld [vmem:[%s3 + $0x20] sm:$0xff]
      %v340 = vld [vmem:[%s3 + $0x28] sm:$0xff]
      %v341 = vld [vmem:[%s3 + $0x30] sm:$0xff]
      %v342 = vld [vmem:[%s3 + $0x38] sm:$0xff]
      %v343 = vld [vmem:[%s3 + $0x40] sm:$0xff]
      %v344 = vld [vmem:[%s3 + $0x48] sm:$0xff]
      %v345 = vld [vmem:[%s3 + $0x50] sm:$0xff]
      %v346 = vld [vmem:[%s3 + $0x58] sm:$0xff]
      %v347 = vld [vmem:[%s3 + $0x60] sm:$0xff]
      %v348 = vld [vmem:[%s3 + $0x68] sm:$0xff]
      %v349 = vld [vmem:[%s3 + $0x70] sm:$0xff]
      %v350 = vld [vmem:[%s3 + $0x78] sm:$0xff]
      %v351 = vpack.c.bf16 %v334, %v334
      %v352 = vpack.c.bf16 %v336, %v335
      %v353 = vpack.c.bf16 %v338, %v337
      %v354 = vpack.c.bf16 %v340, %v339
      %v355 = vpack.c.bf16 %v342, %v341
      %v356 = vpack.c.bf16 %v344, %v343
      %v357 = vpack.c.bf16 %v346, %v345
      %v358 = vpack.c.bf16 %v348, %v347
      %v359 = vpack.c.bf16 %v350, %v349
      %360 = vmatprep.subr.bf16.mxu0 0
      %361 = vmatpush1.bf16.msra.mxu0 %v352
      %362 = vmatprep.subr.bf16.mxu0 0
      %363 = vmatpush1.bf16.msra.mxu0 %v353
      %364 = vmatprep.subr.bf16.mxu0 0
      %365 = vmatpush1.bf16.msra.mxu0 %v354
      %366 = vmatprep.subr.bf16.mxu0 0
      %367 = vmatpush1.bf16.msra.mxu0 %v355
      %368 = vmatprep.subr.bf16.mxu0 0
      %369 = vmatpush1.bf16.msra.mxu0 %v356
      %370 = vmatprep.subr.bf16.mxu0 0
      %371 = vmatpush1.bf16.msra.mxu0 %v357
      %372 = vmatprep.subr.bf16.mxu0 0
      %373 = vmatpush1.bf16.msra.mxu0 %v358
      %374 = vmatprep.subr.bf16.mxu0 0
      %375 = vmatpush1.bf16.msra.mxu0 %v359
      %376 = vmatprep.subr.bf16.mxu0 0
      %377 = vmatpush1.bf16.msra.mxu0 0
      %378 = vmatprep.subr.bf16.mxu0 0
      %379 = vmatpush1.bf16.msra.mxu0 0
      %380 = vmatprep.subr.bf16.mxu0 0
      %381 = vmatpush1.bf16.msra.mxu0 0
      %382 = vmatprep.subr.bf16.mxu0 0
      %383 = vmatpush1.bf16.msra.mxu0 0
      %384 = vmatprep.subr.bf16.mxu0 0
      %385 = vmatpush1.bf16.msra.mxu0 0
      %386 = vmatprep.subr.bf16.mxu0 0
      %387 = vmatpush1.bf16.msra.mxu0 0
      %388 = vmatprep.subr.bf16.mxu0 0
      %389 = vmatpush1.bf16.msra.mxu0 0
      %390 = vmatprep.subr.bf16.mxu0 0
      %391 = vmatpush1.bf16.msra.mxu0 0
      %392 = vmatprep.mubr.bf16.mxu0 0
      %393 = vmatmul.mubr.bf16.gmra.mrb[0].mxu0 %v351
      %v394 = vpop.f32.mrb[0].mxu0
      %v395 = vadd.f32 0.0, %v394
      %v396 = vpop.f32.mrb[0].mxu0
      %v397 = vpop.f32.mrb[0].mxu0
      %v398 = vpop.f32.mrb[0].mxu0
      %399 = vdwg.mxu0
      %v400 = vadd.f32 %v275, %v395
      %v401 = vld [vmem:[%s4] sm:$0x1]
      %v403 = vlaneseq
      %v404 = vshrl.u32 %v403, 7
      %v405 = vsub.s32 0, %v404
      %v406 = vrot.slane %v401, %v405
      %v408 = vadd.f32 %v400, %v406
      %v409 = vld [vmem:[%s5] sm:$0x1]
      %v410 = vld [vmem:[%s6] sm:$0x1]
      %v411 = vsel %vm290, %v408, 0.0
      %412 = vadd.xlane.f32.xlu0 %v411
      %v413 = vpop.xlane.xlu0 %412
      %v414 = vrcp.pop 32.0
      %v415 = vmul.f32 %v413, %v414
      %v416 = vsub.f32 %v408, %v415
      %v417 = vmul.f32 %v416, %v416
      %v418 = vsel %vm290, %v417, 0.0
      %419 = vadd.xlane.f32.xlu0 %v418
      %v420 = vpop.xlane.xlu0 %419
      %v421 = vmul.f32 %v420, %v414
      %v422 = vadd.f32 %v421, 1e-05
      %v423 = vrsqrt.pop %v422
      %v424 = vmul.f32 %v416, %v423
      %v426 = vlaneseq
      %v427 = vshrl.u32 %v426, 7
      %v428 = vsub.s32 0, %v427
      %v429 = vrot.slane %v409, %v428
      %v431 = vmul.f32 %v424, %v429
      %v433 = vlaneseq
      %v434 = vshrl.u32 %v433, 7
      %v435 = vsub.s32 0, %v434
      %v436 = vrot.slane %v410, %v435
      %v438 = vadd.f32 %v431, %v436
      %439 = vst.msk [vmem:[%s273] sm:$0xff] %vm290, %v438
      %p440 = scmp.lt.s32.totalorder %s18, 1
      %s441 = scalar_select %p440, %s18, 1
      %s442 = smul.addr %s441, 8
      %s443 = scalar_lea.vmem %s7, %s442
      // Predicated region
      $region49: #{transformer_forward.12} parent=47 // pred_check
        %p444 = pneg %p188
      $region50: #{transformer_forward.12} parent=47 // pred_check_branch
        %446 = sbr.rel (%p444) target = $region52
      $region51: #{transformer_forward.12} parent=47 // pred_region
        _
      $region52: #{transformer_forward.12} parent=47 // pred_fallthru
        _
    $region48: #{transformer_forward.12} parent=5 // pred_fallthru
      _
    %p447 = scmp.le.s32.totalorder 2, %s13
    // Predicated region
    $region53: #{transformer_forward.12} parent=5 // pred_check
      %p448 = pneg %p447
    $region54: #{transformer_forward.12} parent=5 // pred_check_branch
      %450 = sbr.rel (%p448) target = $region56
    $region55: #{transformer_forward.12} parent=5 // pred_region
      %s451 = ssub.s32 %s13, 2
      // Predicated region
      $region57: #{transformer_forward.12} parent=55 // pred_check
        %p452 = pneg %p194
      $region58: #{transformer_forward.12} parent=55 // pred_check_branch
        %454 = sbr.rel (%p452) target = $region60
      $region59: #{transformer_forward.12} parent=55 // pred_region
        %p455 = scmp.lt.s32.totalorder %s19, 1
        %s456 = scalar_select %p455, %s19, 1
        %s457 = smul.addr %s456, 8
        %s458 = scalar_lea.vmem %s7, %s457
      $region60: #{transformer_forward.12} parent=55 // pred_fallthru
        _
    $region56: #{transformer_forward.12} parent=5 // pred_fallthru
      _
  $region6: #{transformer_forward.12} parent=0 // loop_footer
    %s17 = sadd.s32 1, %s13
  $region7: #{transformer_forward.12} parent=0 // loop_footer_branch
    %12 = sbr.rel target = $region3
  $region8: #{transformer_forward.12} parent=0 // loop_exit
    _

// kernel: transformer_forward.21
$region0: #{transformer_forward.21}
  #allocation0 [shape = 'u32[]', space=smem, size = 0x4, offset = 0x4, fixed_abs, tag = 'smem constant byte address 0x4 - core index']
  #allocation1 [shape = 'u32[144,128]{1,0:T(1,128)}', space=vmem, size = 0x12000, scoped, tag = 'internal scratch']
  #allocation2 [shape = 'f32[16,48]{1,0:T(8,128)}', space=vmem, size = 0x2000, scoped, tag = 'scratch operand']
  %s0 = inlined_call_operand.vmem [shape: f32[16,32], index: 0, kind: input, shape index: {}]
  %s1 = inlined_call_operand.vmem [shape: f32[32,48], index: 1, kind: input, shape index: {}]
  %s2 = inlined_call_operand.vmem [shape: f32[1,48], index: 2, kind: input, shape index: {}]
  %s3 = inlined_call_operand.hbm [shape: f32[16,48], index: 3, kind: output, shape index: {}]
  %s4 = sld [smem:[#allocation0]]
  $region30: #{transformer_forward.21} parent=0
    _
  %s6 = ssub.s32 1, %s4
  %s7 = scalar_select 0, %s6, %s4
  $region1: #{transformer_forward.21} parent=0
    #allocation3 [shape = 'u8[8192]{0}', space=vmem, size = 0x2000, scoped, tag = 'output window, operand 0, single buffered']
    #allocation4 [shape = 's32[1]{0}', space=sflag, size = 0x4, scoped, tag = 'scoped memory for transformer_forward.21']
    %8 = vsyncpa [#allocation4], 0
    // Predicated region
    $region2: #{transformer_forward.21} parent=1 // pred_check
      _
    $region3: #{transformer_forward.21} parent=1 // pred_check_branch
      %10 = sbr.rel (0) target = $region5
    $region4: #{transformer_forward.21} parent=1 // pred_region
      _
    $region5: #{transformer_forward.21} parent=1 // pred_fallthru
      _
    // Predicated region
    $region6: #{transformer_forward.21} parent=1 // pred_check
      _
    $region7: #{transformer_forward.21} parent=1 // pred_check_branch
      %12 = sbr.rel (0) target = $region9
    $region8: #{transformer_forward.21} parent=1 // pred_region
      _
    $region9: #{transformer_forward.21} parent=1 // pred_fallthru
      _
    // Predicated region
    $region10: #{transformer_forward.21} parent=1 // pred_check
      _
    $region11: #{transformer_forward.21} parent=1 // pred_check_branch
      %14 = sbr.rel (0) target = $region13
    $region12: #{transformer_forward.21} parent=1 // pred_region
      _
    $region13: #{transformer_forward.21} parent=1 // pred_fallthru
      _
    %p16 = scmp.eq.s32.totalorder 0, 0
    // Predicated region
    $region14: #{transformer_forward.21} parent=1 // pred_check
      %p17 = pneg %p16
    $region15: #{transformer_forward.21} parent=1 // pred_check_branch
      %19 = sbr.rel (%p17) target = $region17
    $region16: #{transformer_forward.21} parent=1 // pred_region
      %vm20 = vcmask 392192
      %21 = vst.msk [vmem:[#allocation2] sm:$0xff] %vm20, 0.0
      %22 = vst.msk [vmem:[#allocation2 + $0x8] sm:$0xff] %vm20, 0.0
    $region17: #{transformer_forward.21} parent=1 // pred_fallthru
      _
    %v23 = vld [vmem:[#allocation2] sm:$0xff]
    %v24 = vld [vmem:[#allocation2 + $0x8] sm:$0xff]
    %v25 = vld [vmem:[%s0] sm:$0xff]
    %v26 = vld [vmem:[%s0 + $0x8] sm:$0xff]
    %v27 = vld [vmem:[%s1] sm:$0xff]
    %v28 = vld [vmem:[%s1 + $0x8] sm:$0xff]
    %v29 = vld [vmem:[%s1 + $0x10] sm:$0xff]
    %v30 = vld [vmem:[%s1 + $0x18] sm:$0xff]
    %v31 = vpack.c.bf16 %v26, %v25
    %v32 = vpack.c.bf16 %v28, %v27
    %v33 = vpack.c.bf16 %v30, %v29
    %vm34 = vcmask 261120
    %v36 = vsel %vm34, %v31, 0
    %38 = vmatprep.subr.bf16.mxu0 0
    %39 = vmatpush1.bf16.msra.mxu0 %v32
    %40 = vmatprep.subr.bf16.mxu0 0
    %41 = vmatpush1.bf16.msra.mxu0 %v33
    %42 = vmatprep.subr.bf16.mxu0 0
    %43 = vmatpush1.bf16.msra.mxu0 0
    %44 = vmatprep.subr.bf16.mxu0 0
    %45 = vmatpush1.bf16.msra.mxu0 0
    %46 = vmatprep.subr.bf16.mxu0 0
    %47 = vmatpush1.bf16.msra.mxu0 0
    %48 = vmatprep.subr.bf16.mxu0 0
    %49 = vmatpush1.bf16.msra.mxu0 0
    %50 = vmatprep.subr.bf16.mxu0 0
    %51 = vmatpush1.bf16.msra.mxu0 0
    %52 = vmatprep.subr.bf16.mxu0 0
    %53 = vmatpush1.bf16.msra.mxu0 0
    %54 = vmatprep.subr.bf16.mxu0 0
    %55 = vmatpush1.bf16.msra.mxu0 0
    %56 = vmatprep.subr.bf16.mxu0 0
    %57 = vmatpush1.bf16.msra.mxu0 0
    %58 = vmatprep.subr.bf16.mxu0 0
    %59 = vmatpush1.bf16.msra.mxu0 0
    %60 = vmatprep.subr.bf16.mxu0 0
    %61 = vmatpush1.bf16.msra.mxu0 0
    %62 = vmatprep.subr.bf16.mxu0 0
    %63 = vmatpush1.bf16.msra.mxu0 0
    %64 = vmatprep.subr.bf16.mxu0 0
    %65 = vmatpush1.bf16.msra.mxu0 0
    %66 = vmatprep.subr.bf16.mxu0 0
    %67 = vmatpush1.bf16.msra.mxu0 0
    %68 = vmatprep.subr.bf16.mxu0 0
    %69 = vmatpush1.bf16.msra.mxu0 0
    %70 = vmatprep.mubr.bf16.mxu0 0
    %71 = vmatmul.mubr.bf16.gmra.mrb[0].mxu0 %v36
    %v72 = vpop.f32.mrb[0].mxu0
    %v73 = vadd.f32 0.0, %v72
    %v74 = vpop.f32.mrb[0].mxu0
    %v75 = vpop.f32.mrb[0].mxu0
    %v76 = vadd.f32 0.0, %v75
    %v77 = vpop.f32.mrb[0].mxu0
    %78 = vdwg.mxu0
    %v79 = vadd.f32 %v23, %v73
    %v80 = vadd.f32 %v24, %v76
    %vm81 = vcmask 392192
    %82 = vst.msk [vmem:[#allocation2] sm:$0xff] %vm81, %v79
    %83 = vst.msk [vmem:[#allocation2 + $0x8] sm:$0xff] %vm81, %v80
    // Predicated region
    $region18: #{transformer_forward.21} parent=1 // pred_check
      %p84 = pneg %p16
    $region19: #{transformer_forward.21} parent=1 // pred_check_branch
      %86 = sbr.rel (%p84) target = $region21
    $region20: #{transformer_forward.21} parent=1 // pred_region
      %v87 = vld [vmem:[#allocation2] sm:$0xff]
      %v88 = vld [vmem:[#allocation2 + $0x8] sm:$0xff]
      %v89 = vld [vmem:[%s2] sm:$0x1]
      %v91 = vlaneseq
      %v92 = vshrl.u32 %v91, 7
      %v93 = vsub.s32 0, %v92
      %v94 = vrot.slane %v89, %v93
      %v96 = vadd.f32 %v87, %v94
      %v97 = vadd.f32 %v88, %v94
      %98 = vst.msk [vmem:[#allocation3] sm:$0xff] %vm81, %v96
      %99 = vst.msk [vmem:[#allocation3 + $0x8] sm:$0xff] %vm81, %v97
    $region21: #{transformer_forward.21} parent=1 // pred_fallthru
      _
    // Predicated region
    $region22: #{transformer_forward.21} parent=1 // pred_check
      _
    $region23: #{transformer_forward.21} parent=1 // pred_check_branch
      %101 = sbr.rel (0) target = $region25
    $region24: #{transformer_forward.21} parent=1 // pred_region
      %s103 = ssub.s32 256, 256
      %104 = vsyncadd [#allocation4], %s103
      %s105 = sshll.u32 [#allocation3], 4
      %s106 = int_to_ptr.vmem [resolvable:$true] %s105
      %111 = dma.vmem_to_hbm [thread:$0]  %s106, 256, %s3, [#allocation4], 128, 128, 8
    $region25: #{transformer_forward.21} parent=1 // pred_fallthru
      _
    // Predicated region
    $region26: #{transformer_forward.21} parent=1 // pred_check
      _
    $region27: #{transformer_forward.21} parent=1 // pred_check_branch
      %113 = sbr.rel (0) target = $region29
    $region28: #{transformer_forward.21} parent=1 // pred_region
      %114 = dma.done [#allocation4], 256
    $region29: #{transformer_forward.21} parent=1 // pred_fallthru
      _
    %115 = vsyncpa [#allocation4], 1

// kernel: transformer_forward.16
$region0: #{transformer_forward.16}
  #allocation0 [shape = 'u32[]', space=smem, size = 0x4, offset = 0x4, fixed_abs, tag = 'smem constant byte address 0x4 - core index']
  #allocation1 [shape = 'u32[144,128]{1,0:T(1,128)}', space=vmem, size = 0x12000, scoped, tag = 'internal scratch']
  %s0 = inlined_call_operand.vmem [shape: f32[2,8,32], index: 0, kind: input, shape index: {}]
  %s1 = inlined_call_operand.vmem [shape: f32[2,8,32], index: 1, kind: input, shape index: {}]
  %s2 = inlined_call_operand.vmem [shape: f32[2,8,8], index: 2, kind: input, shape index: {}]
  %s3 = inlined_call_operand.vmem [shape: f32[32,32], index: 3, kind: input, shape index: {}]
  %s4 = inlined_call_operand.vmem [shape: f32[1,32], index: 4, kind: input, shape index: {}]
  %s5 = inlined_call_operand.vmem [shape: f32[32,64], index: 5, kind: input, shape index: {}]
  %s6 = inlined_call_operand.vmem [shape: f32[1,64], index: 6, kind: input, shape index: {}]
  %s7 = inlined_call_operand.vmem [shape: f32[32,32], index: 7, kind: input, shape index: {}]
  %s8 = inlined_call_operand.vmem [shape: f32[1,32], index: 8, kind: input, shape index: {}]
  %s9 = inlined_call_operand.vmem [shape: f32[1,32], index: 9, kind: input, shape index: {}]
  %s10 = inlined_call_operand.vmem [shape: f32[1,32], index: 10, kind: input, shape index: {}]
  %s11 = inlined_call_operand.vmem [shape: f32[2,8,32], index: 11, kind: output, shape index: {}]
  %s12 = sld [smem:[#allocation0]]
  $region77: #{transformer_forward.16} parent=0
    _
  %s14 = ssub.s32 1, %s12
  %s15 = scalar_select 0, %s14, %s12
  loop: start=0, step=1, limit=4
  $region2: #{transformer_forward.16} parent=0 // loop_pre_header
    _
  $region3: #{transformer_forward.16} parent=0 // loop_header
    %s17 = sphi 0, %s21
    %p18 = scmp.ge.s32.totalorder %s17, 4
    %s27 = sphi 0, %s29
    %s30 = sphi 0, %s27
    %s31 = sphi 0, %s30
    %s47 = sphi 0, %s31
    %s53 = sphi 0, %s55
    %s56 = sphi 0, %s53
    %s57 = sphi 0, %s56
    %s73 = sphi 0, %s57
    %s79 = sphi 0, %s81
    %s82 = sphi 0, %s79
    %s83 = sphi 0, %s82
    %s99 = sphi 0, %s83
    %s103 = sphi 0, %s103
    %s105 = sphi 0, %s103
    %s106 = sphi 0, %s105
    %s120 = sphi 0, %s106
    %s124 = sphi 0, %s124
    %s126 = sphi 0, %s124
    %s127 = sphi 0, %s126
    %s141 = sphi 0, %s127
    %s145 = sphi 0, %s145
    %s147 = sphi 0, %s145
    %s148 = sphi 0, %s147
    %s162 = sphi 0, %s148
    %s166 = sphi 0, %s166
    %s168 = sphi 0, %s166
    %s169 = sphi 0, %s168
    %s183 = sphi 0, %s169
    %s187 = sphi 0, %s187
    %s189 = sphi 0, %s187
    %s190 = sphi 0, %s189
    %s204 = sphi 0, %s190
    %s208 = sphi 0, %s208
    %s210 = sphi 0, %s208
    %s211 = sphi 0, %s210
    %s225 = sphi 0, %s211
    %s229 = sphi 0, %s229
    %s231 = sphi 0, %s229
    %s232 = sphi 0, %s231
    %s246 = sphi 0, %s232
    %s250 = sphi 0, %s250
    %s252 = sphi 0, %s250
    %s253 = sphi 0, %s252
    %s267 = sphi 0, %s253
    %s273 = sphi 0, %s275
    %s276 = sphi 0, %s273
    %s277 = sphi 0, %s276
    %s293 = sphi 0, %s277
  $region4: #{transformer_forward.16} parent=0 // loop_header_branch
    %20 = sbr.rel (%p18) target = $region8
  $region5: #{transformer_forward.16} parent=0 // loop_body
    %s22 = ssub.s32 %s17, 1
    %s23 = ssub.s32 %s17, 2
    %s24 = sadd.s32 %s17, 1
    %s25 = ssub.s32 %s17, %s24
    %p26 = scmp.eq.s32.totalorder %s25, 0
    %s28 = sadd.s32 %s27, 1
    %s29 = scalar_select %p26, %s27, %s28
    %p32 = pneg %p26
    %p33 = scmp.eq.s32.totalorder %s17, 1
    %p34 = por %p32, %p33
    %p35 = scmp.ne.s32.totalorder %s27, %s30
    %p36 = scmp.eq.s32.totalorder %s17, 0
    %p37 = por %p35, %p36
    %p38 = scmp.ne.s32.totalorder %s27, %s30
    %p39 = scmp.eq.s32.totalorder %s22, 1
    %p40 = por %p38, %p39
    %p41 = scmp.ne.s32.totalorder %s30, %s31
    %p42 = scmp.eq.s32.totalorder %s22, 0
    %p43 = por %p41, %p42
    %p44 = scmp.ne.s32.totalorder %s30, %s31
    %p45 = scmp.eq.s32.totalorder %s23, 1
    %p46 = por %p44, %p45
    %p48 = scmp.ne.s32.totalorder %s31, %s47
    %p49 = scmp.eq.s32.totalorder %s23, 0
    %p50 = por %p48, %p49
    %s51 = ssub.s32 %s17, %s24
    %p52 = scmp.eq.s32.totalorder %s51, 0
    %s54 = sadd.s32 %s53, 1
    %s55 = scalar_select %p52, %s53, %s54
    %p58 = pneg %p52
    %p59 = scmp.eq.s32.totalorder %s17, 1
    %p60 = por %p58, %p59
    %p61 = scmp.ne.s32.totalorder %s53, %s56
    %p62 = scmp.eq.s32.totalorder %s17, 0
    %p63 = por %p61, %p62
    %p64 = scmp.ne.s32.totalorder %s53, %s56
    %p65 = scmp.eq.s32.totalorder %s22, 1
    %p66 = por %p64, %p65
    %p67 = scmp.ne.s32.totalorder %s56, %s57
    %p68 = scmp.eq.s32.totalorder %s22, 0
    %p69 = por %p67, %p68
    %p70 = scmp.ne.s32.totalorder %s56, %s57
    %p71 = scmp.eq.s32.totalorder %s23, 1
    %p72 = por %p70, %p71
    %p74 = scmp.ne.s32.totalorder %s57, %s73
    %p75 = scmp.eq.s32.totalorder %s23, 0
    %p76 = por %p74, %p75
    %s77 = ssub.s32 %s17, %s24
    %p78 = scmp.eq.s32.totalorder %s77, 0
    %s80 = sadd.s32 %s79, 1
    %s81 = scalar_select %p78, %s79, %s80
    %p84 = pneg %p78
    %p85 = scmp.eq.s32.totalorder %s17, 1
    %p86 = por %p84, %p85
    %p87 = scmp.ne.s32.totalorder %s79, %s82
    %p88 = scmp.eq.s32.totalorder %s17, 0
    %p89 = por %p87, %p88
    %p90 = scmp.ne.s32.totalorder %s79, %s82
    %p91 = scmp.eq.s32.totalorder %s22, 1
    %p92 = por %p90, %p91
    %p93 = scmp.ne.s32.totalorder %s82, %s83
    %p94 = scmp.eq.s32.totalorder %s22, 0
    %p95 = por %p93, %p94
    %p96 = scmp.ne.s32.totalorder %s82, %s83
    %p97 = scmp.eq.s32.totalorder %s23, 1
    %p98 = por %p96, %p97
    %p100 = scmp.ne.s32.totalorder %s83, %s99
    %p101 = scmp.eq.s32.totalorder %s23, 0
    %p102 = por %p100, %p101
    %s104 = sadd.s32 %s103, 1
    %p107 = scmp.eq.s32.totalorder %s17, 1
    %p108 = scmp.ne.s32.totalorder %s103, %s105
    %p109 = scmp.eq.s32.totalorder %s17, 0
    %p110 = por %p108, %p109
    %p111 = scmp.ne.s32.totalorder %s103, %s105
    %p112 = scmp.eq.s32.totalorder %s22, 1
    %p113 = por %p111, %p112
    %p114 = scmp.ne.s32.totalorder %s105, %s106
    %p115 = scmp.eq.s32.totalorder %s22, 0
    %p116 = por %p114, %p115
    %p117 = scmp.ne.s32.totalorder %s105, %s106
    %p118 = scmp.eq.s32.totalorder %s23, 1
    %p119 = por %p117, %p118
    %p121 = scmp.ne.s32.totalorder %s106, %s120
    %p122 = scmp.eq.s32.totalorder %s23, 0
    %p123 = por %p121, %p122
    %s125 = sadd.s32 %s124, 1
    %p128 = scmp.eq.s32.totalorder %s17, 1
    %p129 = scmp.ne.s32.totalorder %s124, %s126
    %p130 = scmp.eq.s32.totalorder %s17, 0
    %p131 = por %p129, %p130
    %p132 = scmp.ne.s32.totalorder %s124, %s126
    %p133 = scmp.eq.s32.totalorder %s22, 1
    %p134 = por %p132, %p133
    %p135 = scmp.ne.s32.totalorder %s126, %s127
    %p136 = scmp.eq.s32.totalorder %s22, 0
    %p137 = por %p135, %p136
    %p138 = scmp.ne.s32.totalorder %s126, %s127
    %p139 = scmp.eq.s32.totalorder %s23, 1
    %p140 = por %p138, %p139
    %p142 = scmp.ne.s32.totalorder %s127, %s141
    %p143 = scmp.eq.s32.totalorder %s23, 0
    %p144 = por %p142, %p143
    %s146 = sadd.s32 %s145, 1
    %p149 = scmp.eq.s32.totalorder %s17, 1
    %p150 = scmp.ne.s32.totalorder %s145, %s147
    %p151 = scmp.eq.s32.totalorder %s17, 0
    %p152 = por %p150, %p151
    %p153 = scmp.ne.s32.totalorder %s145, %s147
    %p154 = scmp.eq.s32.totalorder %s22, 1
    %p155 = por %p153, %p154
    %p156 = scmp.ne.s32.totalorder %s147, %s148
    %p157 = scmp.eq.s32.totalorder %s22, 0
    %p158 = por %p156, %p157
    %p159 = scmp.ne.s32.totalorder %s147, %s148
    %p160 = scmp.eq.s32.totalorder %s23, 1
    %p161 = por %p159, %p160
    %p163 = scmp.ne.s32.totalorder %s148, %s162
    %p164 = scmp.eq.s32.totalorder %s23, 0
    %p165 = por %p163, %p164
    %s167 = sadd.s32 %s166, 1
    %p170 = scmp.eq.s32.totalorder %s17, 1
    %p171 = scmp.ne.s32.totalorder %s166, %s168
    %p172 = scmp.eq.s32.totalorder %s17, 0
    %p173 = por %p171, %p172
    %p174 = scmp.ne.s32.totalorder %s166, %s168
    %p175 = scmp.eq.s32.totalorder %s22, 1
    %p176 = por %p174, %p175
    %p177 = scmp.ne.s32.totalorder %s168, %s169
    %p178 = scmp.eq.s32.totalorder %s22, 0
    %p179 = por %p177, %p178
    %p180 = scmp.ne.s32.totalorder %s168, %s169
    %p181 = scmp.eq.s32.totalorder %s23, 1
    %p182 = por %p180, %p181
    %p184 = scmp.ne.s32.totalorder %s169, %s183
    %p185 = scmp.eq.s32.totalorder %s23, 0
    %p186 = por %p184, %p185
    %s188 = sadd.s32 %s187, 1
    %p191 = scmp.eq.s32.totalorder %s17, 1
    %p192 = scmp.ne.s32.totalorder %s187, %s189
    %p193 = scmp.eq.s32.totalorder %s17, 0
    %p194 = por %p192, %p193
    %p195 = scmp.ne.s32.totalorder %s187, %s189
    %p196 = scmp.eq.s32.totalorder %s22, 1
    %p197 = por %p195, %p196
    %p198 = scmp.ne.s32.totalorder %s189, %s190
    %p199 = scmp.eq.s32.totalorder %s22, 0
    %p200 = por %p198, %p199
    %p201 = scmp.ne.s32.totalorder %s189, %s190
    %p202 = scmp.eq.s32.totalorder %s23, 1
    %p203 = por %p201, %p202
    %p205 = scmp.ne.s32.totalorder %s190, %s204
    %p206 = scmp.eq.s32.totalorder %s23, 0
    %p207 = por %p205, %p206
    %s209 = sadd.s32 %s208, 1
    %p212 = scmp.eq.s32.totalorder %s17, 1
    %p213 = scmp.ne.s32.totalorder %s208, %s210
    %p214 = scmp.eq.s32.totalorder %s17, 0
    %p215 = por %p213, %p214
    %p216 = scmp.ne.s32.totalorder %s208, %s210
    %p217 = scmp.eq.s32.totalorder %s22, 1
    %p218 = por %p216, %p217
    %p219 = scmp.ne.s32.totalorder %s210, %s211
    %p220 = scmp.eq.s32.totalorder %s22, 0
    %p221 = por %p219, %p220
    %p222 = scmp.ne.s32.totalorder %s210, %s211
    %p223 = scmp.eq.s32.totalorder %s23, 1
    %p224 = por %p222, %p223
    %p226 = scmp.ne.s32.totalorder %s211, %s225
    %p227 = scmp.eq.s32.totalorder %s23, 0
    %p228 = por %p226, %p227
    %s230 = sadd.s32 %s229, 1
    %p233 = scmp.eq.s32.totalorder %s17, 1
    %p234 = scmp.ne.s32.totalorder %s229, %s231
    %p235 = scmp.eq.s32.totalorder %s17, 0
    %p236 = por %p234, %p235
    %p237 = scmp.ne.s32.totalorder %s229, %s231
    %p238 = scmp.eq.s32.totalorder %s22, 1
    %p239 = por %p237, %p238
    %p240 = scmp.ne.s32.totalorder %s231, %s232
    %p241 = scmp.eq.s32.totalorder %s22, 0
    %p242 = por %p240, %p241
    %p243 = scmp.ne.s32.totalorder %s231, %s232
    %p244 = scmp.eq.s32.totalorder %s23, 1
    %p245 = por %p243, %p244
    %p247 = scmp.ne.s32.totalorder %s232, %s246
    %p248 = scmp.eq.s32.totalorder %s23, 0
    %p249 = por %p247, %p248
    %s251 = sadd.s32 %s250, 1
    %p254 = scmp.eq.s32.totalorder %s17, 1
    %p255 = scmp.ne.s32.totalorder %s250, %s252
    %p256 = scmp.eq.s32.totalorder %s17, 0
    %p257 = por %p255, %p256
    %p258 = scmp.ne.s32.totalorder %s250, %s252
    %p259 = scmp.eq.s32.totalorder %s22, 1
    %p260 = por %p258, %p259
    %p261 = scmp.ne.s32.totalorder %s252, %s253
    %p262 = scmp.eq.s32.totalorder %s22, 0
    %p263 = por %p261, %p262
    %p264 = scmp.ne.s32.totalorder %s252, %s253
    %p265 = scmp.eq.s32.totalorder %s23, 1
    %p266 = por %p264, %p265
    %p268 = scmp.ne.s32.totalorder %s253, %s267
    %p269 = scmp.eq.s32.totalorder %s23, 0
    %p270 = por %p268, %p269
    %s271 = ssub.s32 %s17, %s24
    %p272 = scmp.eq.s32.totalorder %s271, 0
    %s274 = sadd.s32 %s273, 1
    %s275 = scalar_select %p272, %s273, %s274
    %p278 = pneg %p272
    %p279 = scmp.eq.s32.totalorder %s17, 1
    %p280 = por %p278, %p279
    %p281 = scmp.ne.s32.totalorder %s273, %s276
    %p282 = scmp.eq.s32.totalorder %s17, 0
    %p283 = por %p281, %p282
    %p284 = scmp.ne.s32.totalorder %s273, %s276
    %p285 = scmp.eq.s32.totalorder %s22, 1
    %p286 = por %p284, %p285
    %p287 = scmp.ne.s32.totalorder %s276, %s277
    %p288 = scmp.eq.s32.totalorder %s22, 0
    %p289 = por %p287, %p288
    %p290 = scmp.ne.s32.totalorder %s276, %s277
    %p291 = scmp.eq.s32.totalorder %s23, 1
    %p292 = por %p290, %p291
    %p294 = scmp.ne.s32.totalorder %s277, %s293
    %p295 = scmp.eq.s32.totalorder %s23, 0
    %p296 = por %p294, %p295
    %p297 = scmp.le.s32.totalorder 1, %s17
    %p298 = scmp.lt.s32.totalorder %s17, 3
    %p299 = pnand %p297, %p298
    %p300 = pneg %p299
    // Predicated region
    $region9: #{transformer_forward.16} parent=5 // pred_check
      _
    $region10: #{transformer_forward.16} parent=5 // pred_check_branch
      %302 = sbr.rel (%p299) target = $region12
    $region11: #{transformer_forward.16} parent=5 // pred_region
      %s303 = ssub.s32 %s17, 1
      // Predicated region
      $region13: #{transformer_forward.16} parent=11 // pred_check
        %p304 = pneg %p116
      $region14: #{transformer_forward.16} parent=11 // pred_check_branch
        %306 = sbr.rel (%p304) target = $region16
      $region15: #{transformer_forward.16} parent=11 // pred_region
        _
      $region16: #{transformer_forward.16} parent=11 // pred_fallthru
        _
      // Predicated region
      $region17: #{transformer_forward.16} parent=11 // pred_check
        %p307 = pneg %p137
      $region18: #{transformer_forward.16} parent=11 // pred_check_branch
        %309 = sbr.rel (%p307) target = $region20
      $region19: #{transformer_forward.16} parent=11 // pred_region
        _
      $region20: #{transformer_forward.16} parent=11 // pred_fallthru
        _
      // Predicated region
      $region21: #{transformer_forward.16} parent=11 // pred_check
        %p310 = pneg %p158
      $region22: #{transformer_forward.16} parent=11 // pred_check_branch
        %312 = sbr.rel (%p310) target = $region24
      $region23: #{transformer_forward.16} parent=11 // pred_region
        _
      $region24: #{transformer_forward.16} parent=11 // pred_fallthru
        _
      // Predicated region
      $region25: #{transformer_forward.16} parent=11 // pred_check
        %p313 = pneg %p179
      $region26: #{transformer_forward.16} parent=11 // pred_check_branch
        %315 = sbr.rel (%p313) target = $region28
      $region27: #{transformer_forward.16} parent=11 // pred_region
        _
      $region28: #{transformer_forward.16} parent=11 // pred_fallthru
        _
      // Predicated region
      $region29: #{transformer_forward.16} parent=11 // pred_check
        %p316 = pneg %p200
      $region30: #{transformer_forward.16} parent=11 // pred_check_branch
        %318 = sbr.rel (%p316) target = $region32
      $region31: #{transformer_forward.16} parent=11 // pred_region
        _
      $region32: #{transformer_forward.16} parent=11 // pred_fallthru
        _
      // Predicated region
      $region33: #{transformer_forward.16} parent=11 // pred_check
        %p319 = pneg %p221
      $region34: #{transformer_forward.16} parent=11 // pred_check_branch
        %321 = sbr.rel (%p319) target = $region36
      $region35: #{transformer_forward.16} parent=11 // pred_region
        _
      $region36: #{transformer_forward.16} parent=11 // pred_fallthru
        _
      // Predicated region
      $region37: #{transformer_forward.16} parent=11 // pred_check
        %p322 = pneg %p242
      $region38: #{transformer_forward.16} parent=11 // pred_check_branch
        %324 = sbr.rel (%p322) target = $region40
      $region39: #{transformer_forward.16} parent=11 // pred_region
        _
      $region40: #{transformer_forward.16} parent=11 // pred_fallthru
        _
      // Predicated region
      $region41: #{transformer_forward.16} parent=11 // pred_check
        %p325 = pneg %p263
      $region42: #{transformer_forward.16} parent=11 // pred_check_branch
        %327 = sbr.rel (%p325) target = $region44
      $region43: #{transformer_forward.16} parent=11 // pred_region
        _
      $region44: #{transformer_forward.16} parent=11 // pred_fallthru
        _
    $region12: #{transformer_forward.16} parent=5 // pred_fallthru
      _
    %p328 = scmp.lt.s32.totalorder %s17, 2
    // Predicated region
    $region45: #{transformer_forward.16} parent=5 // pred_check
      %p329 = pneg %p328
    $region46: #{transformer_forward.16} parent=5 // pred_check_branch
      %331 = sbr.rel (%p329) target = $region48
    $region47: #{transformer_forward.16} parent=5 // pred_region
      // Predicated region
      $region49: #{transformer_forward.16} parent=47 // pred_check
        %p332 = pneg %p37
      $region50: #{transformer_forward.16} parent=47 // pred_check_branch
        %334 = sbr.rel (%p332) target = $region52
      $region51: #{transformer_forward.16} parent=47 // pred_region
        %p335 = scmp.lt.s32.totalorder %s17, 1
        %s336 = scalar_select %p335, %s17, 1
        %s337 = smul.addr %s336, 8
        %s338 = scalar_lea.vmem %s0, %s337
      $region52: #{transformer_forward.16} parent=47 // pred_fallthru
        _
      // Predicated region
      $region53: #{transformer_forward.16} parent=47 // pred_check
        %p339 = pneg %p63
      $region54: #{transformer_forward.16} parent=47 // pred_check_branch
        %341 = sbr.rel (%p339) target = $region56
      $region55: #{transformer_forward.16} parent=47 // pred_region
        %p342 = scmp.lt.s32.totalorder %s17, 1
        %s343 = scalar_select %p342, %s17, 1
        %s344 = smul.addr %s343, 8
        %s345 = scalar_lea.vmem %s1, %s344
      $region56: #{transformer_forward.16} parent=47 // pred_fallthru
        _
      // Predicated region
      $region57: #{transformer_forward.16} parent=47 // pred_check
        %p346 = pneg %p89
      $region58: #{transformer_forward.16} parent=47 // pred_check_branch
        %348 = sbr.rel (%p346) target = $region60
      $region59: #{transformer_forward.16} parent=47 // pred_region
        %p349 = scmp.lt.s32.totalorder %s17, 1
        %s350 = scalar_select %p349, %s17, 1
        %s351 = smul.addr %s350, 8
        %s352 = scalar_lea.vmem %s2, %s351
      $region60: #{transformer_forward.16} parent=47 // pred_fallthru
        _
    $region48: #{transformer_forward.16} parent=5 // pred_fallthru
      _
    %p353 = scmp.le.s32.totalorder 1, %s17
    %p354 = scmp.lt.s32.totalorder %s17, 3
    %p355 = pnand %p353, %p354
    %p356 = pneg %p355
    // Predicated region
    $region61: #{transformer_forward.16} parent=5 // pred_check
      _
    $region62: #{transformer_forward.16} parent=5 // pred_check_branch
      %358 = sbr.rel (%p355) target = $region64
    $region63: #{transformer_forward.16} parent=5 // pred_region
      %s359 = ssub.s32 %s17, 1
      %p360 = scmp.lt.s32.totalorder %s22, 1
      %s361 = scalar_select %p360, %s22, 1
      %s362 = smul.addr %s361, 8
      %s363 = scalar_lea.vmem %s0, %s362
      %p364 = pneg %p43
      %p365 = pneg %p40
      %p366 = scmp.lt.s32.totalorder %s22, 1
      %s367 = scalar_select %p366, %s22, 1
      %s368 = smul.addr %s367, 8
      %s369 = scalar_lea.vmem %s1, %s368
      %p370 = pneg %p69
      %p371 = pneg %p66
      %p372 = scmp.lt.s32.totalorder %s22, 1
      %s373 = scalar_select %p372, %s22, 1
      %s374 = smul.addr %s373, 8
      %s375 = scalar_lea.vmem %s2, %s374
      %p376 = pneg %p95
      %p377 = pneg %p92
      %p378 = pneg %p116
      %p379 = pneg %p113
      %p380 = pneg %p137
      %p381 = pneg %p134
      %p382 = pneg %p158
      %p383 = pneg %p155
      %p384 = pneg %p179
      %p385 = pneg %p176
      %p386 = pneg %p200
      %p387 = pneg %p197
      %p388 = pneg %p221
      %p389 = pneg %p218
      %p390 = pneg %p242
      %p391 = pneg %p239
      %p392 = pneg %p263
      %p393 = pneg %p260
      %p394 = pneg %p289
      %p395 = pneg %p286
      %p396 = scmp.lt.s32.totalorder %s22, 1
      %s397 = scalar_select %p396, %s22, 1
      %s398 = smul.addr %s397, 8
      %s399 = scalar_lea.vmem %s11, %s398
      %p400 = scmp.lt.s32.totalorder %s22, 1
      %s401 = scalar_select %p400, %s22, 1
      %s402 = smul.addr %s401, 8
      %s403 = scalar_lea.vmem %s0, %s402
      %p404 = scmp.lt.s32.totalorder %s22, 1
      %s405 = scalar_select %p404, %s22, 1
      %s406 = smul.addr %s405, 8
      %s407 = scalar_lea.vmem %s1, %s406
      %p408 = scmp.lt.s32.totalorder %s22, 1
      %s409 = scalar_select %p408, %s22, 1
      %s410 = smul.addr %s409, 8
      %s411 = scalar_lea.vmem %s2, %s410
      %p412 = scmp.lt.s32.totalorder %s22, 1
      %s413 = scalar_select %p412, %s22, 1
      %s414 = smul.addr %s413, 8
      %s415 = scalar_lea.vmem %s11, %s414
      %v417 = vld [vmem:[%s403] sm:$0xff]
      %v418 = vld [vmem:[%s407] sm:$0xff]
      %v419 = vld [vmem:[%s3] sm:$0xff]
      %v420 = vld [vmem:[%s3 + $0x8] sm:$0xff]
      %v421 = vld [vmem:[%s3 + $0x10] sm:$0xff]
      %v422 = vld [vmem:[%s3 + $0x18] sm:$0xff]
      %v423 = vpack.c.bf16 %v417, %v417
      %v424 = vpack.c.bf16 %v420, %v419
      %v425 = vpack.c.bf16 %v422, %v421
      %v426 = vld [vmem:[%s4] sm:$0x1]
      %v428 = vlaneseq
      %v429 = vshrl.u32 %v428, 7
      %v430 = vsub.s32 0, %v429
      %v431 = vrot.slane %v426, %v430
      %vm433 = vcmask 261120
      %v435 = vsel %vm433, %v423, 0
      %437 = vmatprep.subr.bf16.mxu0 0
      %438 = vmatpush1.bf16.msra.mxu0 %v424
      %439 = vmatprep.subr.bf16.mxu0 0
      %440 = vmatpush1.bf16.msra.mxu0 %v425
      %441 = vmatprep.subr.bf16.mxu0 0
      %442 = vmatpush1.bf16.msra.mxu0 0
      %443 = vmatprep.subr.bf16.mxu0 0
      %444 = vmatpush1.bf16.msra.mxu0 0
      %445 = vmatprep.subr.bf16.mxu0 0
      %446 = vmatpush1.bf16.msra.mxu0 0
      %447 = vmatprep.subr.bf16.mxu0 0
      %448 = vmatpush1.bf16.msra.mxu0 0
      %449 = vmatprep.subr.bf16.mxu0 0
      %450 = vmatpush1.bf16.msra.mxu0 0
      %451 = vmatprep.subr.bf16.mxu0 0
      %452 = vmatpush1.bf16.msra.mxu0 0
      %453 = vmatprep.subr.bf16.mxu0 0
      %454 = vmatpush1.bf16.msra.mxu0 0
      %455 = vmatprep.subr.bf16.mxu0 0
      %456 = vmatpush1.bf16.msra.mxu0 0
      %457 = vmatprep.subr.bf16.mxu0 0
      %458 = vmatpush1.bf16.msra.mxu0 0
      %459 = vmatprep.subr.bf16.mxu0 0
      %460 = vmatpush1.bf16.msra.mxu0 0
      %461 = vmatprep.subr.bf16.mxu0 0
      %462 = vmatpush1.bf16.msra.mxu0 0
      %463 = vmatprep.subr.bf16.mxu0 0
      %464 = vmatpush1.bf16.msra.mxu0 0
      %465 = vmatprep.subr.bf16.mxu0 0
      %466 = vmatpush1.bf16.msra.mxu0 0
      %467 = vmatprep.subr.bf16.mxu0 0
      %468 = vmatpush1.bf16.msra.mxu0 0
      %469 = vmatprep.mubr.bf16.mxu0 0
      %470 = vmatmul.mubr.bf16.gmra.mrb[0].mxu0 %v435
      %v471 = vpop.f32.mrb[0].mxu0
      %v472 = vadd.f32 %v431, %v471
      %v473 = vpop.f32.mrb[0].mxu0
      %v474 = vpop.f32.mrb[0].mxu0
      %v475 = vpop.f32.mrb[0].mxu0
      %476 = vdwg.mxu0
      %v477 = vld [vmem:[%s5] sm:$0xff]
      %v478 = vld [vmem:[%s5 + $0x8] sm:$0xff]
      %v479 = vld [vmem:[%s5 + $0x10] sm:$0xff]
      %v480 = vld [vmem:[%s5 + $0x18] sm:$0xff]
      %v481 = vpack.c.bf16 %v418, %v418
      %v482 = vpack.c.bf16 %v478, %v477
      %v483 = vpack.c.bf16 %v480, %v479
      %v484 = vld [vmem:[%s6] sm:$0x1]
      %v486 = vlaneseq
      %v487 = vshrl.u32 %v486, 7
      %v488 = vsub.s32 0, %v487
      %v489 = vrot.slane %v484, %v488
      %v492 = vsel %vm433, %v481, 0
      %494 = vmatprep.subr.bf16.mxu0 0
      %495 = vmatpush1.bf16.msra.mxu0 %v482
      %496 = vmatprep.subr.bf16.mxu0 0
      %497 = vmatpush1.bf16.msra.mxu0 %v483
      %498 = vmatprep.subr.bf16.mxu0 0
      %499 = vmatpush1.bf16.msra.mxu0 0
      %500 = vmatprep.subr.bf16.mxu0 0
      %501 = vmatpush1.bf16.msra.mxu0 0
      %502 = vmatprep.subr.bf16.mxu0 0
      %503 = vmatpush1.bf16.msra.mxu0 0
      %504 = vmatprep.subr.bf16.mxu0 0
      %505 = vmatpush1.bf16.msra.mxu0 0
      %506 = vmatprep.subr.bf16.mxu0 0
      %507 = vmatpush1.bf16.msra.mxu0 0
      %508 = vmatprep.subr.bf16.mxu0 0
      %509 = vmatpush1.bf16.msra.mxu0 0
      %510 = vmatprep.subr.bf16.mxu0 0
      %511 = vmatpush1.bf16.msra.mxu0 0
      %512 = vmatprep.subr.bf16.mxu0 0
      %513 = vmatpush1.bf16.msra.mxu0 0
      %514 = vmatprep.subr.bf16.mxu0 0
      %515 = vmatpush1.bf16.msra.mxu0 0
      %516 = vmatprep.subr.bf16.mxu0 0
      %517 = vmatpush1.bf16.msra.mxu0 0
      %518 = vmatprep.subr.bf16.mxu0 0
      %519 = vmatpush1.bf16.msra.mxu0 0
      %520 = vmatprep.subr.bf16.mxu0 0
      %521 = vmatpush1.bf16.msra.mxu0 0
      %522 = vmatprep.subr.bf16.mxu0 0
      %523 = vmatpush1.bf16.msra.mxu0 0
      %524 = vmatprep.subr.bf16.mxu0 0
      %525 = vmatpush1.bf16.msra.mxu0 0
      %526 = vmatprep.mubr.bf16.mxu0 0
      %527 = vmatmul.mubr.bf16.gmra.mrb[0].mxu0 %v492
      %v528 = vpop.f32.mrb[0].mxu0
      %v529 = vadd.f32 %v489, %v528
      %v530 = vpop.f32.mrb[0].mxu0
      %v531 = vpop.f32.mrb[0].mxu0
      %v532 = vpop.f32.mrb[0].mxu0
      %533 = vdwg.mxu0
      %v534 = vld [vmem:[%s411] sm:$0xff]
      %v535 = vld [vmem:[%s7] sm:$0xff]
      %v536 = vld [vmem:[%s7 + $0x8] sm:$0xff]
      %v537 = vld [vmem:[%s7 + $0x10] sm:$0xff]
      %v538 = vld [vmem:[%s7 + $0x18] sm:$0xff]
      %v539 = vpack.c.bf16 %v472, %v472
      %v540 = vpack.c.bf16 %v529, %v529
      %vm541 = vcmask 64512
      %v543 = vsel %vm541, %v539, 0
      %v546 = vsel %vm541, %v540, 0
      %548 = vmatprep.subr.bf16.mxu0 0
      %549 = vmatpush1.bf16.xpose.msra.mxu0 %v546
      %550 = vmatprep.subr.bf16.mxu0 0
      %551 = vmatpush1.bf16.xpose.msra.mxu0 0
      %552 = vmatprep.subr.bf16.mxu0 0
      %553 = vmatpush1.bf16.xpose.msra.mxu0 0
      %554 = vmatprep.subr.bf16.mxu0 0
      %555 = vmatpush1.bf16.xpose.msra.mxu0 0
      %556 = vmatprep.subr.bf16.mxu0 0
      %557 = vmatpush1.bf16.xpose.msra.mxu0 0
      %558 = vmatprep.subr.bf16.mxu0 0
      %559 = vmatpush1.bf16.xpose.msra.mxu0 0
      %560 = vmatprep.subr.bf16.mxu0 0
      %561 = vmatpush1.bf16.xpose.msra.mxu0 0
      %562 = vmatprep.subr.bf16.mxu0 0
      %563 = vmatpush1.bf16.xpose.msra.mxu0 0
      %564 = vmatprep.subr.bf16.mxu0 0
      %565 = vmatpush1.bf16.xpose.msra.mxu0 0
      %566 = vmatprep.subr.bf16.mxu0 0
      %567 = vmatpush1.bf16.xpose.msra.mxu0 0
      %568 = vmatprep.subr.bf16.mxu0 0
      %569 = vmatpush1.bf16.xpose.msra.mxu0 0
      %570 = vmatprep.subr.bf16.mxu0 0
      %571 = vmatpush1.bf16.xpose.msra.mxu0 0
      %572 = vmatprep.subr.bf16.mxu0 0
      %573 = vmatpush1.bf16.xpose.msra.mxu0 0
      %574 = vmatprep.subr.bf16.mxu0 0
      %575 = vmatpush1.bf16.xpose.msra.mxu0 0
      %576 = vmatprep.subr.bf16.mxu0 0
      %577 = vmatpush1.bf16.xpose.msra.mxu0 0
      %578 = vmatprep.subr.bf16.mxu0 0
      %579 = vmatpush1.bf16.xpose.msra.mxu0 0
      %580 = vmatprep.mubr.bf16.mxu0 0
      %581 = vmatmul.mubr.bf16.gmra.mrb[0].mxu0 %v543
      %v582 = vpop.f32.mrb[0].mxu0
      %v583 = vadd.f32 0.0, %v582
      %v584 = vpop.f32.mrb[0].mxu0
      %v585 = vpop.f32.mrb[0].mxu0
      %v586 = vpop.f32.mrb[0].mxu0
      %587 = vdwg.mxu0
      %v588 = vmul.f32 %v583, 0.35355338
      %v589 = vadd.f32 %v588, %v534
      %v590 = vsel %vm541, %v589, -inf
      %591 = vmax.xlane.f32.xlu0 %v590
      %v592 = vpop.xlane.xlu0 %591
      %v593 = vsub.f32 %v589, %v592
      %v594 = vmul.f32 %v593, 1.442695
      %v595 = vpow.pop %v594
      %v596 = vsel %vm541, %v595, 0.0
      %597 = vadd.xlane.f32.xlu0 %v596
      %v598 = vpop.xlane.xlu0 %597
      %v599 = vrcp.pop %v598
      %v600 = vmul.f32 %v595, %v599
      %v601 = vpack.c.bf16 %v600, %v600
      %603 = vrot.lane.b32.xlu0 %v540, 96
      %v604 = vpop.permute.xlu0 %603
      %v606 = vsel %vm541, %v601, 0
      %vm608 = vcmask 1043456
      %v610 = vsel %vm608, %v604, 0
      %612 = vmatprep.subr.bf16.mxu0 0
      %613 = vmatpush1.bf16.msra.mxu0 %v610
      %614 = vmatprep.subr.bf16.mxu0 0
      %615 = vmatpush1.bf16.msra.mxu0 0
      %616 = vmatprep.subr.bf16.mxu0 0
      %617 = vmatpush1.bf16.msra.mxu0 0
      %618 = vmatprep.subr.bf16.mxu0 0
      %619 = vmatpush1.bf16.msra.mxu0 0
      %620 = vmatprep.subr.bf16.mxu0 0
      %621 = vmatpush1.bf16.msra.mxu0 0
      %622 = vmatprep.subr.bf16.mxu0 0
      %623 = vmatpush1.bf16.msra.mxu0 0
      %624 = vmatprep.subr.bf16.mxu0 0
      %625 = vmatpush1.bf16.msra.mxu0 0
      %626 = vmatprep.subr.bf16.mxu0 0
      %627 = vmatpush1.bf16.msra.mxu0 0
      %628 = vmatprep.subr.bf16.mxu0 0
      %629 = vmatpush1.bf16.msra.mxu0 0
      %630 = vmatprep.subr.bf16.mxu0 0
      %631 = vmatpush1.bf16.msra.mxu0 0
      %632 = vmatprep.subr.bf16.mxu0 0
      %633 = vmatpush1.bf16.msra.mxu0 0
      %634 = vmatprep.subr.bf16.mxu0 0
      %635 = vmatpush1.bf16.msra.mxu0 0
      %636 = vmatprep.subr.bf16.mxu0 0
      %637 = vmatpush1.bf16.msra.mxu0 0
      %638 = vmatprep.subr.bf16.mxu0 0
      %639 = vmatpush1.bf16.msra.mxu0 0
      %640 = vmatprep.subr.bf16.mxu0 0
      %641 = vmatpush1.bf16.msra.mxu0 0
      %642 = vmatprep.subr.bf16.mxu0 0
      %643 = vmatpush1.bf16.msra.mxu0 0
      %644 = vmatprep.mubr.bf16.mxu0 0
      %645 = vmatmul.mubr.bf16.gmra.mrb[0].mxu0 %v606
      %v646 = vpop.f32.mrb[0].mxu0
      %v647 = vadd.f32 0.0, %v646
      %v648 = vpop.f32.mrb[0].mxu0
      %v649 = vpop.f32.mrb[0].mxu0
      %v650 = vpop.f32.mrb[0].mxu0
      %651 = vdwg.mxu0
      %v652 = vpack.c.bf16 %v647, %v647
      %v653 = vpack.c.bf16 %v535, %v535
      %655 = vrot.lane.b32.xlu0 %v539, 120
      %v656 = vpop.permute.xlu0 %655
      %657 = vrot.lane.b32.xlu0 %v540, 120
      %v658 = vpop.permute.xlu0 %657
      %v660 = vsel %vm541, %v656, 0
      %v663 = vsel %vm541, %v658, 0
      %665 = vmatprep.subr.bf16.mxu0 0
      %666 = vmatpush1.bf16.xpose.msra.mxu0 %v663
      %667 = vmatprep.subr.bf16.mxu0 0
      %668 = vmatpush1.bf16.xpose.msra.mxu0 0
      %669 = vmatprep.subr.bf16.mxu0 0
      %670 = vmatpush1.bf16.xpose.msra.mxu0 0
      %671 = vmatprep.subr.bf16.mxu0 0
      %672 = vmatpush1.bf16.xpose.msra.mxu0 0
      %673 = vmatprep.subr.bf16.mxu0 0
      %674 = vmatpush1.bf16.xpose.msra.mxu0 0
      %675 = vmatprep.subr.bf16.mxu0 0
      %676 = vmatpush1.bf16.xpose.msra.mxu0 0
      %677 = vmatprep.subr.bf16.mxu0 0
      %678 = vmatpush1.bf16.xpose.msra.mxu0 0
      %679 = vmatprep.subr.bf16.mxu0 0
      %680 = vmatpush1.bf16.xpose.msra.mxu0 0
      %681 = vmatprep.subr.bf16.mxu0 0
      %682 = vmatpush1.bf16.xpose.msra.mxu0 0
      %683 = vmatprep.subr.bf16.mxu0 0
      %684 = vmatpush1.bf16.xpose.msra.mxu0 0
      %685 = vmatprep.subr.bf16.mxu0 0
      %686 = vmatpush1.bf16.xpose.msra.mxu0 0
      %687 = vmatprep.subr.bf16.mxu0 0
      %688 = vmatpush1.bf16.xpose.msra.mxu0 0
      %689 = vmatprep.subr.bf16.mxu0 0
      %690 = vmatpush1.bf16.xpose.msra.mxu0 0
      %691 = vmatprep.subr.bf16.mxu0 0
      %692 = vmatpush1.bf16.xpose.msra.mxu0 0
      %693 = vmatprep.subr.bf16.mxu0 0
      %694 = vmatpush1.bf16.xpose.msra.mxu0 0
      %695 = vmatprep.subr.bf16.mxu0 0
      %696 = vmatpush1.bf16.xpose.msra.mxu0 0
      %697 = vmatprep.mubr.bf16.mxu0 0
      %698 = vmatmul.mubr.bf16.gmra.mrb[0].mxu0 %v660
      %v699 = vpop.f32.mrb[0].mxu0
      %v700 = vadd.f32 0.0, %v699
      %v701 = vpop.f32.mrb[0].mxu0
      %v702 = vpop.f32.mrb[0].mxu0
      %v703 = vpop.f32.mrb[0].mxu0
      %704 = vdwg.mxu0
      %v705 = vmul.f32 %v700, 0.35355338
      %v706 = vadd.f32 %v705, %v534
      %v707 = vsel %vm541, %v706, -inf
      %708 = vmax.xlane.f32.xlu0 %v707
      %v709 = vpop.xlane.xlu0 %708
      %v710 = vsub.f32 %v706, %v709
      %v711 = vmul.f32 %v710, 1.442695
      %v712 = vpow.pop %v711
      %v713 = vsel %vm541, %v712, 0.0
      %714 = vadd.xlane.f32.xlu0 %v713
      %v715 = vpop.xlane.xlu0 %714
      %v716 = vrcp.pop %v715
      %v717 = vmul.f32 %v712, %v716
      %v718 = vpack.c.bf16 %v717, %v717
      %719 = vrot.lane.b32.xlu0 %v540, 88
      %v720 = vpop.permute.xlu0 %719
      %v722 = vsel %vm541, %v718, 0
      %v725 = vsel %vm608, %v720, 0
      %727 = vmatprep.subr.bf16.mxu0 0
      %728 = vmatpush1.bf16.msra.mxu0 %v725
      %729 = vmatprep.subr.bf16.mxu0 0
      %730 = vmatpush1.bf16.msra.mxu0 0
      %731 = vmatprep.subr.bf16.mxu0 0
      %732 = vmatpush1.bf16.msra.mxu0 0
      %733 = vmatprep.subr.bf16.mxu0 0
      %734 = vmatpush1.bf16.msra.mxu0 0
      %735 = vmatprep.subr.bf16.mxu0 0
      %736 = vmatpush1.bf16.msra.mxu0 0
      %737 = vmatprep.subr.bf16.mxu0 0
      %738 = vmatpush1.bf16.msra.mxu0 0
      %739 = vmatprep.subr.bf16.mxu0 0
      %740 = vmatpush1.bf16.msra.mxu0 0
      %741 = vmatprep.subr.bf16.mxu0 0
      %742 = vmatpush1.bf16.msra.mxu0 0
      %743 = vmatprep.subr.bf16.mxu0 0
      %744 = vmatpush1.bf16.msra.mxu0 0
      %745 = vmatprep.subr.bf16.mxu0 0
      %746 = vmatpush1.bf16.msra.mxu0 0
      %747 = vmatprep.subr.bf16.mxu0 0
      %748 = vmatpush1.bf16.msra.mxu0 0
      %749 = vmatprep.subr.bf16.mxu0 0
      %750 = vmatpush1.bf16.msra.mxu0 0
      %751 = vmatprep.subr.bf16.mxu0 0
      %752 = vmatpush1.bf16.msra.mxu0 0
      %753 = vmatprep.subr.bf16.mxu0 0
      %754 = vmatpush1.bf16.msra.mxu0 0
      %755 = vmatprep.subr.bf16.mxu0 0
      %756 = vmatpush1.bf16.msra.mxu0 0
      %757 = vmatprep.subr.bf16.mxu0 0
      %758 = vmatpush1.bf16.msra.mxu0 0
      %759 = vmatprep.mubr.bf16.mxu0 0
      %760 = vmatmul.mubr.bf16.gmra.mrb[0].mxu0 %v722
      %v761 = vpop.f32.mrb[0].mxu0
      %v762 = vadd.f32 0.0, %v761
      %v763 = vpop.f32.mrb[0].mxu0
      %v764 = vpop.f32.mrb[0].mxu0
      %v765 = vpop.f32.mrb[0].mxu0
      %766 = vdwg.mxu0
      %v767 = vpack.c.bf16 %v762, %v762
      %v768 = vpack.c.bf16 %v536, %v536
      %v770 = vsel %vm541, %v767, 0
      %v773 = vsel %vm608, %v768, 0
      %775 = vmatprep.subr.bf16.mxu0 0
      %776 = vmatpush1.bf16.msra.mxu0 %v773
      %777 = vmatprep.subr.bf16.mxu0 0
      %778 = vmatpush1.bf16.msra.mxu0 0
      %779 = vmatprep.subr.bf16.mxu0 0
      %780 = vmatpush1.bf16.msra.mxu0 0
      %781 = vmatprep.subr.bf16.mxu0 0
      %782 = vmatpush1.bf16.msra.mxu0 0
      %783 = vmatprep.subr.bf16.mxu0 0
      %784 = vmatpush1.bf16.msra.mxu0 0
      %785 = vmatprep.subr.bf16.mxu0 0
      %786 = vmatpush1.bf16.msra.mxu0 0
      %787 = vmatprep.subr.bf16.mxu0 0
      %788 = vmatpush1.bf16.msra.mxu0 0
      %789 = vmatprep.subr.bf16.mxu0 0
      %790 = vmatpush1.bf16.msra.mxu0 0
      %791 = vmatprep.subr.bf16.mxu0 0
      %792 = vmatpush1.bf16.msra.mxu0 0
      %793 = vmatprep.subr.bf16.mxu0 0
      %794 = vmatpush1.bf16.msra.mxu0 0
      %795 = vmatprep.subr.bf16.mxu0 0
      %796 = vmatpush1.bf16.msra.mxu0 0
      %797 = vmatprep.subr.bf16.mxu0 0
      %798 = vmatpush1.bf16.msra.mxu0 0
      %799 = vmatprep.subr.bf16.mxu0 0
      %800 = vmatpush1.bf16.msra.mxu0 0
      %801 = vmatprep.subr.bf16.mxu0 0
      %802 = vmatpush1.bf16.msra.mxu0 0
      %803 = vmatprep.subr.bf16.mxu0 0
      %804 = vmatpush1.bf16.msra.mxu0 0
      %805 = vmatprep.subr.bf16.mxu0 0
      %806 = vmatpush1.bf16.msra.mxu0 0
      %807 = vmatprep.mubr.bf16.mxu0 0
      %808 = vmatmul.mubr.bf16.gmra.mrb[0].mxu0 %v770
      %v809 = vpop.f32.mrb[0].mxu0
      %v810 = vadd.f32 0.0, %v809
      %v811 = vpop.f32.mrb[0].mxu0
      %v812 = vpop.f32.mrb[0].mxu0
      %v813 = vpop.f32.mrb[0].mxu0
      %814 = vdwg.mxu0
      %v816 = vsel %vm541, %v652, 0
      %v819 = vsel %vm608, %v653, 0
      %821 = vmatprep.subr.bf16.mxu0 0
      %822 = vmatpush1.bf16.msra.mxu0 %v819
      %823 = vmatprep.subr.bf16.mxu0 0
      %824 = vmatpush1.bf16.msra.mxu0 0
      %825 = vmatprep.subr.bf16.mxu0 0
      %826 = vmatpush1.bf16.msra.mxu0 0
      %827 = vmatprep.subr.bf16.mxu0 0
      %828 = vmatpush1.bf16.msra.mxu0 0
      %829 = vmatprep.subr.bf16.mxu0 0
      %830 = vmatpush1.bf16.msra.mxu0 0
      %831 = vmatprep.subr.bf16.mxu0 0
      %832 = vmatpush1.bf16.msra.mxu0 0
      %833 = vmatprep.subr.bf16.mxu0 0
      %834 = vmatpush1.bf16.msra.mxu0 0
      %835 = vmatprep.subr.bf16.mxu0 0
      %836 = vmatpush1.bf16.msra.mxu0 0
      %837 = vmatprep.subr.bf16.mxu0 0
      %838 = vmatpush1.bf16.msra.mxu0 0
      %839 = vmatprep.subr.bf16.mxu0 0
      %840 = vmatpush1.bf16.msra.mxu0 0
      %841 = vmatprep.subr.bf16.mxu0 0
      %842 = vmatpush1.bf16.msra.mxu0 0
      %843 = vmatprep.subr.bf16.mxu0 0
      %844 = vmatpush1.bf16.msra.mxu0 0
      %845 = vmatprep.subr.bf16.mxu0 0
      %846 = vmatpush1.bf16.msra.mxu0 0
      %847 = vmatprep.subr.bf16.mxu0 0
      %848 = vmatpush1.bf16.msra.mxu0 0
      %849 = vmatprep.subr.bf16.mxu0 0
      %850 = vmatpush1.bf16.msra.mxu0 0
      %851 = vmatprep.subr.bf16.mxu0 0
      %852 = vmatpush1.bf16.msra.mxu0 0
      %853 = vmatprep.mubr.bf16.mxu0 0
      %854 = vmatmul.mubr.bf16.gmra.mrb[0].mxu0 %v816
      %v855 = vpop.f32.mrb[0].mxu0
      %v856 = vadd.f32 %v810, %v855
      %v857 = vpop.f32.mrb[0].mxu0
      %v858 = vpop.f32.mrb[0].mxu0
      %v859 = vpop.f32.mrb[0].mxu0
      %860 = vdwg.mxu0
      %861 = vrot.lane.b32.xlu0 %v539, 112
      %v862 = vpop.permute.xlu0 %861
      %863 = vrot.lane.b32.xlu0 %v540, 112
      %v864 = vpop.permute.xlu0 %863
      %v866 = vsel %vm541, %v862, 0
      %v869 = vsel %vm541, %v864, 0
      %871 = vmatprep.subr.bf16.mxu0 0
      %872 = vmatpush1.bf16.xpose.msra.mxu0 %v869
      %873 = vmatprep.subr.bf16.mxu0 0
      %874 = vmatpush1.bf16.xpose.msra.mxu0 0
      %875 = vmatprep.subr.bf16.mxu0 0
      %876 = vmatpush1.bf16.xpose.msra.mxu0 0
      %877 = vmatprep.subr.bf16.mxu0 0
      %878 = vmatpush1.bf16.xpose.msra.mxu0 0
      %879 = vmatprep.subr.bf16.mxu0 0
      %880 = vmatpush1.bf16.xpose.msra.mxu0 0
      %881 = vmatprep.subr.bf16.mxu0 0
      %882 = vmatpush1.bf16.xpose.msra.mxu0 0
      %883 = vmatprep.subr.bf16.mxu0 0
      %884 = vmatpush1.bf16.xpose.msra.mxu0 0
      %885 = vmatprep.subr.bf16.mxu0 0
      %886 = vmatpush1.bf16.xpose.msra.mxu0 0
      %887 = vmatprep.subr.bf16.mxu0 0
      %888 = vmatpush1.bf16.xpose.msra.mxu0 0
      %889 = vmatprep.subr.bf16.mxu0 0
      %890 = vmatpush1.bf16.xpose.msra.mxu0 0
      %891 = vmatprep.subr.bf16.mxu0 0
      %892 = vmatpush1.bf16.xpose.msra.mxu0 0
      %893 = vmatprep.subr.bf16.mxu0 0
      %894 = vmatpush1.bf16.xpose.msra.mxu0 0
      %895 = vmatprep.subr.bf16.mxu0 0
      %896 = vmatpush1.bf16.xpose.msra.mxu0 0
      %897 = vmatprep.subr.bf16.mxu0 0
      %898 = vmatpush1.bf16.xpose.msra.mxu0 0
      %899 = vmatprep.subr.bf16.mxu0 0
      %900 = vmatpush1.bf16.xpose.msra.mxu0 0
      %901 = vmatprep.subr.bf16.mxu0 0
      %902 = vmatpush1.bf16.xpose.msra.mxu0 0
      %903 = vmatprep.mubr.bf16.mxu0 0
      %904 = vmatmul.mubr.bf16.gmra.mrb[0].mxu0 %v866
      %v905 = vpop.f32.mrb[0].mxu0
      %v906 = vadd.f32 0.0, %v905
      %v907 = vpop.f32.mrb[0].mxu0
      %v908 = vpop.f32.mrb[0].mxu0
      %v909 = vpop.f32.mrb[0].mxu0
      %910 = vdwg.mxu0
      %v911 = vmul.f32 %v906, 0.35355338
      %v912 = vadd.f32 %v911, %v534
      %v913 = vsel %vm541, %v912, -inf
      %914 = vmax.xlane.f32.xlu0 %v913
      %v915 = vpop.xlane.xlu0 %914
      %v916 = vsub.f32 %v912, %v915
      %v917 = vmul.f32 %v916, 1.442695
      %v918 = vpow.pop %v917
      %v919 = vsel %vm541, %v918, 0.0
      %920 = vadd.xlane.f32.xlu0 %v919
      %v921 = vpop.xlane.xlu0 %920
      %v922 = vrcp.pop %v921
      %v923 = vmul.f32 %v918, %v922
      %v924 = vpack.c.bf16 %v923, %v923
      %925 = vrot.lane.b32.xlu0 %v540, 80
      %v926 = vpop.permute.xlu0 %925
      %v928 = vsel %vm541, %v924, 0
      %v931 = vsel %vm608, %v926, 0
      %933 = vmatprep.subr.bf16.mxu0 0
      %934 = vmatpush1.bf16.msra.mxu0 %v931
      %935 = vmatprep.subr.bf16.mxu0 0
      %936 = vmatpush1.bf16.msra.mxu0 0
      %937 = vmatprep.subr.bf16.mxu0 0
      %938 = vmatpush1.bf16.msra.mxu0 0
      %939 = vmatprep.subr.bf16.mxu0 0
      %940 = vmatpush1.bf16.msra.mxu0 0
      %941 = vmatprep.subr.bf16.mxu0 0
      %942 = vmatpush1.bf16.msra.mxu0 0
      %943 = vmatprep.subr.bf16.mxu0 0
      %944 = vmatpush1.bf16.msra.mxu0 0
      %945 = vmatprep.subr.bf16.mxu0 0
      %946 = vmatpush1.bf16.msra.mxu0 0
      %947 = vmatprep.subr.bf16.mxu0 0
      %948 = vmatpush1.bf16.msra.mxu0 0
      %949 = vmatprep.subr.bf16.mxu0 0
      %950 = vmatpush1.bf16.msra.mxu0 0
      %951 = vmatprep.subr.bf16.mxu0 0
      %952 = vmatpush1.bf16.msra.mxu0 0
      %953 = vmatprep.subr.bf16.mxu0 0
      %954 = vmatpush1.bf16.msra.mxu0 0
      %955 = vmatprep.subr.bf16.mxu0 0
      %956 = vmatpush1.bf16.msra.mxu0 0
      %957 = vmatprep.subr.bf16.mxu0 0
      %958 = vmatpush1.bf16.msra.mxu0 0
      %959 = vmatprep.subr.bf16.mxu0 0
      %960 = vmatpush1.bf16.msra.mxu0 0
      %961 = vmatprep.subr.bf16.mxu0 0
      %962 = vmatpush1.bf16.msra.mxu0 0
      %963 = vmatprep.subr.bf16.mxu0 0
      %964 = vmatpush1.bf16.msra.mxu0 0
      %965 = vmatprep.mubr.bf16.mxu0 0
      %966 = vmatmul.mubr.bf16.gmra.mrb[0].mxu0 %v928
      %v967 = vpop.f32.mrb[0].mxu0
      %v968 = vadd.f32 0.0, %v967
      %v969 = vpop.f32.mrb[0].mxu0
      %v970 = vpop.f32.mrb[0].mxu0
      %v971 = vpop.f32.mrb[0].mxu0
      %972 = vdwg.mxu0
      %v973 = vpack.c.bf16 %v968, %v968
      %v974 = vpack.c.bf16 %v537, %v537
      %v976 = vsel %vm541, %v973, 0
      %v979 = vsel %vm608, %v974, 0
      %981 = vmatprep.subr.bf16.mxu0 0
      %982 = vmatpush1.bf16.msra.mxu0 %v979
      %983 = vmatprep.subr.bf16.mxu0 0
      %984 = vmatpush1.bf16.msra.mxu0 0
      %985 = vmatprep.subr.bf16.mxu0 0
      %986 = vmatpush1.bf16.msra.mxu0 0
      %987 = vmatprep.subr.bf16.mxu0 0
      %988 = vmatpush1.bf16.msra.mxu0 0
      %989 = vmatprep.subr.bf16.mxu0 0
      %990 = vmatpush1.bf16.msra.mxu0 0
      %991 = vmatprep.subr.bf16.mxu0 0
      %992 = vmatpush1.bf16.msra.mxu0 0
      %993 = vmatprep.subr.bf16.mxu0 0
      %994 = vmatpush1.bf16.msra.mxu0 0
      %995 = vmatprep.subr.bf16.mxu0 0
      %996 = vmatpush1.bf16.msra.mxu0 0
      %997 = vmatprep.subr.bf16.mxu0 0
      %998 = vmatpush1.bf16.msra.mxu0 0
      %999 = vmatprep.subr.bf16.mxu0 0
      %1000 = vmatpush1.bf16.msra.mxu0 0
      %1001 = vmatprep.subr.bf16.mxu0 0
      %1002 = vmatpush1.bf16.msra.mxu0 0
      %1003 = vmatprep.subr.bf16.mxu0 0
      %1004 = vmatpush1.bf16.msra.mxu0 0
      %1005 = vmatprep.subr.bf16.mxu0 0
      %1006 = vmatpush1.bf16.msra.mxu0 0
      %1007 = vmatprep.subr.bf16.mxu0 0
      %1008 = vmatpush1.bf16.msra.mxu0 0
      %1009 = vmatprep.subr.bf16.mxu0 0
      %1010 = vmatpush1.bf16.msra.mxu0 0
      %1011 = vmatprep.subr.bf16.mxu0 0
      %1012 = vmatpush1.bf16.msra.mxu0 0
      %1013 = vmatprep.mubr.bf16.mxu0 0
      %1014 = vmatmul.mubr.bf16.gmra.mrb[0].mxu0 %v976
      %v1015 = vpop.f32.mrb[0].mxu0
      %v1016 = vadd.f32 0.0, %v1015
      %v1017 = vpop.f32.mrb[0].mxu0
      %v1018 = vpop.f32.mrb[0].mxu0
      %v1019 = vpop.f32.mrb[0].mxu0
      %1020 = vdwg.mxu0
      %v1021 = vadd.f32 %v856, %v1016
      %1022 = vrot.lane.b32.xlu0 %v539, 104
      %v1023 = vpop.permute.xlu0 %1022
      %1024 = vrot.lane.b32.xlu0 %v540, 104
      %v1025 = vpop.permute.xlu0 %1024
      %v1027 = vsel %vm541, %v1023, 0
      %v1030 = vsel %vm541, %v1025, 0
      %1032 = vmatprep.subr.bf16.mxu0 0
      %1033 = vmatpush1.bf16.xpose.msra.mxu0 %v1030
      %1034 = vmatprep.subr.bf16.mxu0 0
      %1035 = vmatpush1.bf16.xpose.msra.mxu0 0
      %1036 = vmatprep.subr.bf16.mxu0 0
      %1037 = vmatpush1.bf16.xpose.msra.mxu0 0
      %1038 = vmatprep.subr.bf16.mxu0 0
      %1039 = vmatpush1.bf16.xpose.msra.mxu0 0
      %1040 = vmatprep.subr.bf16.mxu0 0
      %1041 = vmatpush1.bf16.xpose.msra.mxu0 0
      %1042 = vmatprep.subr.bf16.mxu0 0
      %1043 = vmatpush1.bf16.xpose.msra.mxu0 0
      %1044 = vmatprep.subr.bf16.mxu0 0
      %1045 = vmatpush1.bf16.xpose.msra.mxu0 0
      %1046 = vmatprep.subr.bf16.mxu0 0
      %1047 = vmatpush1.bf16.xpose.msra.mxu0 0
      %1048 = vmatprep.subr.bf16.mxu0 0
      %1049 = vmatpush1.bf16.xpose.msra.mxu0 0
      %1050 = vmatprep.subr.bf16.mxu0 0
      %1051 = vmatpush1.bf16.xpose.msra.mxu0 0
      %1052 = vmatprep.subr.bf16.mxu0 0
      %1053 = vmatpush1.bf16.xpose.msra.mxu0 0
      %1054 = vmatprep.subr.bf16.mxu0 0
      %1055 = vmatpush1.bf16.xpose.msra.mxu0 0
      %1056 = vmatprep.subr.bf16.mxu0 0
      %1057 = vmatpush1.bf16.xpose.msra.mxu0 0
      %1058 = vmatprep.subr.bf16.mxu0 0
      %1059 = vmatpush1.bf16.xpose.msra.mxu0 0
      %1060 = vmatprep.subr.bf16.mxu0 0
      %1061 = vmatpush1.bf16.xpose.msra.mxu0 0
      %1062 = vmatprep.subr.bf16.mxu0 0
      %1063 = vmatpush1.bf16.xpose.msra.mxu0 0
      %1064 = vmatprep.mubr.bf16.mxu0 0
      %1065 = vmatmul.mubr.bf16.gmra.mrb[0].mxu0 %v1027
      %v1066 = vpop.f32.mrb[0].mxu0
      %v1067 = vadd.f32 0.0, %v1066
      %v1068 = vpop.f32.mrb[0].mxu0
      %v1069 = vpop.f32.mrb[0].mxu0
      %v1070 = vpop.f32.mrb[0].mxu0
      %1071 = vdwg.mxu0
      %v1072 = vmul.f32 %v1067, 0.35355338
      %v1073 = vadd.f32 %v1072, %v534
      %v1074 = vsel %vm541, %v1073, -inf
      %1075 = vmax.xlane.f32.xlu0 %v1074
      %v1076 = vpop.xlane.xlu0 %1075
      %v1077 = vsub.f32 %v1073, %v1076
      %v1078 = vmul.f32 %v1077, 1.442695
      %v1079 = vpow.pop %v1078
      %v1080 = vsel %vm541, %v1079, 0.0
      %1081 = vadd.xlane.f32.xlu0 %v1080
      %v1082 = vpop.xlane.xlu0 %1081
      %v1083 = vrcp.pop %v1082
      %v1084 = vmul.f32 %v1079, %v1083
      %v1085 = vpack.c.bf16 %v1084, %v1084
      %1086 = vrot.lane.b32.xlu0 %v540, 72
      %v1087 = vpop.permute.xlu0 %1086
      %v1089 = vsel %vm541, %v1085, 0
      %v1092 = vsel %vm608, %v1087, 0
      %1094 = vmatprep.subr.bf16.mxu0 0
      %1095 = vmatpush1.bf16.msra.mxu0 %v1092
      %1096 = vmatprep.subr.bf16.mxu0 0
      %1097 = vmatpush1.bf16.msra.mxu0 0
      %1098 = vmatprep.subr.bf16.mxu0 0
      %1099 = vmatpush1.bf16.msra.mxu0 0
      %1100 = vmatprep.subr.bf16.mxu0 0
      %1101 = vmatpush1.bf16.msra.mxu0 0
      %1102 = vmatprep.subr.bf16.mxu0 0
      %1103 = vmatpush1.bf16.msra.mxu0 0
      %1104 = vmatprep.subr.bf16.mxu0 0
      %1105 = vmatpush1.bf16.msra.mxu0 0
      %1106 = vmatprep.subr.bf16.mxu0 0
      %1107 = vmatpush1.bf16.msra.mxu0 0
      %1108 = vmatprep.subr.bf16.mxu0 0
      %1109 = vmatpush1.bf16.msra.mxu0 0
      %1110 = vmatprep.subr.bf16.mxu0 0
      %1111 = vmatpush1.bf16.msra.mxu0 0
      %1112 = vmatprep.subr.bf16.mxu0 0
      %1113 = vmatpush1.bf16.msra.mxu0 0
      %1114 = vmatprep.subr.bf16.mxu0 0
      %1115 = vmatpush1.bf16.msra.mxu0 0
      %1116 = vmatprep.subr.bf16.mxu0 0
      %1117 = vmatpush1.bf16.msra.mxu0 0
      %1118 = vmatprep.subr.bf16.mxu0 0
      %1119 = vmatpush1.bf16.msra.mxu0 0
      %1120 = vmatprep.subr.bf16.mxu0 0
      %1121 = vmatpush1.bf16.msra.mxu0 0
      %1122 = vmatprep.subr.bf16.mxu0 0
      %1123 = vmatpush1.bf16.msra.mxu0 0
      %1124 = vmatprep.subr.bf16.mxu0 0
      %1125 = vmatpush1.bf16.msra.mxu0 0
      %1126 = vmatprep.mubr.bf16.mxu0 0
      %1127 = vmatmul.mubr.bf16.gmra.mrb[0].mxu0 %v1089
      %v1128 = vpop.f32.mrb[0].mxu0
      %v1129 = vadd.f32 0.0, %v1128
      %v1130 = vpop.f32.mrb[0].mxu0
      %v1131 = vpop.f32.mrb[0].mxu0
      %v1132 = vpop.f32.mrb[0].mxu0
      %1133 = vdwg.mxu0
      %v1134 = vpack.c.bf16 %v1129, %v1129
      %v1135 = vpack.c.bf16 %v538, %v538
      %v1137 = vsel %vm541, %v1134, 0
      %v1140 = vsel %vm608, %v1135, 0
      %1142 = vmatprep.subr.bf16.mxu0 0
      %1143 = vmatpush1.bf16.msra.mxu0 %v1140
      %1144 = vmatprep.subr.bf16.mxu0 0
      %1145 = vmatpush1.bf16.msra.mxu0 0
      %1146 = vmatprep.subr.bf16.mxu0 0
      %1147 = vmatpush1.bf16.msra.mxu0 0
      %1148 = vmatprep.subr.bf16.mxu0 0
      %1149 = vmatpush1.bf16.msra.mxu0 0
      %1150 = vmatprep.subr.bf16.mxu0 0
      %1151 = vmatpush1.bf16.msra.mxu0 0
      %1152 = vmatprep.subr.bf16.mxu0 0
      %1153 = vmatpush1.bf16.msra.mxu0 0
      %1154 = vmatprep.subr.bf16.mxu0 0
      %1155 = vmatpush1.bf16.msra.mxu0 0
      %1156 = vmatprep.subr.bf16.mxu0 0
      %1157 = vmatpush1.bf16.msra.mxu0 0
      %1158 = vmatprep.subr.bf16.mxu0 0
      %1159 = vmatpush1.bf16.msra.mxu0 0
      %1160 = vmatprep.subr.bf16.mxu0 0
      %1161 = vmatpush1.bf16.msra.mxu0 0
      %1162 = vmatprep.subr.bf16.mxu0 0
      %1163 = vmatpush1.bf16.msra.mxu0 0
      %1164 = vmatprep.subr.bf16.mxu0 0
      %1165 = vmatpush1.bf16.msra.mxu0 0
      %1166 = vmatprep.subr.bf16.mxu0 0
      %1167 = vmatpush1.bf16.msra.mxu0 0
      %1168 = vmatprep.subr.bf16.mxu0 0
      %1169 = vmatpush1.bf16.msra.mxu0 0
      %1170 = vmatprep.subr.bf16.mxu0 0
      %1171 = vmatpush1.bf16.msra.mxu0 0
      %1172 = vmatprep.subr.bf16.mxu0 0
      %1173 = vmatpush1.bf16.msra.mxu0 0
      %1174 = vmatprep.mubr.bf16.mxu0 0
      %1175 = vmatmul.mubr.bf16.gmra.mrb[0].mxu0 %v1137
      %v1176 = vpop.f32.mrb[0].mxu0
      %v1177 = vadd.f32 0.0, %v1176
      %v1178 = vpop.f32.mrb[0].mxu0
      %v1179 = vpop.f32.mrb[0].mxu0
      %v1180 = vpop.f32.mrb[0].mxu0
      %1181 = vdwg.mxu0
      %v1182 = vadd.f32 %v1021, %v1177
      %v1183 = vadd.f32 %v417, %v1182
      %v1184 = vld [vmem:[%s8] sm:$0x1]
      %v1186 = vlaneseq
      %v1187 = vshrl.u32 %v1186, 7
      %v1188 = vsub.s32 0, %v1187
      %v1189 = vrot.slane %v1184, %v1188
      %v1191 = vadd.f32 %v1183, %v1189
      %v1192 = vld [vmem:[%s9] sm:$0x1]
      %v1193 = vld [vmem:[%s10] sm:$0x1]
      %v1194 = vsel %vm433, %v1191, 0.0
      %1195 = vadd.xlane.f32.xlu0 %v1194
      %v1196 = vpop.xlane.xlu0 %1195
      %v1197 = vrcp.pop 32.0
      %v1198 = vmul.f32 %v1196, %v1197
      %v1199 = vsub.f32 %v1191, %v1198
      %v1200 = vmul.f32 %v1199, %v1199
      %v1201 = vsel %vm433, %v1200, 0.0
      %1202 = vadd.xlane.f32.xlu0 %v1201
      %v1203 = vpop.xlane.xlu0 %1202
      %v1204 = vmul.f32 %v1203, %v1197
      %v1205 = vadd.f32 %v1204, 1e-05
      %v1206 = vrsqrt.pop %v1205
      %v1207 = vmul.f32 %v1199, %v1206
      %v1209 = vlaneseq
      %v1210 = vshrl.u32 %v1209, 7
      %v1211 = vsub.s32 0, %v1210
      %v1212 = vrot.slane %v1192, %v1211
      %v1214 = vmul.f32 %v1207, %v1212
      %v1216 = vlaneseq
      %v1217 = vshrl.u32 %v1216, 7
      %v1218 = vsub.s32 0, %v1217
      %v1219 = vrot.slane %v1193, %v1218
      %v1221 = vadd.f32 %v1214, %v1219
      %1222 = vst.msk [vmem:[%s415] sm:$0xff] %vm433, %v1221
      %p1223 = scmp.lt.s32.totalorder %s22, 1
      %s1224 = scalar_select %p1223, %s22, 1
      %s1225 = smul.addr %s1224, 8
      %s1226 = scalar_lea.vmem %s11, %s1225
      // Predicated region
      $region65: #{transformer_forward.16} parent=63 // pred_check
        %p1227 = pneg %p286
      $region66: #{transformer_forward.16} parent=63 // pred_check_branch
        %1229 = sbr.rel (%p1227) target = $region68
      $region67: #{transformer_forward.16} parent=63 // pred_region
        _
      $region68: #{transformer_forward.16} parent=63 // pred_fallthru
        _
    $region64: #{transformer_forward.16} parent=5 // pred_fallthru
      _
    %p1230 = scmp.le.s32.totalorder 2, %s17
    // Predicated region
    $region69: #{transformer_forward.16} parent=5 // pred_check
      %p1231 = pneg %p1230
    $region70: #{transformer_forward.16} parent=5 // pred_check_branch
      %1233 = sbr.rel (%p1231) target = $region72
    $region71: #{transformer_forward.16} parent=5 // pred_region
      %s1234 = ssub.s32 %s17, 2
      // Predicated region
      $region73: #{transformer_forward.16} parent=71 // pred_check
        %p1235 = pneg %p292
      $region74: #{transformer_forward.16} parent=71 // pred_check_branch
        %1237 = sbr.rel (%p1235) target = $region76
      $region75: #{transformer_forward.16} parent=71 // pred_region
        %p1238 = scmp.lt.s32.totalorder %s23, 1
        %s1239 = scalar_select %p1238, %s23, 1
        %s1240 = smul.addr %s1239, 8
        %s1241 = scalar_lea.vmem %s11, %s1240
      $region76: #{transformer_forward.16} parent=71 // pred_fallthru
        _
    $region72: #{transformer_forward.16} parent=5 // pred_fallthru
      _
  $region6: #{transformer_forward.16} parent=0 // loop_footer
    %s21 = sadd.s32 1, %s17
  $region7: #{transformer_forward.16} parent=0 // loop_footer_branch
    %16 = sbr.rel target = $region3
  $region8: #{transformer_forward.16} parent=0 // loop_exit
    _

// kernel: transformer_forward.11
$region0: #{transformer_forward.11}
  #allocation0 [shape = 'u32[]', space=smem, size = 0x4, offset = 0x4, fixed_abs, tag = 'smem constant byte address 0x4 - core index']
  #allocation1 [shape = 'u32[144,128]{1,0:T(1,128)}', space=vmem, size = 0x12000, scoped, tag = 'internal scratch']
  %s0 = inlined_call_operand.vmem [shape: f32[2,8,32], index: 0, kind: input, shape index: {}]
  %s1 = inlined_call_operand.vmem [shape: f32[2,8,8], index: 1, kind: input, shape index: {}]
  %s2 = inlined_call_operand.vmem [shape: f32[32,96], index: 2, kind: input, shape index: {}]
  %s3 = inlined_call_operand.vmem [shape: f32[1,96], index: 3, kind: input, shape index: {}]
  %s4 = inlined_call_operand.vmem [shape: f32[32,32], index: 4, kind: input, shape index: {}]
  %s5 = inlined_call_operand.vmem [shape: f32[1,32], index: 5, kind: input, shape index: {}]
  %s6 = inlined_call_operand.vmem [shape: f32[1,32], index: 6, kind: input, shape index: {}]
  %s7 = inlined_call_operand.vmem [shape: f32[1,32], index: 7, kind: input, shape index: {}]
  %s8 = inlined_call_operand.vmem [shape: f32[2,8,32], index: 8, kind: output, shape index: {}]
  %s9 = sld [smem:[#allocation0]]
  $region65: #{transformer_forward.11} parent=0
    _
  %s11 = ssub.s32 1, %s9
  %s12 = scalar_select 0, %s11, %s9
  loop: start=0, step=1, limit=4
  $region2: #{transformer_forward.11} parent=0 // loop_pre_header
    _
  $region3: #{transformer_forward.11} parent=0 // loop_header
    %s14 = sphi 0, %s18
    %p15 = scmp.ge.s32.totalorder %s14, 4
    %s24 = sphi 0, %s26
    %s27 = sphi 0, %s24
    %s28 = sphi 0, %s27
    %s44 = sphi 0, %s28
    %s50 = sphi 0, %s52
    %s53 = sphi 0, %s50
    %s54 = sphi 0, %s53
    %s70 = sphi 0, %s54
    %s74 = sphi 0, %s74
    %s76 = sphi 0, %s74
    %s77 = sphi 0, %s76
    %s91 = sphi 0, %s77
    %s95 = sphi 0, %s95
    %s97 = sphi 0, %s95
    %s98 = sphi 0, %s97
    %s112 = sphi 0, %s98
    %s116 = sphi 0, %s116
    %s118 = sphi 0, %s116
    %s119 = sphi 0, %s118
    %s133 = sphi 0, %s119
    %s137 = sphi 0, %s137
    %s139 = sphi 0, %s137
    %s140 = sphi 0, %s139
    %s154 = sphi 0, %s140
    %s158 = sphi 0, %s158
    %s160 = sphi 0, %s158
    %s161 = sphi 0, %s160
    %s175 = sphi 0, %s161
    %s179 = sphi 0, %s179
    %s181 = sphi 0, %s179
    %s182 = sphi 0, %s181
    %s196 = sphi 0, %s182
    %s202 = sphi 0, %s204
    %s205 = sphi 0, %s202
    %s206 = sphi 0, %s205
    %s222 = sphi 0, %s206
  $region4: #{transformer_forward.11} parent=0 // loop_header_branch
    %17 = sbr.rel (%p15) target = $region8
  $region5: #{transformer_forward.11} parent=0 // loop_body
    %s19 = ssub.s32 %s14, 1
    %s20 = ssub.s32 %s14, 2
    %s21 = sadd.s32 %s14, 1
    %s22 = ssub.s32 %s14, %s21
    %p23 = scmp.eq.s32.totalorder %s22, 0
    %s25 = sadd.s32 %s24, 1
    %s26 = scalar_select %p23, %s24, %s25
    %p29 = pneg %p23
    %p30 = scmp.eq.s32.totalorder %s14, 1
    %p31 = por %p29, %p30
    %p32 = scmp.ne.s32.totalorder %s24, %s27
    %p33 = scmp.eq.s32.totalorder %s14, 0
    %p34 = por %p32, %p33
    %p35 = scmp.ne.s32.totalorder %s24, %s27
    %p36 = scmp.eq.s32.totalorder %s19, 1
    %p37 = por %p35, %p36
    %p38 = scmp.ne.s32.totalorder %s27, %s28
    %p39 = scmp.eq.s32.totalorder %s19, 0
    %p40 = por %p38, %p39
    %p41 = scmp.ne.s32.totalorder %s27, %s28
    %p42 = scmp.eq.s32.totalorder %s20, 1
    %p43 = por %p41, %p42
    %p45 = scmp.ne.s32.totalorder %s28, %s44
    %p46 = scmp.eq.s32.totalorder %s20, 0
    %p47 = por %p45, %p46
    %s48 = ssub.s32 %s14, %s21
    %p49 = scmp.eq.s32.totalorder %s48, 0
    %s51 = sadd.s32 %s50, 1
    %s52 = scalar_select %p49, %s50, %s51
    %p55 = pneg %p49
    %p56 = scmp.eq.s32.totalorder %s14, 1
    %p57 = por %p55, %p56
    %p58 = scmp.ne.s32.totalorder %s50, %s53
    %p59 = scmp.eq.s32.totalorder %s14, 0
    %p60 = por %p58, %p59
    %p61 = scmp.ne.s32.totalorder %s50, %s53
    %p62 = scmp.eq.s32.totalorder %s19, 1
    %p63 = por %p61, %p62
    %p64 = scmp.ne.s32.totalorder %s53, %s54
    %p65 = scmp.eq.s32.totalorder %s19, 0
    %p66 = por %p64, %p65
    %p67 = scmp.ne.s32.totalorder %s53, %s54
    %p68 = scmp.eq.s32.totalorder %s20, 1
    %p69 = por %p67, %p68
    %p71 = scmp.ne.s32.totalorder %s54, %s70
    %p72 = scmp.eq.s32.totalorder %s20, 0
    %p73 = por %p71, %p72
    %s75 = sadd.s32 %s74, 1
    %p78 = scmp.eq.s32.totalorder %s14, 1
    %p79 = scmp.ne.s32.totalorder %s74, %s76
    %p80 = scmp.eq.s32.totalorder %s14, 0
    %p81 = por %p79, %p80
    %p82 = scmp.ne.s32.totalorder %s74, %s76
    %p83 = scmp.eq.s32.totalorder %s19, 1
    %p84 = por %p82, %p83
    %p85 = scmp.ne.s32.totalorder %s76, %s77
    %p86 = scmp.eq.s32.totalorder %s19, 0
    %p87 = por %p85, %p86
    %p88 = scmp.ne.s32.totalorder %s76, %s77
    %p89 = scmp.eq.s32.totalorder %s20, 1
    %p90 = por %p88, %p89
    %p92 = scmp.ne.s32.totalorder %s77, %s91
    %p93 = scmp.eq.s32.totalorder %s20, 0
    %p94 = por %p92, %p93
    %s96 = sadd.s32 %s95, 1
    %p99 = scmp.eq.s32.totalorder %s14, 1
    %p100 = scmp.ne.s32.totalorder %s95, %s97
    %p101 = scmp.eq.s32.totalorder %s14, 0
    %p102 = por %p100, %p101
    %p103 = scmp.ne.s32.totalorder %s95, %s97
    %p104 = scmp.eq.s32.totalorder %s19, 1
    %p105 = por %p103, %p104
    %p106 = scmp.ne.s32.totalorder %s97, %s98
    %p107 = scmp.eq.s32.totalorder %s19, 0
    %p108 = por %p106, %p107
    %p109 = scmp.ne.s32.totalorder %s97, %s98
    %p110 = scmp.eq.s32.totalorder %s20, 1
    %p111 = por %p109, %p110
    %p113 = scmp.ne.s32.totalorder %s98, %s112
    %p114 = scmp.eq.s32.totalorder %s20, 0
    %p115 = por %p113, %p114
    %s117 = sadd.s32 %s116, 1
    %p120 = scmp.eq.s32.totalorder %s14, 1
    %p121 = scmp.ne.s32.totalorder %s116, %s118
    %p122 = scmp.eq.s32.totalorder %s14, 0
    %p123 = por %p121, %p122
    %p124 = scmp.ne.s32.totalorder %s116, %s118
    %p125 = scmp.eq.s32.totalorder %s19, 1
    %p126 = por %p124, %p125
    %p127 = scmp.ne.s32.totalorder %s118, %s119
    %p128 = scmp.eq.s32.totalorder %s19, 0
    %p129 = por %p127, %p128
    %p130 = scmp.ne.s32.totalorder %s118, %s119
    %p131 = scmp.eq.s32.totalorder %s20, 1
    %p132 = por %p130, %p131
    %p134 = scmp.ne.s32.totalorder %s119, %s133
    %p135 = scmp.eq.s32.totalorder %s20, 0
    %p136 = por %p134, %p135
    %s138 = sadd.s32 %s137, 1
    %p141 = scmp.eq.s32.totalorder %s14, 1
    %p142 = scmp.ne.s32.totalorder %s137, %s139
    %p143 = scmp.eq.s32.totalorder %s14, 0
    %p144 = por %p142, %p143
    %p145 = scmp.ne.s32.totalorder %s137, %s139
    %p146 = scmp.eq.s32.totalorder %s19, 1
    %p147 = por %p145, %p146
    %p148 = scmp.ne.s32.totalorder %s139, %s140
    %p149 = scmp.eq.s32.totalorder %s19, 0
    %p150 = por %p148, %p149
    %p151 = scmp.ne.s32.totalorder %s139, %s140
    %p152 = scmp.eq.s32.totalorder %s20, 1
    %p153 = por %p151, %p152
    %p155 = scmp.ne.s32.totalorder %s140, %s154
    %p156 = scmp.eq.s32.totalorder %s20, 0
    %p157 = por %p155, %p156
    %s159 = sadd.s32 %s158, 1
    %p162 = scmp.eq.s32.totalorder %s14, 1
    %p163 = scmp.ne.s32.totalorder %s158, %s160
    %p164 = scmp.eq.s32.totalorder %s14, 0
    %p165 = por %p163, %p164
    %p166 = scmp.ne.s32.totalorder %s158, %s160
    %p167 = scmp.eq.s32.totalorder %s19, 1
    %p168 = por %p166, %p167
    %p169 = scmp.ne.s32.totalorder %s160, %s161
    %p170 = scmp.eq.s32.totalorder %s19, 0
    %p171 = por %p169, %p170
    %p172 = scmp.ne.s32.totalorder %s160, %s161
    %p173 = scmp.eq.s32.totalorder %s20, 1
    %p174 = por %p172, %p173
    %p176 = scmp.ne.s32.totalorder %s161, %s175
    %p177 = scmp.eq.s32.totalorder %s20, 0
    %p178 = por %p176, %p177
    %s180 = sadd.s32 %s179, 1
    %p183 = scmp.eq.s32.totalorder %s14, 1
    %p184 = scmp.ne.s32.totalorder %s179, %s181
    %p185 = scmp.eq.s32.totalorder %s14, 0
    %p186 = por %p184, %p185
    %p187 = scmp.ne.s32.totalorder %s179, %s181
    %p188 = scmp.eq.s32.totalorder %s19, 1
    %p189 = por %p187, %p188
    %p190 = scmp.ne.s32.totalorder %s181, %s182
    %p191 = scmp.eq.s32.totalorder %s19, 0
    %p192 = por %p190, %p191
    %p193 = scmp.ne.s32.totalorder %s181, %s182
    %p194 = scmp.eq.s32.totalorder %s20, 1
    %p195 = por %p193, %p194
    %p197 = scmp.ne.s32.totalorder %s182, %s196
    %p198 = scmp.eq.s32.totalorder %s20, 0
    %p199 = por %p197, %p198
    %s200 = ssub.s32 %s14, %s21
    %p201 = scmp.eq.s32.totalorder %s200, 0
    %s203 = sadd.s32 %s202, 1
    %s204 = scalar_select %p201, %s202, %s203
    %p207 = pneg %p201
    %p208 = scmp.eq.s32.totalorder %s14, 1
    %p209 = por %p207, %p208
    %p210 = scmp.ne.s32.totalorder %s202, %s205
    %p211 = scmp.eq.s32.totalorder %s14, 0
    %p212 = por %p210, %p211
    %p213 = scmp.ne.s32.totalorder %s202, %s205
    %p214 = scmp.eq.s32.totalorder %s19, 1
    %p215 = por %p213, %p214
    %p216 = scmp.ne.s32.totalorder %s205, %s206
    %p217 = scmp.eq.s32.totalorder %s19, 0
    %p218 = por %p216, %p217
    %p219 = scmp.ne.s32.totalorder %s205, %s206
    %p220 = scmp.eq.s32.totalorder %s20, 1
    %p221 = por %p219, %p220
    %p223 = scmp.ne.s32.totalorder %s206, %s222
    %p224 = scmp.eq.s32.totalorder %s20, 0
    %p225 = por %p223, %p224
    %p226 = scmp.le.s32.totalorder 1, %s14
    %p227 = scmp.lt.s32.totalorder %s14, 3
    %p228 = pnand %p226, %p227
    %p229 = pneg %p228
    // Predicated region
    $region9: #{transformer_forward.11} parent=5 // pred_check
      _
    $region10: #{transformer_forward.11} parent=5 // pred_check_branch
      %231 = sbr.rel (%p228) target = $region12
    $region11: #{transformer_forward.11} parent=5 // pred_region
      %s232 = ssub.s32 %s14, 1
      // Predicated region
      $region13: #{transformer_forward.11} parent=11 // pred_check
        %p233 = pneg %p87
      $region14: #{transformer_forward.11} parent=11 // pred_check_branch
        %235 = sbr.rel (%p233) target = $region16
      $region15: #{transformer_forward.11} parent=11 // pred_region
        _
      $region16: #{transformer_forward.11} parent=11 // pred_fallthru
        _
      // Predicated region
      $region17: #{transformer_forward.11} parent=11 // pred_check
        %p236 = pneg %p108
      $region18: #{transformer_forward.11} parent=11 // pred_check_branch
        %238 = sbr.rel (%p236) target = $region20
      $region19: #{transformer_forward.11} parent=11 // pred_region
        _
      $region20: #{transformer_forward.11} parent=11 // pred_fallthru
        _
      // Predicated region
      $region21: #{transformer_forward.11} parent=11 // pred_check
        %p239 = pneg %p129
      $region22: #{transformer_forward.11} parent=11 // pred_check_branch
        %241 = sbr.rel (%p239) target = $region24
      $region23: #{transformer_forward.11} parent=11 // pred_region
        _
      $region24: #{transformer_forward.11} parent=11 // pred_fallthru
        _
      // Predicated region
      $region25: #{transformer_forward.11} parent=11 // pred_check
        %p242 = pneg %p150
      $region26: #{transformer_forward.11} parent=11 // pred_check_branch
        %244 = sbr.rel (%p242) target = $region28
      $region27: #{transformer_forward.11} parent=11 // pred_region
        _
      $region28: #{transformer_forward.11} parent=11 // pred_fallthru
        _
      // Predicated region
      $region29: #{transformer_forward.11} parent=11 // pred_check
        %p245 = pneg %p171
      $region30: #{transformer_forward.11} parent=11 // pred_check_branch
        %247 = sbr.rel (%p245) target = $region32
      $region31: #{transformer_forward.11} parent=11 // pred_region
        _
      $region32: #{transformer_forward.11} parent=11 // pred_fallthru
        _
      // Predicated region
      $region33: #{transformer_forward.11} parent=11 // pred_check
        %p248 = pneg %p192
      $region34: #{transformer_forward.11} parent=11 // pred_check_branch
        %250 = sbr.rel (%p248) target = $region36
      $region35: #{transformer_forward.11} parent=11 // pred_region
        _
      $region36: #{transformer_forward.11} parent=11 // pred_fallthru
        _
    $region12: #{transformer_forward.11} parent=5 // pred_fallthru
      _
    %p251 = scmp.lt.s32.totalorder %s14, 2
    // Predicated region
    $region37: #{transformer_forward.11} parent=5 // pred_check
      %p252 = pneg %p251
    $region38: #{transformer_forward.11} parent=5 // pred_check_branch
      %254 = sbr.rel (%p252) target = $region40
    $region39: #{transformer_forward.11} parent=5 // pred_region
      // Predicated region
      $region41: #{transformer_forward.11} parent=39 // pred_check
        %p255 = pneg %p34
      $region42: #{transformer_forward.11} parent=39 // pred_check_branch
        %257 = sbr.rel (%p255) target = $region44
      $region43: #{transformer_forward.11} parent=39 // pred_region
        %p258 = scmp.lt.s32.totalorder %s14, 1
        %s259 = scalar_select %p258, %s14, 1
        %s260 = smul.addr %s259, 8
        %s261 = scalar_lea.vmem %s0, %s260
      $region44: #{transformer_forward.11} parent=39 // pred_fallthru
        _
      // Predicated region
      $region45: #{transformer_forward.11} parent=39 // pred_check
        %p262 = pneg %p60
      $region46: #{transformer_forward.11} parent=39 // pred_check_branch
        %264 = sbr.rel (%p262) target = $region48
      $region47: #{transformer_forward.11} parent=39 // pred_region
        %p265 = scmp.lt.s32.totalorder %s14, 1
        %s266 = scalar_select %p265, %s14, 1
        %s267 = smul.addr %s266, 8
        %s268 = scalar_lea.vmem %s1, %s267
      $region48: #{transformer_forward.11} parent=39 // pred_fallthru
        _
    $region40: #{transformer_forward.11} parent=5 // pred_fallthru
      _
    %p269 = scmp.le.s32.totalorder 1, %s14
    %p270 = scmp.lt.s32.totalorder %s14, 3
    %p271 = pnand %p269, %p270
    %p272 = pneg %p271
    // Predicated region
    $region49: #{transformer_forward.11} parent=5 // pred_check
      _
    $region50: #{transformer_forward.11} parent=5 // pred_check_branch
      %274 = sbr.rel (%p271) target = $region52
    $region51: #{transformer_forward.11} parent=5 // pred_region
      %s275 = ssub.s32 %s14, 1
      %p276 = scmp.lt.s32.totalorder %s19, 1
      %s277 = scalar_select %p276, %s19, 1
      %s278 = smul.addr %s277, 8
      %s279 = scalar_lea.vmem %s0, %s278
      %p280 = pneg %p40
      %p281 = pneg %p37
      %p282 = scmp.lt.s32.totalorder %s19, 1
      %s283 = scalar_select %p282, %s19, 1
      %s284 = smul.addr %s283, 8
      %s285 = scalar_lea.vmem %s1, %s284
      %p286 = pneg %p66
      %p287 = pneg %p63
      %p288 = pneg %p87
      %p289 = pneg %p84
      %p290 = pneg %p108
      %p291 = pneg %p105
      %p292 = pneg %p129
      %p293 = pneg %p126
      %p294 = pneg %p150
      %p295 = pneg %p147
      %p296 = pneg %p171
      %p297 = pneg %p168
      %p298 = pneg %p192
      %p299 = pneg %p189
      %p300 = pneg %p218
      %p301 = pneg %p215
      %p302 = scmp.lt.s32.totalorder %s19, 1
      %s303 = scalar_select %p302, %s19, 1
      %s304 = smul.addr %s303, 8
      %s305 = scalar_lea.vmem %s8, %s304
      %p306 = scmp.lt.s32.totalorder %s19, 1
      %s307 = scalar_select %p306, %s19, 1
      %s308 = smul.addr %s307, 8
      %s309 = scalar_lea.vmem %s0, %s308
      %p310 = scmp.lt.s32.totalorder %s19, 1
      %s311 = scalar_select %p310, %s19, 1
      %s312 = smul.addr %s311, 8
      %s313 = scalar_lea.vmem %s1, %s312
      %p314 = scmp.lt.s32.totalorder %s19, 1
      %s315 = scalar_select %p314, %s19, 1
      %s316 = smul.addr %s315, 8
      %s317 = scalar_lea.vmem %s8, %s316
      %v319 = vld [vmem:[%s309] sm:$0xff]
      %v320 = vld [vmem:[%s2] sm:$0xff]
      %v321 = vld [vmem:[%s2 + $0x8] sm:$0xff]
      %v322 = vld [vmem:[%s2 + $0x10] sm:$0xff]
      %v323 = vld [vmem:[%s2 + $0x18] sm:$0xff]
      %v324 = vpack.c.bf16 %v319, %v319
      %v325 = vpack.c.bf16 %v321, %v320
      %v326 = vpack.c.bf16 %v323, %v322
      %v327 = vld [vmem:[%s3] sm:$0x1]
      %v329 = vlaneseq
      %v330 = vshrl.u32 %v329, 7
      %v331 = vsub.s32 0, %v330
      %v332 = vrot.slane %v327, %v331
      %vm334 = vcmask 261120
      %v336 = vsel %vm334, %v324, 0
      %338 = vmatprep.subr.bf16.mxu0 0
      %339 = vmatpush1.bf16.msra.mxu0 %v325
      %340 = vmatprep.subr.bf16.mxu0 0
      %341 = vmatpush1.bf16.msra.mxu0 %v326
      %342 = vmatprep.subr.bf16.mxu0 0
      %343 = vmatpush1.bf16.msra.mxu0 0
      %344 = vmatprep.subr.bf16.mxu0 0
      %345 = vmatpush1.bf16.msra.mxu0 0
      %346 = vmatprep.subr.bf16.mxu0 0
      %347 = vmatpush1.bf16.msra.mxu0 0
      %348 = vmatprep.subr.bf16.mxu0 0
      %349 = vmatpush1.bf16.msra.mxu0 0
      %350 = vmatprep.subr.bf16.mxu0 0
      %351 = vmatpush1.bf16.msra.mxu0 0
      %352 = vmatprep.subr.bf16.mxu0 0
      %353 = vmatpush1.bf16.msra.mxu0 0
      %354 = vmatprep.subr.bf16.mxu0 0
      %355 = vmatpush1.bf16.msra.mxu0 0
      %356 = vmatprep.subr.bf16.mxu0 0
      %357 = vmatpush1.bf16.msra.mxu0 0
      %358 = vmatprep.subr.bf16.mxu0 0
      %359 = vmatpush1.bf16.msra.mxu0 0
      %360 = vmatprep.subr.bf16.mxu0 0
      %361 = vmatpush1.bf16.msra.mxu0 0
      %362 = vmatprep.subr.bf16.mxu0 0
      %363 = vmatpush1.bf16.msra.mxu0 0
      %364 = vmatprep.subr.bf16.mxu0 0
      %365 = vmatpush1.bf16.msra.mxu0 0
      %366 = vmatprep.subr.bf16.mxu0 0
      %367 = vmatpush1.bf16.msra.mxu0 0
      %368 = vmatprep.subr.bf16.mxu0 0
      %369 = vmatpush1.bf16.msra.mxu0 0
      %370 = vmatprep.mubr.bf16.mxu0 0
      %371 = vmatmul.mubr.bf16.gmra.mrb[0].mxu0 %v336
      %v372 = vpop.f32.mrb[0].mxu0
      %v373 = vadd.f32 %v332, %v372
      %v374 = vpop.f32.mrb[0].mxu0
      %v375 = vpop.f32.mrb[0].mxu0
      %v376 = vpop.f32.mrb[0].mxu0
      %377 = vdwg.mxu0
      %v378 = vld [vmem:[%s313] sm:$0xff]
      %v379 = vld [vmem:[%s4] sm:$0xff]
      %v380 = vld [vmem:[%s4 + $0x8] sm:$0xff]
      %v381 = vld [vmem:[%s4 + $0x10] sm:$0xff]
      %v382 = vld [vmem:[%s4 + $0x18] sm:$0xff]
      %v383 = vpack.c.bf16 %v373, %v373
      %385 = vrot.lane.b32.xlu0 %v383, 96
      %v386 = vpop.permute.xlu0 %385
      %vm387 = vcmask 64512
      %v389 = vsel %vm387, %v383, 0
      %v392 = vsel %vm387, %v386, 0
      %394 = vmatprep.subr.bf16.mxu0 0
      %395 = vmatpush1.bf16.xpose.msra.mxu0 %v392
      %396 = vmatprep.subr.bf16.mxu0 0
      %397 = vmatpush1.bf16.xpose.msra.mxu0 0
      %398 = vmatprep.subr.bf16.mxu0 0
      %399 = vmatpush1.bf16.xpose.msra.mxu0 0
      %400 = vmatprep.subr.bf16.mxu0 0
      %401 = vmatpush1.bf16.xpose.msra.mxu0 0
      %402 = vmatprep.subr.bf16.mxu0 0
      %403 = vmatpush1.bf16.xpose.msra.mxu0 0
      %404 = vmatprep.subr.bf16.mxu0 0
      %405 = vmatpush1.bf16.xpose.msra.mxu0 0
      %406 = vmatprep.subr.bf16.mxu0 0
      %407 = vmatpush1.bf16.xpose.msra.mxu0 0
      %408 = vmatprep.subr.bf16.mxu0 0
      %409 = vmatpush1.bf16.xpose.msra.mxu0 0
      %410 = vmatprep.subr.bf16.mxu0 0
      %411 = vmatpush1.bf16.xpose.msra.mxu0 0
      %412 = vmatprep.subr.bf16.mxu0 0
      %413 = vmatpush1.bf16.xpose.msra.mxu0 0
      %414 = vmatprep.subr.bf16.mxu0 0
      %415 = vmatpush1.bf16.xpose.msra.mxu0 0
      %416 = vmatprep.subr.bf16.mxu0 0
      %417 = vmatpush1.bf16.xpose.msra.mxu0 0
      %418 = vmatprep.subr.bf16.mxu0 0
      %419 = vmatpush1.bf16.xpose.msra.mxu0 0
      %420 = vmatprep.subr.bf16.mxu0 0
      %421 = vmatpush1.bf16.xpose.msra.mxu0 0
      %422 = vmatprep.subr.bf16.mxu0 0
      %423 = vmatpush1.bf16.xpose.msra.mxu0 0
      %424 = vmatprep.subr.bf16.mxu0 0
      %425 = vmatpush1.bf16.xpose.msra.mxu0 0
      %426 = vmatprep.mubr.bf16.mxu0 0
      %427 = vmatmul.mubr.bf16.gmra.mrb[0].mxu0 %v389
      %v428 = vpop.f32.mrb[0].mxu0
      %v429 = vadd.f32 0.0, %v428
      %v430 = vpop.f32.mrb[0].mxu0
      %v431 = vpop.f32.mrb[0].mxu0
      %v432 = vpop.f32.mrb[0].mxu0
      %433 = vdwg.mxu0
      %v434 = vmul.f32 %v429, 0.35355338
      %v435 = vadd.f32 %v434, %v378
      %v436 = vsel %vm387, %v435, -inf
      %437 = vmax.xlane.f32.xlu0 %v436
      %v438 = vpop.xlane.xlu0 %437
      %v439 = vsub.f32 %v435, %v438
      %v440 = vmul.f32 %v439, 1.442695
      %v441 = vpow.pop %v440
      %v442 = vsel %vm387, %v441, 0.0
      %443 = vadd.xlane.f32.xlu0 %v442
      %v444 = vpop.xlane.xlu0 %443
      %v445 = vrcp.pop %v444
      %v446 = vmul.f32 %v441, %v445
      %v447 = vpack.c.bf16 %v446, %v446
      %448 = vrot.lane.b32.xlu0 %v383, 64
      %v449 = vpop.permute.xlu0 %448
      %v451 = vsel %vm387, %v447, 0
      %vm453 = vcmask 1043456
      %v455 = vsel %vm453, %v449, 0
      %457 = vmatprep.subr.bf16.mxu0 0
      %458 = vmatpush1.bf16.msra.mxu0 %v455
      %459 = vmatprep.subr.bf16.mxu0 0
      %460 = vmatpush1.bf16.msra.mxu0 0
      %461 = vmatprep.subr.bf16.mxu0 0
      %462 = vmatpush1.bf16.msra.mxu0 0
      %463 = vmatprep.subr.bf16.mxu0 0
      %464 = vmatpush1.bf16.msra.mxu0 0
      %465 = vmatprep.subr.bf16.mxu0 0
      %466 = vmatpush1.bf16.msra.mxu0 0
      %467 = vmatprep.subr.bf16.mxu0 0
      %468 = vmatpush1.bf16.msra.mxu0 0
      %469 = vmatprep.subr.bf16.mxu0 0
      %470 = vmatpush1.bf16.msra.mxu0 0
      %471 = vmatprep.subr.bf16.mxu0 0
      %472 = vmatpush1.bf16.msra.mxu0 0
      %473 = vmatprep.subr.bf16.mxu0 0
      %474 = vmatpush1.bf16.msra.mxu0 0
      %475 = vmatprep.subr.bf16.mxu0 0
      %476 = vmatpush1.bf16.msra.mxu0 0
      %477 = vmatprep.subr.bf16.mxu0 0
      %478 = vmatpush1.bf16.msra.mxu0 0
      %479 = vmatprep.subr.bf16.mxu0 0
      %480 = vmatpush1.bf16.msra.mxu0 0
      %481 = vmatprep.subr.bf16.mxu0 0
      %482 = vmatpush1.bf16.msra.mxu0 0
      %483 = vmatprep.subr.bf16.mxu0 0
      %484 = vmatpush1.bf16.msra.mxu0 0
      %485 = vmatprep.subr.bf16.mxu0 0
      %486 = vmatpush1.bf16.msra.mxu0 0
      %487 = vmatprep.subr.bf16.mxu0 0
      %488 = vmatpush1.bf16.msra.mxu0 0
      %489 = vmatprep.mubr.bf16.mxu0 0
      %490 = vmatmul.mubr.bf16.gmra.mrb[0].mxu0 %v451
      %v491 = vpop.f32.mrb[0].mxu0
      %v492 = vadd.f32 0.0, %v491
      %v493 = vpop.f32.mrb[0].mxu0
      %v494 = vpop.f32.mrb[0].mxu0
      %v495 = vpop.f32.mrb[0].mxu0
      %496 = vdwg.mxu0
      %v497 = vpack.c.bf16 %v492, %v492
      %v498 = vpack.c.bf16 %v379, %v379
      %499 = vrot.lane.b32.xlu0 %v383, 120
      %v500 = vpop.permute.xlu0 %499
      %501 = vrot.lane.b32.xlu0 %v383, 88
      %v502 = vpop.permute.xlu0 %501
      %v504 = vsel %vm387, %v500, 0
      %v507 = vsel %vm387, %v502, 0
      %509 = vmatprep.subr.bf16.mxu0 0
      %510 = vmatpush1.bf16.xpose.msra.mxu0 %v507
      %511 = vmatprep.subr.bf16.mxu0 0
      %512 = vmatpush1.bf16.xpose.msra.mxu0 0
      %513 = vmatprep.subr.bf16.mxu0 0
      %514 = vmatpush1.bf16.xpose.msra.mxu0 0
      %515 = vmatprep.subr.bf16.mxu0 0
      %516 = vmatpush1.bf16.xpose.msra.mxu0 0
      %517 = vmatprep.subr.bf16.mxu0 0
      %518 = vmatpush1.bf16.xpose.msra.mxu0 0
      %519 = vmatprep.subr.bf16.mxu0 0
      %520 = vmatpush1.bf16.xpose.msra.mxu0 0
      %521 = vmatprep.subr.bf16.mxu0 0
      %522 = vmatpush1.bf16.xpose.msra.mxu0 0
      %523 = vmatprep.subr.bf16.mxu0 0
      %524 = vmatpush1.bf16.xpose.msra.mxu0 0
      %525 = vmatprep.subr.bf16.mxu0 0
      %526 = vmatpush1.bf16.xpose.msra.mxu0 0
      %527 = vmatprep.subr.bf16.mxu0 0
      %528 = vmatpush1.bf16.xpose.msra.mxu0 0
      %529 = vmatprep.subr.bf16.mxu0 0
      %530 = vmatpush1.bf16.xpose.msra.mxu0 0
      %531 = vmatprep.subr.bf16.mxu0 0
      %532 = vmatpush1.bf16.xpose.msra.mxu0 0
      %533 = vmatprep.subr.bf16.mxu0 0
      %534 = vmatpush1.bf16.xpose.msra.mxu0 0
      %535 = vmatprep.subr.bf16.mxu0 0
      %536 = vmatpush1.bf16.xpose.msra.mxu0 0
      %537 = vmatprep.subr.bf16.mxu0 0
      %538 = vmatpush1.bf16.xpose.msra.mxu0 0
      %539 = vmatprep.subr.bf16.mxu0 0
      %540 = vmatpush1.bf16.xpose.msra.mxu0 0
      %541 = vmatprep.mubr.bf16.mxu0 0
      %542 = vmatmul.mubr.bf16.gmra.mrb[0].mxu0 %v504
      %v543 = vpop.f32.mrb[0].mxu0
      %v544 = vadd.f32 0.0, %v543
      %v545 = vpop.f32.mrb[0].mxu0
      %v546 = vpop.f32.mrb[0].mxu0
      %v547 = vpop.f32.mrb[0].mxu0
      %548 = vdwg.mxu0
      %v549 = vmul.f32 %v544, 0.35355338
      %v550 = vadd.f32 %v549, %v378
      %v551 = vsel %vm387, %v550, -inf
      %552 = vmax.xlane.f32.xlu0 %v551
      %v553 = vpop.xlane.xlu0 %552
      %v554 = vsub.f32 %v550, %v553
      %v555 = vmul.f32 %v554, 1.442695
      %v556 = vpow.pop %v555
      %v557 = vsel %vm387, %v556, 0.0
      %558 = vadd.xlane.f32.xlu0 %v557
      %v559 = vpop.xlane.xlu0 %558
      %v560 = vrcp.pop %v559
      %v561 = vmul.f32 %v556, %v560
      %v562 = vpack.c.bf16 %v561, %v561
      %563 = vrot.lane.b32.xlu0 %v383, 56
      %v564 = vpop.permute.xlu0 %563
      %v566 = vsel %vm387, %v562, 0
      %v569 = vsel %vm453, %v564, 0
      %571 = vmatprep.subr.bf16.mxu0 0
      %572 = vmatpush1.bf16.msra.mxu0 %v569
      %573 = vmatprep.subr.bf16.mxu0 0
      %574 = vmatpush1.bf16.msra.mxu0 0
      %575 = vmatprep.subr.bf16.mxu0 0
      %576 = vmatpush1.bf16.msra.mxu0 0
      %577 = vmatprep.subr.bf16.mxu0 0
      %578 = vmatpush1.bf16.msra.mxu0 0
      %579 = vmatprep.subr.bf16.mxu0 0
      %580 = vmatpush1.bf16.msra.mxu0 0
      %581 = vmatprep.subr.bf16.mxu0 0
      %582 = vmatpush1.bf16.msra.mxu0 0
      %583 = vmatprep.subr.bf16.mxu0 0
      %584 = vmatpush1.bf16.msra.mxu0 0
      %585 = vmatprep.subr.bf16.mxu0 0
      %586 = vmatpush1.bf16.msra.mxu0 0
      %587 = vmatprep.subr.bf16.mxu0 0
      %588 = vmatpush1.bf16.msra.mxu0 0
      %589 = vmatprep.subr.bf16.mxu0 0
      %590 = vmatpush1.bf16.msra.mxu0 0
      %591 = vmatprep.subr.bf16.mxu0 0
      %592 = vmatpush1.bf16.msra.mxu0 0
      %593 = vmatprep.subr.bf16.mxu0 0
      %594 = vmatpush1.bf16.msra.mxu0 0
      %595 = vmatprep.subr.bf16.mxu0 0
      %596 = vmatpush1.bf16.msra.mxu0 0
      %597 = vmatprep.subr.bf16.mxu0 0
      %598 = vmatpush1.bf16.msra.mxu0 0
      %599 = vmatprep.subr.bf16.mxu0 0
      %600 = vmatpush1.bf16.msra.mxu0 0
      %601 = vmatprep.subr.bf16.mxu0 0
      %602 = vmatpush1.bf16.msra.mxu0 0
      %603 = vmatprep.mubr.bf16.mxu0 0
      %604 = vmatmul.mubr.bf16.gmra.mrb[0].mxu0 %v566
      %v605 = vpop.f32.mrb[0].mxu0
      %v606 = vadd.f32 0.0, %v605
      %v607 = vpop.f32.mrb[0].mxu0
      %v608 = vpop.f32.mrb[0].mxu0
      %v609 = vpop.f32.mrb[0].mxu0
      %610 = vdwg.mxu0
      %v611 = vpack.c.bf16 %v606, %v606
      %v612 = vpack.c.bf16 %v380, %v380
      %v614 = vsel %vm387, %v611, 0
      %v617 = vsel %vm453, %v612, 0
      %619 = vmatprep.subr.bf16.mxu0 0
      %620 = vmatpush1.bf16.msra.mxu0 %v617
      %621 = vmatprep.subr.bf16.mxu0 0
      %622 = vmatpush1.bf16.msra.mxu0 0
      %623 = vmatprep.subr.bf16.mxu0 0
      %624 = vmatpush1.bf16.msra.mxu0 0
      %625 = vmatprep.subr.bf16.mxu0 0
      %626 = vmatpush1.bf16.msra.mxu0 0
      %627 = vmatprep.subr.bf16.mxu0 0
      %628 = vmatpush1.bf16.msra.mxu0 0
      %629 = vmatprep.subr.bf16.mxu0 0
      %630 = vmatpush1.bf16.msra.mxu0 0
      %631 = vmatprep.subr.bf16.mxu0 0
      %632 = vmatpush1.bf16.msra.mxu0 0
      %633 = vmatprep.subr.bf16.mxu0 0
      %634 = vmatpush1.bf16.msra.mxu0 0
      %635 = vmatprep.subr.bf16.mxu0 0
      %636 = vmatpush1.bf16.msra.mxu0 0
      %637 = vmatprep.subr.bf16.mxu0 0
      %638 = vmatpush1.bf16.msra.mxu0 0
      %639 = vmatprep.subr.bf16.mxu0 0
      %640 = vmatpush1.bf16.msra.mxu0 0
      %641 = vmatprep.subr.bf16.mxu0 0
      %642 = vmatpush1.bf16.msra.mxu0 0
      %643 = vmatprep.subr.bf16.mxu0 0
      %644 = vmatpush1.bf16.msra.mxu0 0
      %645 = vmatprep.subr.bf16.mxu0 0
      %646 = vmatpush1.bf16.msra.mxu0 0
      %647 = vmatprep.subr.bf16.mxu0 0
      %648 = vmatpush1.bf16.msra.mxu0 0
      %649 = vmatprep.subr.bf16.mxu0 0
      %650 = vmatpush1.bf16.msra.mxu0 0
      %651 = vmatprep.mubr.bf16.mxu0 0
      %652 = vmatmul.mubr.bf16.gmra.mrb[0].mxu0 %v614
      %v653 = vpop.f32.mrb[0].mxu0
      %v654 = vadd.f32 0.0, %v653
      %v655 = vpop.f32.mrb[0].mxu0
      %v656 = vpop.f32.mrb[0].mxu0
      %v657 = vpop.f32.mrb[0].mxu0
      %658 = vdwg.mxu0
      %v660 = vsel %vm387, %v497, 0
      %v663 = vsel %vm453, %v498, 0
      %665 = vmatprep.subr.bf16.mxu0 0
      %666 = vmatpush1.bf16.msra.mxu0 %v663
      %667 = vmatprep.subr.bf16.mxu0 0
      %668 = vmatpush1.bf16.msra.mxu0 0
      %669 = vmatprep.subr.bf16.mxu0 0
      %670 = vmatpush1.bf16.msra.mxu0 0
      %671 = vmatprep.subr.bf16.mxu0 0
      %672 = vmatpush1.bf16.msra.mxu0 0
      %673 = vmatprep.subr.bf16.mxu0 0
      %674 = vmatpush1.bf16.msra.mxu0 0
      %675 = vmatprep.subr.bf16.mxu0 0
      %676 = vmatpush1.bf16.msra.mxu0 0
      %677 = vmatprep.subr.bf16.mxu0 0
      %678 = vmatpush1.bf16.msra.mxu0 0
      %679 = vmatprep.subr.bf16.mxu0 0
      %680 = vmatpush1.bf16.msra.mxu0 0
      %681 = vmatprep.subr.bf16.mxu0 0
      %682 = vmatpush1.bf16.msra.mxu0 0
      %683 = vmatprep.subr.bf16.mxu0 0
      %684 = vmatpush1.bf16.msra.mxu0 0
      %685 = vmatprep.subr.bf16.mxu0 0
      %686 = vmatpush1.bf16.msra.mxu0 0
      %687 = vmatprep.subr.bf16.mxu0 0
      %688 = vmatpush1.bf16.msra.mxu0 0
      %689 = vmatprep.subr.bf16.mxu0 0
      %690 = vmatpush1.bf16.msra.mxu0 0
      %691 = vmatprep.subr.bf16.mxu0 0
      %692 = vmatpush1.bf16.msra.mxu0 0
      %693 = vmatprep.subr.bf16.mxu0 0
      %694 = vmatpush1.bf16.msra.mxu0 0
      %695 = vmatprep.subr.bf16.mxu0 0
      %696 = vmatpush1.bf16.msra.mxu0 0
      %697 = vmatprep.mubr.bf16.mxu0 0
      %698 = vmatmul.mubr.bf16.gmra.mrb[0].mxu0 %v660
      %v699 = vpop.f32.mrb[0].mxu0
      %v700 = vadd.f32 %v654, %v699
      %v701 = vpop.f32.mrb[0].mxu0
      %v702 = vpop.f32.mrb[0].mxu0
      %v703 = vpop.f32.mrb[0].mxu0
      %704 = vdwg.mxu0
      %705 = vrot.lane.b32.xlu0 %v383, 112
      %v706 = vpop.permute.xlu0 %705
      %707 = vrot.lane.b32.xlu0 %v383, 80
      %v708 = vpop.permute.xlu0 %707
      %v710 = vsel %vm387, %v706, 0
      %v713 = vsel %vm387, %v708, 0
      %715 = vmatprep.subr.bf16.mxu0 0
      %716 = vmatpush1.bf16.xpose.msra.mxu0 %v713
      %717 = vmatprep.subr.bf16.mxu0 0
      %718 = vmatpush1.bf16.xpose.msra.mxu0 0
      %719 = vmatprep.subr.bf16.mxu0 0
      %720 = vmatpush1.bf16.xpose.msra.mxu0 0
      %721 = vmatprep.subr.bf16.mxu0 0
      %722 = vmatpush1.bf16.xpose.msra.mxu0 0
      %723 = vmatprep.subr.bf16.mxu0 0
      %724 = vmatpush1.bf16.xpose.msra.mxu0 0
      %725 = vmatprep.subr.bf16.mxu0 0
      %726 = vmatpush1.bf16.xpose.msra.mxu0 0
      %727 = vmatprep.subr.bf16.mxu0 0
      %728 = vmatpush1.bf16.xpose.msra.mxu0 0
      %729 = vmatprep.subr.bf16.mxu0 0
      %730 = vmatpush1.bf16.xpose.msra.mxu0 0
      %731 = vmatprep.subr.bf16.mxu0 0
      %732 = vmatpush1.bf16.xpose.msra.mxu0 0
      %733 = vmatprep.subr.bf16.mxu0 0
      %734 = vmatpush1.bf16.xpose.msra.mxu0 0
      %735 = vmatprep.subr.bf16.mxu0 0
      %736 = vmatpush1.bf16.xpose.msra.mxu0 0
      %737 = vmatprep.subr.bf16.mxu0 0
      %738 = vmatpush1.bf16.xpose.msra.mxu0 0
      %739 = vmatprep.subr.bf16.mxu0 0
      %740 = vmatpush1.bf16.xpose.msra.mxu0 0
      %741 = vmatprep.subr.bf16.mxu0 0
      %742 = vmatpush1.bf16.xpose.msra.mxu0 0
      %743 = vmatprep.subr.bf16.mxu0 0
      %744 = vmatpush1.bf16.xpose.msra.mxu0 0
      %745 = vmatprep.subr.bf16.mxu0 0
      %746 = vmatpush1.bf16.xpose.msra.mxu0 0
      %747 = vmatprep.mubr.bf16.mxu0 0
      %748 = vmatmul.mubr.bf16.gmra.mrb[0].mxu0 %v710
      %v749 = vpop.f32.mrb[0].mxu0
      %v750 = vadd.f32 0.0, %v749
      %v751 = vpop.f32.mrb[0].mxu0
      %v752 = vpop.f32.mrb[0].mxu0
      %v753 = vpop.f32.mrb[0].mxu0
      %754 = vdwg.mxu0
      %v755 = vmul.f32 %v750, 0.35355338
      %v756 = vadd.f32 %v755, %v378
      %v757 = vsel %vm387, %v756, -inf
      %758 = vmax.xlane.f32.xlu0 %v757
      %v759 = vpop.xlane.xlu0 %758
      %v760 = vsub.f32 %v756, %v759
      %v761 = vmul.f32 %v760, 1.442695
      %v762 = vpow.pop %v761
      %v763 = vsel %vm387, %v762, 0.0
      %764 = vadd.xlane.f32.xlu0 %v763
      %v765 = vpop.xlane.xlu0 %764
      %v766 = vrcp.pop %v765
      %v767 = vmul.f32 %v762, %v766
      %v768 = vpack.c.bf16 %v767, %v767
      %769 = vrot.lane.b32.xlu0 %v383, 48
      %v770 = vpop.permute.xlu0 %769
      %v772 = vsel %vm387, %v768, 0
      %v775 = vsel %vm453, %v770, 0
      %777 = vmatprep.subr.bf16.mxu0 0
      %778 = vmatpush1.bf16.msra.mxu0 %v775
      %779 = vmatprep.subr.bf16.mxu0 0
      %780 = vmatpush1.bf16.msra.mxu0 0
      %781 = vmatprep.subr.bf16.mxu0 0
      %782 = vmatpush1.bf16.msra.mxu0 0
      %783 = vmatprep.subr.bf16.mxu0 0
      %784 = vmatpush1.bf16.msra.mxu0 0
      %785 = vmatprep.subr.bf16.mxu0 0
      %786 = vmatpush1.bf16.msra.mxu0 0
      %787 = vmatprep.subr.bf16.mxu0 0
      %788 = vmatpush1.bf16.msra.mxu0 0
      %789 = vmatprep.subr.bf16.mxu0 0
      %790 = vmatpush1.bf16.msra.mxu0 0
      %791 = vmatprep.subr.bf16.mxu0 0
      %792 = vmatpush1.bf16.msra.mxu0 0
      %793 = vmatprep.subr.bf16.mxu0 0
      %794 = vmatpush1.bf16.msra.mxu0 0
      %795 = vmatprep.subr.bf16.mxu0 0
      %796 = vmatpush1.bf16.msra.mxu0 0
      %797 = vmatprep.subr.bf16.mxu0 0
      %798 = vmatpush1.bf16.msra.mxu0 0
      %799 = vmatprep.subr.bf16.mxu0 0
      %800 = vmatpush1.bf16.msra.mxu0 0
      %801 = vmatprep.subr.bf16.mxu0 0
      %802 = vmatpush1.bf16.msra.mxu0 0
      %803 = vmatprep.subr.bf16.mxu0 0
      %804 = vmatpush1.bf16.msra.mxu0 0
      %805 = vmatprep.subr.bf16.mxu0 0
      %806 = vmatpush1.bf16.msra.mxu0 0
      %807 = vmatprep.subr.bf16.mxu0 0
      %808 = vmatpush1.bf16.msra.mxu0 0
      %809 = vmatprep.mubr.bf16.mxu0 0
      %810 = vmatmul.mubr.bf16.gmra.mrb[0].mxu0 %v772
      %v811 = vpop.f32.mrb[0].mxu0
      %v812 = vadd.f32 0.0, %v811
      %v813 = vpop.f32.mrb[0].mxu0
      %v814 = vpop.f32.mrb[0].mxu0
      %v815 = vpop.f32.mrb[0].mxu0
      %816 = vdwg.mxu0
      %v817 = vpack.c.bf16 %v812, %v812
      %v818 = vpack.c.bf16 %v381, %v381
      %v820 = vsel %vm387, %v817, 0
      %v823 = vsel %vm453, %v818, 0
      %825 = vmatprep.subr.bf16.mxu0 0
      %826 = vmatpush1.bf16.msra.mxu0 %v823
      %827 = vmatprep.subr.bf16.mxu0 0
      %828 = vmatpush1.bf16.msra.mxu0 0
      %829 = vmatprep.subr.bf16.mxu0 0
      %830 = vmatpush1.bf16.msra.mxu0 0
      %831 = vmatprep.subr.bf16.mxu0 0
      %832 = vmatpush1.bf16.msra.mxu0 0
      %833 = vmatprep.subr.bf16.mxu0 0
      %834 = vmatpush1.bf16.msra.mxu0 0
      %835 = vmatprep.subr.bf16.mxu0 0
      %836 = vmatpush1.bf16.msra.mxu0 0
      %837 = vmatprep.subr.bf16.mxu0 0
      %838 = vmatpush1.bf16.msra.mxu0 0
      %839 = vmatprep.subr.bf16.mxu0 0
      %840 = vmatpush1.bf16.msra.mxu0 0
      %841 = vmatprep.subr.bf16.mxu0 0
      %842 = vmatpush1.bf16.msra.mxu0 0
      %843 = vmatprep.subr.bf16.mxu0 0
      %844 = vmatpush1.bf16.msra.mxu0 0
      %845 = vmatprep.subr.bf16.mxu0 0
      %846 = vmatpush1.bf16.msra.mxu0 0
      %847 = vmatprep.subr.bf16.mxu0 0
      %848 = vmatpush1.bf16.msra.mxu0 0
      %849 = vmatprep.subr.bf16.mxu0 0
      %850 = vmatpush1.bf16.msra.mxu0 0
      %851 = vmatprep.subr.bf16.mxu0 0
      %852 = vmatpush1.bf16.msra.mxu0 0
      %853 = vmatprep.subr.bf16.mxu0 0
      %854 = vmatpush1.bf16.msra.mxu0 0
      %855 = vmatprep.subr.bf16.mxu0 0
      %856 = vmatpush1.bf16.msra.mxu0 0
      %857 = vmatprep.mubr.bf16.mxu0 0
      %858 = vmatmul.mubr.bf16.gmra.mrb[0].mxu0 %v820
      %v859 = vpop.f32.mrb[0].mxu0
      %v860 = vadd.f32 0.0, %v859
      %v861 = vpop.f32.mrb[0].mxu0
      %v862 = vpop.f32.mrb[0].mxu0
      %v863 = vpop.f32.mrb[0].mxu0
      %864 = vdwg.mxu0
      %v865 = vadd.f32 %v700, %v860
      %866 = vrot.lane.b32.xlu0 %v383, 104
      %v867 = vpop.permute.xlu0 %866
      %868 = vrot.lane.b32.xlu0 %v383, 72
      %v869 = vpop.permute.xlu0 %868
      %v871 = vsel %vm387, %v867, 0
      %v874 = vsel %vm387, %v869, 0
      %876 = vmatprep.subr.bf16.mxu0 0
      %877 = vmatpush1.bf16.xpose.msra.mxu0 %v874
      %878 = vmatprep.subr.bf16.mxu0 0
      %879 = vmatpush1.bf16.xpose.msra.mxu0 0
      %880 = vmatprep.subr.bf16.mxu0 0
      %881 = vmatpush1.bf16.xpose.msra.mxu0 0
      %882 = vmatprep.subr.bf16.mxu0 0
      %883 = vmatpush1.bf16.xpose.msra.mxu0 0
      %884 = vmatprep.subr.bf16.mxu0 0
      %885 = vmatpush1.bf16.xpose.msra.mxu0 0
      %886 = vmatprep.subr.bf16.mxu0 0
      %887 = vmatpush1.bf16.xpose.msra.mxu0 0
      %888 = vmatprep.subr.bf16.mxu0 0
      %889 = vmatpush1.bf16.xpose.msra.mxu0 0
      %890 = vmatprep.subr.bf16.mxu0 0
      %891 = vmatpush1.bf16.xpose.msra.mxu0 0
      %892 = vmatprep.subr.bf16.mxu0 0
      %893 = vmatpush1.bf16.xpose.msra.mxu0 0
      %894 = vmatprep.subr.bf16.mxu0 0
      %895 = vmatpush1.bf16.xpose.msra.mxu0 0
      %896 = vmatprep.subr.bf16.mxu0 0
      %897 = vmatpush1.bf16.xpose.msra.mxu0 0
      %898 = vmatprep.subr.bf16.mxu0 0
      %899 = vmatpush1.bf16.xpose.msra.mxu0 0
      %900 = vmatprep.subr.bf16.mxu0 0
      %901 = vmatpush1.bf16.xpose.msra.mxu0 0
      %902 = vmatprep.subr.bf16.mxu0 0
      %903 = vmatpush1.bf16.xpose.msra.mxu0 0
      %904 = vmatprep.subr.bf16.mxu0 0
      %905 = vmatpush1.bf16.xpose.msra.mxu0 0
      %906 = vmatprep.subr.bf16.mxu0 0
      %907 = vmatpush1.bf16.xpose.msra.mxu0 0
      %908 = vmatprep.mubr.bf16.mxu0 0
      %909 = vmatmul.mubr.bf16.gmra.mrb[0].mxu0 %v871
      %v910 = vpop.f32.mrb[0].mxu0
      %v911 = vadd.f32 0.0, %v910
      %v912 = vpop.f32.mrb[0].mxu0
      %v913 = vpop.f32.mrb[0].mxu0
      %v914 = vpop.f32.mrb[0].mxu0
      %915 = vdwg.mxu0
      %v916 = vmul.f32 %v911, 0.35355338
      %v917 = vadd.f32 %v916, %v378
      %v918 = vsel %vm387, %v917, -inf
      %919 = vmax.xlane.f32.xlu0 %v918
      %v920 = vpop.xlane.xlu0 %919
      %v921 = vsub.f32 %v917, %v920
      %v922 = vmul.f32 %v921, 1.442695
      %v923 = vpow.pop %v922
      %v924 = vsel %vm387, %v923, 0.0
      %925 = vadd.xlane.f32.xlu0 %v924
      %v926 = vpop.xlane.xlu0 %925
      %v927 = vrcp.pop %v926
      %v928 = vmul.f32 %v923, %v927
      %v929 = vpack.c.bf16 %v928, %v928
      %930 = vrot.lane.b32.xlu0 %v383, 40
      %v931 = vpop.permute.xlu0 %930
      %v933 = vsel %vm387, %v929, 0
      %v936 = vsel %vm453, %v931, 0
      %938 = vmatprep.subr.bf16.mxu0 0
      %939 = vmatpush1.bf16.msra.mxu0 %v936
      %940 = vmatprep.subr.bf16.mxu0 0
      %941 = vmatpush1.bf16.msra.mxu0 0
      %942 = vmatprep.subr.bf16.mxu0 0
      %943 = vmatpush1.bf16.msra.mxu0 0
      %944 = vmatprep.subr.bf16.mxu0 0
      %945 = vmatpush1.bf16.msra.mxu0 0
      %946 = vmatprep.subr.bf16.mxu0 0
      %947 = vmatpush1.bf16.msra.mxu0 0
      %948 = vmatprep.subr.bf16.mxu0 0
      %949 = vmatpush1.bf16.msra.mxu0 0
      %950 = vmatprep.subr.bf16.mxu0 0
      %951 = vmatpush1.bf16.msra.mxu0 0
      %952 = vmatprep.subr.bf16.mxu0 0
      %953 = vmatpush1.bf16.msra.mxu0 0
      %954 = vmatprep.subr.bf16.mxu0 0
      %955 = vmatpush1.bf16.msra.mxu0 0
      %956 = vmatprep.subr.bf16.mxu0 0
      %957 = vmatpush1.bf16.msra.mxu0 0
      %958 = vmatprep.subr.bf16.mxu0 0
      %959 = vmatpush1.bf16.msra.mxu0 0
      %960 = vmatprep.subr.bf16.mxu0 0
      %961 = vmatpush1.bf16.msra.mxu0 0
      %962 = vmatprep.subr.bf16.mxu0 0
      %963 = vmatpush1.bf16.msra.mxu0 0
      %964 = vmatprep.subr.bf16.mxu0 0
      %965 = vmatpush1.bf16.msra.mxu0 0
      %966 = vmatprep.subr.bf16.mxu0 0
      %967 = vmatpush1.bf16.msra.mxu0 0
      %968 = vmatprep.subr.bf16.mxu0 0
      %969 = vmatpush1.bf16.msra.mxu0 0
      %970 = vmatprep.mubr.bf16.mxu0 0
      %971 = vmatmul.mubr.bf16.gmra.mrb[0].mxu0 %v933
      %v972 = vpop.f32.mrb[0].mxu0
      %v973 = vadd.f32 0.0, %v972
      %v974 = vpop.f32.mrb[0].mxu0
      %v975 = vpop.f32.mrb[0].mxu0
      %v976 = vpop.f32.mrb[0].mxu0
      %977 = vdwg.mxu0
      %v978 = vpack.c.bf16 %v973, %v973
      %v979 = vpack.c.bf16 %v382, %v382
      %v981 = vsel %vm387, %v978, 0
      %v984 = vsel %vm453, %v979, 0
      %986 = vmatprep.subr.bf16.mxu0 0
      %987 = vmatpush1.bf16.msra.mxu0 %v984
      %988 = vmatprep.subr.bf16.mxu0 0
      %989 = vmatpush1.bf16.msra.mxu0 0
      %990 = vmatprep.subr.bf16.mxu0 0
      %991 = vmatpush1.bf16.msra.mxu0 0
      %992 = vmatprep.subr.bf16.mxu0 0
      %993 = vmatpush1.bf16.msra.mxu0 0
      %994 = vmatprep.subr.bf16.mxu0 0
      %995 = vmatpush1.bf16.msra.mxu0 0
      %996 = vmatprep.subr.bf16.mxu0 0
      %997 = vmatpush1.bf16.msra.mxu0 0
      %998 = vmatprep.subr.bf16.mxu0 0
      %999 = vmatpush1.bf16.msra.mxu0 0
      %1000 = vmatprep.subr.bf16.mxu0 0
      %1001 = vmatpush1.bf16.msra.mxu0 0
      %1002 = vmatprep.subr.bf16.mxu0 0
      %1003 = vmatpush1.bf16.msra.mxu0 0
      %1004 = vmatprep.subr.bf16.mxu0 0
      %1005 = vmatpush1.bf16.msra.mxu0 0
      %1006 = vmatprep.subr.bf16.mxu0 0
      %1007 = vmatpush1.bf16.msra.mxu0 0
      %1008 = vmatprep.subr.bf16.mxu0 0
      %1009 = vmatpush1.bf16.msra.mxu0 0
      %1010 = vmatprep.subr.bf16.mxu0 0
      %1011 = vmatpush1.bf16.msra.mxu0 0
      %1012 = vmatprep.subr.bf16.mxu0 0
      %1013 = vmatpush1.bf16.msra.mxu0 0
      %1014 = vmatprep.subr.bf16.mxu0 0
      %1015 = vmatpush1.bf16.msra.mxu0 0
      %1016 = vmatprep.subr.bf16.mxu0 0
      %1017 = vmatpush1.bf16.msra.mxu0 0
      %1018 = vmatprep.mubr.bf16.mxu0 0
      %1019 = vmatmul.mubr.bf16.gmra.mrb[0].mxu0 %v981
      %v1020 = vpop.f32.mrb[0].mxu0
      %v1021 = vadd.f32 0.0, %v1020
      %v1022 = vpop.f32.mrb[0].mxu0
      %v1023 = vpop.f32.mrb[0].mxu0
      %v1024 = vpop.f32.mrb[0].mxu0
      %1025 = vdwg.mxu0
      %v1026 = vadd.f32 %v865, %v1021
      %v1027 = vadd.f32 %v319, %v1026
      %v1028 = vld [vmem:[%s5] sm:$0x1]
      %v1030 = vlaneseq
      %v1031 = vshrl.u32 %v1030, 7
      %v1032 = vsub.s32 0, %v1031
      %v1033 = vrot.slane %v1028, %v1032
      %v1035 = vadd.f32 %v1027, %v1033
      %v1036 = vld [vmem:[%s6] sm:$0x1]
      %v1037 = vld [vmem:[%s7] sm:$0x1]
      %v1038 = vsel %vm334, %v1035, 0.0
      %1039 = vadd.xlane.f32.xlu0 %v1038
      %v1040 = vpop.xlane.xlu0 %1039
      %v1041 = vrcp.pop 32.0
      %v1042 = vmul.f32 %v1040, %v1041
      %v1043 = vsub.f32 %v1035, %v1042
      %v1044 = vmul.f32 %v1043, %v1043
      %v1045 = vsel %vm334, %v1044, 0.0
      %1046 = vadd.xlane.f32.xlu0 %v1045
      %v1047 = vpop.xlane.xlu0 %1046
      %v1048 = vmul.f32 %v1047, %v1041
      %v1049 = vadd.f32 %v1048, 1e-05
      %v1050 = vrsqrt.pop %v1049
      %v1051 = vmul.f32 %v1043, %v1050
      %v1053 = vlaneseq
      %v1054 = vshrl.u32 %v1053, 7
      %v1055 = vsub.s32 0, %v1054
      %v1056 = vrot.slane %v1036, %v1055
      %v1058 = vmul.f32 %v1051, %v1056
      %v1060 = vlaneseq
      %v1061 = vshrl.u32 %v1060, 7
      %v1062 = vsub.s32 0, %v1061
      %v1063 = vrot.slane %v1037, %v1062
      %v1065 = vadd.f32 %v1058, %v1063
      %1066 = vst.msk [vmem:[%s317] sm:$0xff] %vm334, %v1065
      %p1067 = scmp.lt.s32.totalorder %s19, 1
      %s1068 = scalar_select %p1067, %s19, 1
      %s1069 = smul.addr %s1068, 8
      %s1070 = scalar_lea.vmem %s8, %s1069
      // Predicated region
      $region53: #{transformer_forward.11} parent=51 // pred_check
        %p1071 = pneg %p215
      $region54: #{transformer_forward.11} parent=51 // pred_check_branch
        %1073 = sbr.rel (%p1071) target = $region56
      $region55: #{transformer_forward.11} parent=51 // pred_region
        _
      $region56: #{transformer_forward.11} parent=51 // pred_fallthru
        _
    $region52: #{transformer_forward.11} parent=5 // pred_fallthru
      _
    %p1074 = scmp.le.s32.totalorder 2, %s14
    // Predicated region
    $region57: #{transformer_forward.11} parent=5 // pred_check
      %p1075 = pneg %p1074
    $region58: #{transformer_forward.11} parent=5 // pred_check_branch
      %1077 = sbr.rel (%p1075) target = $region60
    $region59: #{transformer_forward.11} parent=5 // pred_region
      %s1078 = ssub.s32 %s14, 2
      // Predicated region
      $region61: #{transformer_forward.11} parent=59 // pred_check
        %p1079 = pneg %p221
      $region62: #{transformer_forward.11} parent=59 // pred_check_branch
        %1081 = sbr.rel (%p1079) target = $region64
      $region63: #{transformer_forward.11} parent=59 // pred_region
        %p1082 = scmp.lt.s32.totalorder %s20, 1
        %s1083 = scalar_select %p1082, %s20, 1
        %s1084 = smul.addr %s1083, 8
        %s1085 = scalar_lea.vmem %s8, %s1084
      $region64: #{transformer_forward.11} parent=59 // pred_fallthru
        _
    $region60: #{transformer_forward.11} parent=5 // pred_fallthru
      _
  $region6: #{transformer_forward.11} parent=0 // loop_footer
    %s18 = sadd.s32 1, %s14
  $region7: #{transformer_forward.11} parent=0 // loop_footer_branch
    %13 = sbr.rel target = $region3
  $region8: #{transformer_forward.11} parent=0 // loop_exit
    _

</llo_original>
